<compile_context>
chip_gen: v5e
topology: v5e:2x2
jax: 0.10.0
libtpu: 0.0.40
codegen_flags: <defaults>
</compile_context>

<pallas_src>
import functools

import jax
import jax.numpy as jnp
from jax.experimental import pallas as pl
from jax.experimental.pallas import tpu as pltpu

IN_DIM = 784
HID_DIM = 1000
OUT_DIM = 10

HID_PAD = 1024            # next multiple of 128
OUT_PAD = 128             # lane-dense output
TB_MAX = 512              # batch tile (review: sweep 512/1024; 512 fits all generations)
VMEM_LIMIT = 48 * 1024 * 1024   # <= v7x 64 MiB physical; > v5e 16 MiB scoped default


def _round_up(x, m):
    return ((x + m - 1) // m) * m


def _pick_tb(batch):
    """Choose the batch tile: big (overhead amortization), multiple of 8 (f32 sublanes),
    and, when the batch is large enough, >= 2 grid steps so ("parallel",) shards across
    both v7x TensorCores."""
    b8 = _round_up(max(int(batch), 1), 8)
    tb = min(TB_MAX, b8)
    if b8 >= 2 * 256 and b8 < 2 * tb:
        tb = _round_up(pl.cdiv(b8, 2), 8)
    return tb


def fcnet_kernel(x_ref, w1_ref, b1_ref, w2_ref, b2_ref, out_ref):
    # In-kernel cast f32 -> bf16 (VPU) replaces a full wrapper-side HBM pass over x.
    x = x_ref[...].astype(jnp.bfloat16)

    # fc1 + bias + ReLU (bf16 MXU matmul, f32 accumulation)
    h = jnp.dot(x, w1_ref[...], preferred_element_type=jnp.float32)
    h = jnp.maximum(h + b1_ref[...], 0.0)

    # fc2 (cast activations back to bf16 for the MXU; accumulate in f32)
    logits = jnp.dot(h.astype(w2_ref.dtype), w2_ref[...],
                     preferred_element_type=jnp.float32)
    logits = logits + b2_ref[...]

    # Mask the padded output lanes (cols >= 10) so softmax is exact.
    col = jax.lax.broadcasted_iota(jnp.int32, logits.shape, 1)
    logits = jnp.where(col < OUT_DIM, logits, -jnp.inf)

    # Numerically stable softmax over the last dim; divide via EUP reciprocal.
    m = jnp.max(logits, axis=-1, keepdims=True)
    e = jnp.exp(logits - m)
    denom = jnp.sum(e, axis=-1, keepdims=True)
    out_ref[...] = (e * pl.reciprocal(denom, approx=True)).astype(out_ref.dtype)


@functools.partial(jax.jit, static_argnames=("tb", "single_buffer"))
def _forward(x, w1, b1, w2, b2, *, tb, single_buffer):
    B = x.shape[0]
    b_pad = _round_up(B, tb)
    if b_pad != B:
        # Rare path (only when B is not a multiple of tb); padded rows are sliced off.
        x = jnp.pad(x, ((0, b_pad - B), (0, 0)))
    x = x.astype(jnp.float32)   # no-op for f32 producers; keeps dtype contract explicit

    grid = (b_pad // tb,)

    # Constant index_map => weights stay resident in VMEM; single-buffer them to save
    # ~1.9 MB of VMEM (w1 alone is 1.6 MB bf16).
    weight_mode = {"pipeline_mode": pl.Buffered(1)} if single_buffer else {}
    in_specs = [
        pl.BlockSpec((tb, IN_DIM), lambda i: (i, 0)),                        # x (pipelined)
        pl.BlockSpec((IN_DIM, HID_PAD), lambda i: (0, 0), **weight_mode),    # w1 resident
        pl.BlockSpec((1, HID_PAD), lambda i: (0, 0), **weight_mode),         # b1 resident
        pl.BlockSpec((HID_PAD, OUT_PAD), lambda i: (0, 0), **weight_mode),   # w2 resident
        pl.BlockSpec((1, OUT_PAD), lambda i: (0, 0), **weight_mode),         # b2 resident
    ]

    flops = 2 * b_pad * (IN_DIM * HID_PAD + HID_PAD * OUT_PAD)
    bytes_accessed = (b_pad * IN_DIM * 4            # x (f32)
                      + IN_DIM * HID_PAD * 2        # w1 (bf16)
                      + HID_PAD * OUT_PAD * 2       # w2 (bf16)
                      + HID_PAD * 4 + OUT_PAD * 4   # biases (f32)
                      + b_pad * OUT_PAD * 4)        # out (f32)

    out = pl.pallas_call(
        fcnet_kernel,
        out_shape=jax.ShapeDtypeStruct((b_pad, OUT_PAD), jnp.float32),
        grid=grid,
        in_specs=in_specs,
        out_specs=pl.BlockSpec((tb, OUT_PAD), lambda i: (i, 0)),
        compiler_params=pltpu.CompilerParams(
            dimension_semantics=("parallel",),
            vmem_limit_bytes=VMEM_LIMIT),
        cost_estimate=pl.CostEstimate(
            flops=flops,
            transcendentals=b_pad * OUT_PAD,
            bytes_accessed=bytes_accessed),
    )(x, w1, b1, w2, b2)

    return out[:B, :OUT_DIM]


def simple_fc_net(x, w1, b1, w2, b2, *, tb=None):
    """x: (B, 784) f32.  w1:(784,1024) bf16, b1:(1,1024) f32, w2:(1024,128) bf16,
    b2:(1,128) f32 (zero-padded).  Returns (B, 10) f32 softmax probabilities."""
    if tb is None:
        tb = _pick_tb(x.shape[0])
    try:
        return _forward(x, w1, b1, w2, b2, tb=tb, single_buffer=True)
    except Exception:
        # Fallback if this JAX build rejects pipeline_mode=pl.Buffered(1) on these specs.
        return _forward(x, w1, b1, w2, b2, tb=tb, single_buffer=False)


def init_params(key):
    """PyTorch-Linear-style init U(-1/sqrt(fan_in), 1/sqrt(fan_in)), then zero-pad
    HID 1000->1024 and OUT 10->128 (exactness preserved: ReLU(0)=0, zero w2 rows/cols,
    padded logits masked in-kernel).  Weights stored as (in, out), i.e. transposed vs
    PyTorch, so the kernel computes x @ W + b == x @ W_pt.T + b_pt."""
    k1, k2, k3, k4 = jax.random.split(key, 4)
    bound1 = 1.0 / (IN_DIM ** 0.5)
    bound2 = 1.0 / (HID_DIM ** 0.5)

    w1 = jax.random.uniform(k1, (IN_DIM, HID_DIM), jnp.float32, -bound1, bound1)
    b1 = jax.random.uniform(k2, (1, HID_DIM), jnp.float32, -bound1, bound1)
    w2 = jax.random.uniform(k3, (HID_DIM, OUT_DIM), jnp.float32, -bound2, bound2)
    b2 = jax.random.uniform(k4, (1, OUT_DIM), jnp.float32, -bound2, bound2)

    w1p = jnp.pad(w1, ((0, 0), (0, HID_PAD - HID_DIM))).astype(jnp.bfloat16)
    b1p = jnp.pad(b1, ((0, 0), (0, HID_PAD - HID_DIM)))
    w2p = jnp.pad(w2, ((0, HID_PAD - HID_DIM), (0, OUT_PAD - OUT_DIM))).astype(jnp.bfloat16)
    b2p = jnp.pad(b2, ((0, 0), (0, OUT_PAD - OUT_DIM)))
    return (w1p, b1p, w2p, b2p), (w1, b1, w2, b2)


if __name__ == "__main__":
    key = jax.random.PRNGKey(0)
    kx, kp = jax.random.split(key)
    B = 8
    x = jax.random.normal(kx, (B, IN_DIM), jnp.float32)
    (w1p, b1p, w2p, b2p), (w1f, b1f, w2f, b2f) = init_params(kp)

    out = simple_fc_net(x, w1p, b1p, w2p, b2p)
    out = jax.block_until_ready(out)
    assert out.shape == (B, OUT_DIM)

    # Tight check vs a plain-JAX reference using the same bf16 matmul inputs / f32
    # accumulation (isolates kernel correctness from bf16 quantization of the weights).
    xb = x.astype(jnp.bfloat16)
    h_ref = jnp.maximum(
        jnp.dot(xb, w1p, preferred_element_type=jnp.float32) + b1p, 0.0)
    logits_ref = jnp.dot(h_ref.astype(jnp.bfloat16), w2p,
                         preferred_element_type=jnp.float32) + b2p
    ref = jax.nn.softmax(logits_ref[:, :OUT_DIM], axis=1)
    assert jnp.allclose(out, ref, atol=2e-3, rtol=1e-2), \
        f"max abs diff vs bf16 ref: {jnp.max(jnp.abs(out - ref))}"

    # Informational: distance to the exact f32 PyTorch-equivalent forward (bf16 quant noise).
    ref_f32 = jax.nn.softmax(jnp.maximum(x @ w1f + b1f, 0.0) @ w2f + b2f, axis=1)
    _ = float(jnp.max(jnp.abs(out - ref_f32)))  # ~1e-3 level, expected from bf16 weights

    print("KERNEL_OK")
</pallas_src>

<mosaic_0001>
module attributes {stable_mosaic.version = 11 : i64} {
  func.func @fcnet_kernel(%arg0: i32, %arg1: memref<8x784xf32, #tpu.memory_space<vmem>>, %arg2: memref<784x1024xbf16, #tpu.memory_space<vmem>>, %arg3: memref<1x1024xf32, #tpu.memory_space<vmem>>, %arg4: memref<1024x128xbf16, #tpu.memory_space<vmem>>, %arg5: memref<1x128xf32, #tpu.memory_space<vmem>>, %arg6: memref<8x128xf32, #tpu.memory_space<vmem>>) attributes {dimension_semantics = [#tpu.dimension_semantics<parallel>], iteration_bounds = array<i64: 1>, scalar_prefetch = 0 : i64, scratch_operands = 0 : i64, tpu.core_type = #tpu.core_type<tc>, window_params = [{transform_indices = @transform_0, window_bounds = array<i64: 8, 784>}, {pipeline_mode = #tpu.pipeline_mode<synchronous>, transform_indices = @transform_1, window_bounds = array<i64: 784, 1024>}, {pipeline_mode = #tpu.pipeline_mode<synchronous>, transform_indices = @transform_2, window_bounds = array<i64: 1, 1024>}, {pipeline_mode = #tpu.pipeline_mode<synchronous>, transform_indices = @transform_3, window_bounds = array<i64: 1024, 128>}, {pipeline_mode = #tpu.pipeline_mode<synchronous>, transform_indices = @transform_4, window_bounds = array<i64: 1, 128>}, {transform_indices = @transform_5, window_bounds = array<i64: 8, 128>}]} {
    %c0 = arith.constant 0 : index
    %c0_0 = arith.constant 0 : index
    %0 = vector.load %arg1[%c0, %c0_0] : memref<8x784xf32, #tpu.memory_space<vmem>>, vector<8x784xf32>
    %1 = arith.truncf %0 : vector<8x784xf32> to vector<8x784xbf16>
    %c0_1 = arith.constant 0 : index
    %c0_2 = arith.constant 0 : index
    %2 = vector.load %arg2[%c0_1, %c0_2] : memref<784x1024xbf16, #tpu.memory_space<vmem>>, vector<784x1024xbf16>
    %cst = arith.constant dense<0.000000e+00> : vector<8x1024xf32>
    %3 = tpu.matmul %1, %2, %cst {dimension_numbers = #tpu.dot_dimension_numbers<[1], [0], [0], [1], [0, 0, 1, 1], [], []>} : vector<8x784xbf16>, vector<784x1024xbf16>, vector<8x1024xf32> -> vector<8x1024xf32>
    %c0_3 = arith.constant 0 : index
    %c0_4 = arith.constant 0 : index
    %4 = vector.load %arg3[%c0_3, %c0_4] : memref<1x1024xf32, #tpu.memory_space<vmem>>, vector<1x1024xf32>
    %5 = vector.broadcast %4 : vector<1x1024xf32> to vector<8x1024xf32>
    %6 = arith.addf %3, %5 : vector<8x1024xf32>
    %cst_5 = arith.constant 0.000000e+00 : f32
    %7 = vector.broadcast %cst_5 : f32 to vector<8x1024xf32>
    %8 = arith.maximumf %6, %7 : vector<8x1024xf32>
    %9 = arith.truncf %8 : vector<8x1024xf32> to vector<8x1024xbf16>
    %c0_6 = arith.constant 0 : index
    %c0_7 = arith.constant 0 : index
    %10 = vector.load %arg4[%c0_6, %c0_7] : memref<1024x128xbf16, #tpu.memory_space<vmem>>, vector<1024x128xbf16>
    %cst_8 = arith.constant dense<0.000000e+00> : vector<8x128xf32>
    %11 = tpu.matmul %9, %10, %cst_8 {dimension_numbers = #tpu.dot_dimension_numbers<[1], [0], [0], [1], [0, 0, 1, 1], [], []>} : vector<8x1024xbf16>, vector<1024x128xbf16>, vector<8x128xf32> -> vector<8x128xf32>
    %c0_9 = arith.constant 0 : index
    %c0_10 = arith.constant 0 : index
    %12 = vector.load %arg5[%c0_9, %c0_10] : memref<1x128xf32, #tpu.memory_space<vmem>>, vector<1x128xf32>
    %13 = vector.broadcast %12 : vector<1x128xf32> to vector<8x128xf32>
    %14 = arith.addf %11, %13 : vector<8x128xf32>
    %15 = tpu.iota {dimensions = array<i32: 1>} : vector<8x128xi32>
    %c10_i32 = arith.constant 10 : i32
    %16 = vector.broadcast %c10_i32 : i32 to vector<8x128xi32>
    %17 = arith.cmpi slt, %15, %16 : vector<8x128xi32>
    %cst_11 = arith.constant 0xFF800000 : f32
    %18 = vector.broadcast %cst_11 : f32 to vector<8x128xf32>
    %19 = arith.select %17, %14, %18 : vector<8x128xi1>, vector<8x128xf32>
    %cst_12 = arith.constant dense<0xFF800000> : vector<8xf32>
    %20 = vector.multi_reduction <maximumf>, %19, %cst_12 [1] : vector<8x128xf32> to vector<8xf32>
    %21 = vector.shape_cast %20 : vector<8xf32> to vector<8x1xf32>
    %22 = vector.broadcast %21 : vector<8x1xf32> to vector<8x128xf32>
    %23 = arith.subf %19, %22 : vector<8x128xf32>
    %24 = math.exp %23 : vector<8x128xf32>
    %cst_13 = arith.constant dense<0.000000e+00> : vector<8xf32>
    %25 = vector.multi_reduction <add>, %24, %cst_13 [1] : vector<8x128xf32> to vector<8xf32>
    %26 = vector.shape_cast %25 : vector<8xf32> to vector<8x1xf32>
    %27 = tpu.reciprocal %26 {approx = true} : vector<8x1xf32> -> vector<8x1xf32>
    %28 = vector.broadcast %27 : vector<8x1xf32> to vector<8x128xf32>
    %29 = arith.mulf %24, %28 : vector<8x128xf32>
    %c0_14 = arith.constant 0 : index
    %c0_15 = arith.constant 0 : index
    %30 = vector.load %arg6[%c0_14, %c0_15] : memref<8x128xf32, #tpu.memory_space<vmem>>, vector<8x128xf32>
    tpu.vector_store %arg6[%c0_14, %c0_15], %29 {strides = array<i32>} : memref<8x128xf32, #tpu.memory_space<vmem>>, vector<8x128xf32>,
    return
  }
  func.func @transform_0(%arg0: i32) -> (i32, i32) {
    %c0_i32 = arith.constant 0 : i32
    %c0_i32_0 = arith.constant 0 : i32
    return %arg0, %c0_i32 : i32, i32
  }
  func.func @transform_1(%arg0: i32) -> (i32, i32) {
    %c0_i32 = arith.constant 0 : i32
    %c0_i32_0 = arith.constant 0 : i32
    %c0_i32_1 = arith.constant 0 : i32
    return %c0_i32, %c0_i32_0 : i32, i32
  }
  func.func @transform_2(%arg0: i32) -> (i32, i32) {
    %c0_i32 = arith.constant 0 : i32
    %c0_i32_0 = arith.constant 0 : i32
    %c0_i32_1 = arith.constant 0 : i32
    return %c0_i32, %c0_i32_0 : i32, i32
  }
  func.func @transform_3(%arg0: i32) -> (i32, i32) {
    %c0_i32 = arith.constant 0 : i32
    %c0_i32_0 = arith.constant 0 : i32
    %c0_i32_1 = arith.constant 0 : i32
    return %c0_i32, %c0_i32_0 : i32, i32
  }
  func.func @transform_4(%arg0: i32) -> (i32, i32) {
    %c0_i32 = arith.constant 0 : i32
    %c0_i32_0 = arith.constant 0 : i32
    %c0_i32_1 = arith.constant 0 : i32
    return %c0_i32, %c0_i32_0 : i32, i32
  }
  func.func @transform_5(%arg0: i32) -> (i32, i32) {
    %c0_i32 = arith.constant 0 : i32
    %c0_i32_0 = arith.constant 0 : i32
    return %arg0, %c0_i32 : i32, i32
  }
}

module attributes {stable_mosaic.version = 11 : i64} {
  func.func @fcnet_kernel(%arg0: i32, %arg1: memref<8x784xf32, #tpu.memory_space<vmem>>, %arg2: memref<784x1024xbf16, #tpu.memory_space<vmem>>, %arg3: memref<1x1024xf32, #tpu.memory_space<vmem>>, %arg4: memref<1024x128xbf16, #tpu.memory_space<vmem>>, %arg5: memref<1x128xf32, #tpu.memory_space<vmem>>, %arg6: memref<8x128xf32, #tpu.memory_space<vmem>>) attributes {dimension_semantics = [#tpu.dimension_semantics<parallel>], iteration_bounds = array<i64: 1>, scalar_prefetch = 0 : i64, scratch_operands = 0 : i64, tpu.core_type = #tpu.core_type<tc>, window_params = [{transform_indices = @transform_0, window_bounds = array<i64: 8, 784>}, {pipeline_mode = #tpu.pipeline_mode<synchronous>, transform_indices = @transform_1, window_bounds = array<i64: 784, 1024>}, {pipeline_mode = #tpu.pipeline_mode<synchronous>, transform_indices = @transform_2, window_bounds = array<i64: 1, 1024>}, {pipeline_mode = #tpu.pipeline_mode<synchronous>, transform_indices = @transform_3, window_bounds = array<i64: 1024, 128>}, {pipeline_mode = #tpu.pipeline_mode<synchronous>, transform_indices = @transform_4, window_bounds = array<i64: 1, 128>}, {transform_indices = @transform_5, window_bounds = array<i64: 8, 128>}]} {
    %c0 = arith.constant 0 : index
    %c0_0 = arith.constant 0 : index
    %0 = vector.load %arg1[%c0, %c0_0] : memref<8x784xf32, #tpu.memory_space<vmem>>, vector<8x784xf32>
    %1 = arith.truncf %0 : vector<8x784xf32> to vector<8x784xbf16>
    %c0_1 = arith.constant 0 : index
    %c0_2 = arith.constant 0 : index
    %2 = vector.load %arg2[%c0_1, %c0_2] : memref<784x1024xbf16, #tpu.memory_space<vmem>>, vector<784x1024xbf16>
    %cst = arith.constant dense<0.000000e+00> : vector<8x1024xf32>
    %3 = tpu.matmul %1, %2, %cst {dimension_numbers = #tpu.dot_dimension_numbers<[1], [0], [0], [1], [0, 0, 1, 1], [], []>} : vector<8x784xbf16>, vector<784x1024xbf16>, vector<8x1024xf32> -> vector<8x1024xf32>
    %c0_3 = arith.constant 0 : index
    %c0_4 = arith.constant 0 : index
    %4 = vector.load %arg3[%c0_3, %c0_4] : memref<1x1024xf32, #tpu.memory_space<vmem>>, vector<1x1024xf32>
    %5 = vector.broadcast %4 : vector<1x1024xf32> to vector<8x1024xf32>
    %6 = arith.addf %3, %5 : vector<8x1024xf32>
    %cst_5 = arith.constant 0.000000e+00 : f32
    %7 = vector.broadcast %cst_5 : f32 to vector<8x1024xf32>
    %8 = arith.maximumf %6, %7 : vector<8x1024xf32>
    %9 = arith.truncf %8 : vector<8x1024xf32> to vector<8x1024xbf16>
    %c0_6 = arith.constant 0 : index
    %c0_7 = arith.constant 0 : index
    %10 = vector.load %arg4[%c0_6, %c0_7] : memref<1024x128xbf16, #tpu.memory_space<vmem>>, vector<1024x128xbf16>
    %cst_8 = arith.constant dense<0.000000e+00> : vector<8x128xf32>
    %11 = tpu.matmul %9, %10, %cst_8 {dimension_numbers = #tpu.dot_dimension_numbers<[1], [0], [0], [1], [0, 0, 1, 1], [], []>} : vector<8x1024xbf16>, vector<1024x128xbf16>, vector<8x128xf32> -> vector<8x128xf32>
    %c0_9 = arith.constant 0 : index
    %c0_10 = arith.constant 0 : index
    %12 = vector.load %arg5[%c0_9, %c0_10] : memref<1x128xf32, #tpu.memory_space<vmem>>, vector<1x128xf32>
    %13 = vector.broadcast %12 : vector<1x128xf32> to vector<8x128xf32>
    %14 = arith.addf %11, %13 : vector<8x128xf32>
    %15 = tpu.iota {dimensions = array<i32: 1>} : vector<8x128xi32>
    %c10_i32 = arith.constant 10 : i32
    %16 = vector.broadcast %c10_i32 : i32 to vector<8x128xi32>
    %17 = arith.cmpi slt, %15, %16 : vector<8x128xi32>
    %cst_11 = arith.constant 0xFF800000 : f32
    %18 = vector.broadcast %cst_11 : f32 to vector<8x128xf32>
    %19 = arith.select %17, %14, %18 : vector<8x128xi1>, vector<8x128xf32>
    %cst_12 = arith.constant dense<0xFF800000> : vector<8xf32>
    %20 = vector.multi_reduction <maximumf>, %19, %cst_12 [1] : vector<8x128xf32> to vector<8xf32>
    %21 = vector.shape_cast %20 : vector<8xf32> to vector<8x1xf32>
    %22 = vector.broadcast %21 : vector<8x1xf32> to vector<8x128xf32>
    %23 = arith.subf %19, %22 : vector<8x128xf32>
    %24 = math.exp %23 : vector<8x128xf32>
    %cst_13 = arith.constant dense<0.000000e+00> : vector<8xf32>
    %25 = vector.multi_reduction <add>, %24, %cst_13 [1] : vector<8x128xf32> to vector<8xf32>
    %26 = vector.shape_cast %25 : vector<8xf32> to vector<8x1xf32>
    %27 = tpu.reciprocal %26 {approx = true} : vector<8x1xf32> -> vector<8x1xf32>
    %28 = vector.broadcast %27 : vector<8x1xf32> to vector<8x128xf32>
    %29 = arith.mulf %24, %28 : vector<8x128xf32>
    %c0_14 = arith.constant 0 : index
    %c0_15 = arith.constant 0 : index
    %30 = vector.load %arg6[%c0_14, %c0_15] : memref<8x128xf32, #tpu.memory_space<vmem>>, vector<8x128xf32>
    tpu.vector_store %arg6[%c0_14, %c0_15], %29 {strides = array<i32>} : memref<8x128xf32, #tpu.memory_space<vmem>>, vector<8x128xf32>,
    return
  }
  func.func @transform_0(%arg0: i32) -> (i32, i32) {
    %c0_i32 = arith.constant 0 : i32
    %c0_i32_0 = arith.constant 0 : i32
    return %arg0, %c0_i32 : i32, i32
  }
  func.func @transform_1(%arg0: i32) -> (i32, i32) {
    %c0_i32 = arith.constant 0 : i32
    %c0_i32_0 = arith.constant 0 : i32
    %c0_i32_1 = arith.constant 0 : i32
    return %c0_i32, %c0_i32_0 : i32, i32
  }
  func.func @transform_2(%arg0: i32) -> (i32, i32) {
    %c0_i32 = arith.constant 0 : i32
    %c0_i32_0 = arith.constant 0 : i32
    %c0_i32_1 = arith.constant 0 : i32
    return %c0_i32, %c0_i32_0 : i32, i32
  }
  func.func @transform_3(%arg0: i32) -> (i32, i32) {
    %c0_i32 = arith.constant 0 : i32
    %c0_i32_0 = arith.constant 0 : i32
    %c0_i32_1 = arith.constant 0 : i32
    return %c0_i32, %c0_i32_0 : i32, i32
  }
  func.func @transform_4(%arg0: i32) -> (i32, i32) {
    %c0_i32 = arith.constant 0 : i32
    %c0_i32_0 = arith.constant 0 : i32
    %c0_i32_1 = arith.constant 0 : i32
    return %c0_i32, %c0_i32_0 : i32, i32
  }
  func.func @transform_5(%arg0: i32) -> (i32, i32) {
    %c0_i32 = arith.constant 0 : i32
    %c0_i32_0 = arith.constant 0 : i32
    return %arg0, %c0_i32 : i32, i32
  }
}

</mosaic_0001>

<llo_original>
// kernel: _forward.1
$region0: #{_forward.1}
  #allocation0 [shape = 'u32[]', space=smem, size = 0x4, offset = 0x4, fixed_abs, tag = 'smem constant byte address 0x4 - core index']
  #allocation1 [shape = 'u32[72,128]{1,0:T(1,128)}', space=vmem, size = 0x9000, scoped, tag = 'internal scratch']
  %s0 = inlined_call_operand.hbm [shape: f32[8,784], index: 0, kind: input, shape index: {}]
  %s1 = inlined_call_operand.hbm [shape: bf16[784,1024], index: 1, kind: input, shape index: {}]
  %s2 = inlined_call_operand.hbm [shape: f32[1,1024], index: 2, kind: input, shape index: {}]
  %s3 = inlined_call_operand.hbm [shape: bf16[1024,128], index: 3, kind: input, shape index: {}]
  %s4 = inlined_call_operand.hbm [shape: f32[1,128], index: 4, kind: input, shape index: {}]
  %s5 = inlined_call_operand.hbm [shape: f32[8,128], index: 5, kind: output, shape index: {}]
  %s6 = sld [smem:[#allocation0]]
  $region50: #{_forward.1} parent=0
    _
  %s8 = ssub.s32 1, %s6
  %s9 = scalar_select 0, %s8, %s6
  $region1: #{_forward.1} parent=0
    #allocation2 [shape = 'u8[28672]{0}', space=vmem, size = 0x7000, scoped, tag = 'input window, operand 0, single buffered']
    #allocation3 [shape = 's32[1]{0}', space=sflag, size = 0x4, scoped, tag = 'scoped memory for _forward.1']
    #allocation4 [shape = 's32[1]{0}', space=sflag, size = 0x4, scoped, tag = 'scoped memory for _forward.1']
    #allocation5 [shape = 'u8[1605632]{0}', space=vmem, size = 0x188000, scoped, tag = 'input window, operand 1, single buffered']
    #allocation6 [shape = 's32[1]{0}', space=sflag, size = 0x4, scoped, tag = 'scoped memory for _forward.1']
    #allocation7 [shape = 'u8[4096]{0}', space=vmem, size = 0x1000, scoped, tag = 'input window, operand 2, single buffered']
    #allocation8 [shape = 'u8[262144]{0}', space=vmem, size = 0x40000, scoped, tag = 'input window, operand 3, single buffered']
    #allocation9 [shape = 's32[1]{0}', space=sflag, size = 0x4, scoped, tag = 'scoped memory for _forward.1']
    #allocation10 [shape = 'u8[512]{0}', space=vmem, size = 0x400, scoped, tag = 'input window, operand 4, single buffered']
    #allocation11 [shape = 'u8[4096]{0}', space=vmem, size = 0x1000, scoped, tag = 'output window, operand 0, single buffered']
    %10 = vsyncpa [#allocation3], 0
    %11 = vsyncpa [#allocation6], 0
    %12 = vsyncpa [#allocation9], 0
    %13 = vsyncpa [#allocation4], 0
    // Predicated region
    $region2: #{_forward.1} parent=1 // pred_check
      _
    $region3: #{_forward.1} parent=1 // pred_check_branch
      %15 = sbr.rel (0) target = $region5
    $region4: #{_forward.1} parent=1 // pred_region
      %17 = vsyncadd [#allocation3], 0
      %s19 = sshll.u32 %s0, 4
      %s20 = int_to_ptr.hbm [resolvable:$true] %s19
      %s21 = sshll.u32 [#allocation2], 4
      %s22 = int_to_ptr.vmem [resolvable:$true] %s21
      %24 = dma.hbm_to_vmem [thread:$0]  %s20, 896, %s22, [#allocation3]
    $region5: #{_forward.1} parent=1 // pred_fallthru
      _
    // Predicated region
    $region6: #{_forward.1} parent=1 // pred_check
      _
    $region7: #{_forward.1} parent=1 // pred_check_branch
      %26 = sbr.rel (0) target = $region9
    $region8: #{_forward.1} parent=1 // pred_region
      %28 = vsyncadd [#allocation6], 0
      %s29 = sshll.u32 %s1, 4
      %s30 = int_to_ptr.hbm [resolvable:$true] %s29
      %s31 = sshll.u32 [#allocation5], 4
      %s32 = int_to_ptr.vmem [resolvable:$true] %s31
      %37 = dma.hbm_to_vmem [thread:$0]  %s30, 50176, %s32, [#allocation6], 512, 512, 32
    $region9: #{_forward.1} parent=1 // pred_fallthru
      _
    // Predicated region
    $region10: #{_forward.1} parent=1 // pred_check
      _
    $region11: #{_forward.1} parent=1 // pred_check_branch
      %39 = sbr.rel (0) target = $region13
    $region12: #{_forward.1} parent=1 // pred_region
      %41 = vsyncadd [#allocation6], 0
      %s43 = sshll.u32 %s2, 4
      %s44 = int_to_ptr.hbm [resolvable:$true] %s43
      %s45 = sshll.u32 [#allocation7], 4
      %s46 = int_to_ptr.vmem [resolvable:$true] %s45
      %48 = dma.hbm_to_vmem [thread:$0]  %s44, 128, %s46, [#allocation6]
    $region13: #{_forward.1} parent=1 // pred_fallthru
      _
    // Predicated region
    $region14: #{_forward.1} parent=1 // pred_check
      _
    $region15: #{_forward.1} parent=1 // pred_check_branch
      %50 = sbr.rel (0) target = $region17
    $region16: #{_forward.1} parent=1 // pred_region
      %52 = vsyncadd [#allocation9], 0
      %s53 = sshll.u32 %s3, 4
      %s54 = int_to_ptr.hbm [resolvable:$true] %s53
      %s55 = sshll.u32 [#allocation8], 4
      %s56 = int_to_ptr.vmem [resolvable:$true] %s55
      %61 = dma.hbm_to_vmem [thread:$0]  %s54, 8192, %s56, [#allocation9], 64, 64, 4
    $region17: #{_forward.1} parent=1 // pred_fallthru
      _
    // Predicated region
    $region18: #{_forward.1} parent=1 // pred_check
      _
    $region19: #{_forward.1} parent=1 // pred_check_branch
      %63 = sbr.rel (0) target = $region21
    $region20: #{_forward.1} parent=1 // pred_region
      %65 = vsyncadd [#allocation9], 0
      %s67 = sshll.u32 %s4, 4
      %s68 = int_to_ptr.hbm [resolvable:$true] %s67
      %s69 = sshll.u32 [#allocation10], 4
      %s70 = int_to_ptr.vmem [resolvable:$true] %s69
      %72 = dma.hbm_to_vmem [thread:$0]  %s68, 16, %s70, [#allocation9]
    $region21: #{_forward.1} parent=1 // pred_fallthru
      _
    // Predicated region
    $region22: #{_forward.1} parent=1 // pred_check
      _
    $region23: #{_forward.1} parent=1 // pred_check_branch
      %74 = sbr.rel (0) target = $region25
    $region24: #{_forward.1} parent=1 // pred_region
      %76 = dma.done [#allocation3], 896
    $region25: #{_forward.1} parent=1 // pred_fallthru
      _
    // Predicated region
    $region26: #{_forward.1} parent=1 // pred_check
      _
    $region27: #{_forward.1} parent=1 // pred_check_branch
      %78 = sbr.rel (0) target = $region29
    $region28: #{_forward.1} parent=1 // pred_region
      %80 = dma.done [#allocation6], 50176
    $region29: #{_forward.1} parent=1 // pred_fallthru
      _
    // Predicated region
    $region30: #{_forward.1} parent=1 // pred_check
      _
    $region31: #{_forward.1} parent=1 // pred_check_branch
      %82 = sbr.rel (0) target = $region33
    $region32: #{_forward.1} parent=1 // pred_region
      %84 = dma.done [#allocation6], 128
    $region33: #{_forward.1} parent=1 // pred_fallthru
      _
    // Predicated region
    $region34: #{_forward.1} parent=1 // pred_check
      _
    $region35: #{_forward.1} parent=1 // pred_check_branch
      %86 = sbr.rel (0) target = $region37
    $region36: #{_forward.1} parent=1 // pred_region
      %88 = dma.done [#allocation9], 8192
    $region37: #{_forward.1} parent=1 // pred_fallthru
      _
    // Predicated region
    $region38: #{_forward.1} parent=1 // pred_check
      _
    $region39: #{_forward.1} parent=1 // pred_check_branch
      %90 = sbr.rel (0) target = $region41
    $region40: #{_forward.1} parent=1 // pred_region
      %92 = dma.done [#allocation9], 16
    $region41: #{_forward.1} parent=1 // pred_fallthru
      _
    %v94 = vld [vmem:[#allocation2] sm:$0xff]
    %v95 = vld [vmem:[#allocation2 + $0x8] sm:$0xff]
    %v96 = vld [vmem:[#allocation2 + $0x10] sm:$0xff]
    %v97 = vld [vmem:[#allocation2 + $0x18] sm:$0xff]
    %v98 = vld [vmem:[#allocation2 + $0x20] sm:$0xff]
    %v99 = vld [vmem:[#allocation2 + $0x28] sm:$0xff]
    %v100 = vld [vmem:[#allocation2 + $0x30] sm:$0xff]
    %v101 = vpack.c.bf16 %v94, %v94
    %v102 = vpack.c.bf16 %v95, %v95
    %v103 = vpack.c.bf16 %v96, %v96
    %v104 = vpack.c.bf16 %v97, %v97
    %v105 = vpack.c.bf16 %v98, %v98
    %v106 = vpack.c.bf16 %v99, %v99
    %v107 = vpack.c.bf16 %v100, %v100
    %v108 = vld [vmem:[#allocation5] sm:$0xff]
    %v109 = vld [vmem:[#allocation5 + $0x8] sm:$0xff]
    %v110 = vld [vmem:[#allocation5 + $0x10] sm:$0xff]
    %v111 = vld [vmem:[#allocation5 + $0x18] sm:$0xff]
    %v112 = vld [vmem:[#allocation5 + $0x20] sm:$0xff]
    %v113 = vld [vmem:[#allocation5 + $0x28] sm:$0xff]
    %v114 = vld [vmem:[#allocation5 + $0x30] sm:$0xff]
    %v115 = vld [vmem:[#allocation5 + $0x38] sm:$0xff]
    %v116 = vld [vmem:[#allocation5 + $0x40] sm:$0xff]
    %v117 = vld [vmem:[#allocation5 + $0x48] sm:$0xff]
    %v118 = vld [vmem:[#allocation5 + $0x50] sm:$0xff]
    %v119 = vld [vmem:[#allocation5 + $0x58] sm:$0xff]
    %v120 = vld [vmem:[#allocation5 + $0x60] sm:$0xff]
    %v121 = vld [vmem:[#allocation5 + $0x68] sm:$0xff]
    %v122 = vld [vmem:[#allocation5 + $0x70] sm:$0xff]
    %v123 = vld [vmem:[#allocation5 + $0x78] sm:$0xff]
    %v124 = vld [vmem:[#allocation5 + $0x80] sm:$0xff]
    %v125 = vld [vmem:[#allocation5 + $0x88] sm:$0xff]
    %v126 = vld [vmem:[#allocation5 + $0x90] sm:$0xff]
    %v127 = vld [vmem:[#allocation5 + $0x98] sm:$0xff]
    %v128 = vld [vmem:[#allocation5 + $0xa0] sm:$0xff]
    %v129 = vld [vmem:[#allocation5 + $0xa8] sm:$0xff]
    %v130 = vld [vmem:[#allocation5 + $0xb0] sm:$0xff]
    %v131 = vld [vmem:[#allocation5 + $0xb8] sm:$0xff]
    %v132 = vld [vmem:[#allocation5 + $0xc0] sm:$0xff]
    %v133 = vld [vmem:[#allocation5 + $0xc8] sm:$0xff]
    %v134 = vld [vmem:[#allocation5 + $0xd0] sm:$0xff]
    %v135 = vld [vmem:[#allocation5 + $0xd8] sm:$0xff]
    %v136 = vld [vmem:[#allocation5 + $0xe0] sm:$0xff]
    %v137 = vld [vmem:[#allocation5 + $0xe8] sm:$0xff]
    %v138 = vld [vmem:[#allocation5 + $0xf0] sm:$0xff]
    %v139 = vld [vmem:[#allocation5 + $0xf8] sm:$0xff]
    %v140 = vld [vmem:[#allocation5 + $0x100] sm:$0xff]
    %v141 = vld [vmem:[#allocation5 + $0x108] sm:$0xff]
    %v142 = vld [vmem:[#allocation5 + $0x110] sm:$0xff]
    %v143 = vld [vmem:[#allocation5 + $0x118] sm:$0xff]
    %v144 = vld [vmem:[#allocation5 + $0x120] sm:$0xff]
    %v145 = vld [vmem:[#allocation5 + $0x128] sm:$0xff]
    %v146 = vld [vmem:[#allocation5 + $0x130] sm:$0xff]
    %v147 = vld [vmem:[#allocation5 + $0x138] sm:$0xff]
    %v148 = vld [vmem:[#allocation5 + $0x140] sm:$0xff]
    %v149 = vld [vmem:[#allocation5 + $0x148] sm:$0xff]
    %v150 = vld [vmem:[#allocation5 + $0x150] sm:$0xff]
    %v151 = vld [vmem:[#allocation5 + $0x158] sm:$0xff]
    %v152 = vld [vmem:[#allocation5 + $0x160] sm:$0xff]
    %v153 = vld [vmem:[#allocation5 + $0x168] sm:$0xff]
    %v154 = vld [vmem:[#allocation5 + $0x170] sm:$0xff]
    %v155 = vld [vmem:[#allocation5 + $0x178] sm:$0xff]
    %v156 = vld [vmem:[#allocation5 + $0x180] sm:$0xff]
    %v157 = vld [vmem:[#allocation5 + $0x188] sm:$0xff]
    %v158 = vld [vmem:[#allocation5 + $0x190] sm:$0xff]
    %v159 = vld [vmem:[#allocation5 + $0x198] sm:$0xff]
    %v160 = vld [vmem:[#allocation5 + $0x1a0] sm:$0xff]
    %v161 = vld [vmem:[#allocation5 + $0x1a8] sm:$0xff]
    %v162 = vld [vmem:[#allocation5 + $0x1b0] sm:$0xff]
    %v163 = vld [vmem:[#allocation5 + $0x1b8] sm:$0xff]
    %v164 = vld [vmem:[#allocation5 + $0x1c0] sm:$0xff]
    %v165 = vld [vmem:[#allocation5 + $0x1c8] sm:$0xff]
    %v166 = vld [vmem:[#allocation5 + $0x1d0] sm:$0xff]
    %v167 = vld [vmem:[#allocation5 + $0x1d8] sm:$0xff]
    %v168 = vld [vmem:[#allocation5 + $0x1e0] sm:$0xff]
    %v169 = vld [vmem:[#allocation5 + $0x1e8] sm:$0xff]
    %v170 = vld [vmem:[#allocation5 + $0x1f0] sm:$0xff]
    %v171 = vld [vmem:[#allocation5 + $0x1f8] sm:$0xff]
    %v172 = vld [vmem:[#allocation5 + $0x200] sm:$0xff]
    %v173 = vld [vmem:[#allocation5 + $0x208] sm:$0xff]
    %v174 = vld [vmem:[#allocation5 + $0x210] sm:$0xff]
    %v175 = vld [vmem:[#allocation5 + $0x218] sm:$0xff]
    %v176 = vld [vmem:[#allocation5 + $0x220] sm:$0xff]
    %v177 = vld [vmem:[#allocation5 + $0x228] sm:$0xff]
    %v178 = vld [vmem:[#allocation5 + $0x230] sm:$0xff]
    %v179 = vld [vmem:[#allocation5 + $0x238] sm:$0xff]
    %v180 = vld [vmem:[#allocation5 + $0x240] sm:$0xff]
    %v181 = vld [vmem:[#allocation5 + $0x248] sm:$0xff]
    %v182 = vld [vmem:[#allocation5 + $0x250] sm:$0xff]
    %v183 = vld [vmem:[#allocation5 + $0x258] sm:$0xff]
    %v184 = vld [vmem:[#allocation5 + $0x260] sm:$0xff]
    %v185 = vld [vmem:[#allocation5 + $0x268] sm:$0xff]
    %v186 = vld [vmem:[#allocation5 + $0x270] sm:$0xff]
    %v187 = vld [vmem:[#allocation5 + $0x278] sm:$0xff]
    %v188 = vld [vmem:[#allocation5 + $0x280] sm:$0xff]
    %v189 = vld [vmem:[#allocation5 + $0x288] sm:$0xff]
    %v190 = vld [vmem:[#allocation5 + $0x290] sm:$0xff]
    %v191 = vld [vmem:[#allocation5 + $0x298] sm:$0xff]
    %v192 = vld [vmem:[#allocation5 + $0x2a0] sm:$0xff]
    %v193 = vld [vmem:[#allocation5 + $0x2a8] sm:$0xff]
    %v194 = vld [vmem:[#allocation5 + $0x2b0] sm:$0xff]
    %v195 = vld [vmem:[#allocation5 + $0x2b8] sm:$0xff]
    %v196 = vld [vmem:[#allocation5 + $0x2c0] sm:$0xff]
    %v197 = vld [vmem:[#allocation5 + $0x2c8] sm:$0xff]
    %v198 = vld [vmem:[#allocation5 + $0x2d0] sm:$0xff]
    %v199 = vld [vmem:[#allocation5 + $0x2d8] sm:$0xff]
    %v200 = vld [vmem:[#allocation5 + $0x2e0] sm:$0xff]
    %v201 = vld [vmem:[#allocation5 + $0x2e8] sm:$0xff]
    %v202 = vld [vmem:[#allocation5 + $0x2f0] sm:$0xff]
    %v203 = vld [vmem:[#allocation5 + $0x2f8] sm:$0xff]
    %v204 = vld [vmem:[#allocation5 + $0x300] sm:$0xff]
    %v205 = vld [vmem:[#allocation5 + $0x308] sm:$0xff]
    %v206 = vld [vmem:[#allocation5 + $0x310] sm:$0xff]
    %v207 = vld [vmem:[#allocation5 + $0x318] sm:$0xff]
    %v208 = vld [vmem:[#allocation5 + $0x320] sm:$0xff]
    %v209 = vld [vmem:[#allocation5 + $0x328] sm:$0xff]
    %v210 = vld [vmem:[#allocation5 + $0x330] sm:$0xff]
    %v211 = vld [vmem:[#allocation5 + $0x338] sm:$0xff]
    %v212 = vld [vmem:[#allocation5 + $0x340] sm:$0xff]
    %v213 = vld [vmem:[#allocation5 + $0x348] sm:$0xff]
    %v214 = vld [vmem:[#allocation5 + $0x350] sm:$0xff]
    %v215 = vld [vmem:[#allocation5 + $0x358] sm:$0xff]
    %v216 = vld [vmem:[#allocation5 + $0x360] sm:$0xff]
    %v217 = vld [vmem:[#allocation5 + $0x368] sm:$0xff]
    %v218 = vld [vmem:[#allocation5 + $0x370] sm:$0xff]
    %v219 = vld [vmem:[#allocation5 + $0x378] sm:$0xff]
    %v220 = vld [vmem:[#allocation5 + $0x380] sm:$0xff]
    %v221 = vld [vmem:[#allocation5 + $0x388] sm:$0xff]
    %v222 = vld [vmem:[#allocation5 + $0x390] sm:$0xff]
    %v223 = vld [vmem:[#allocation5 + $0x398] sm:$0xff]
    %v224 = vld [vmem:[#allocation5 + $0x3a0] sm:$0xff]
    %v225 = vld [vmem:[#allocation5 + $0x3a8] sm:$0xff]
    %v226 = vld [vmem:[#allocation5 + $0x3b0] sm:$0xff]
    %v227 = vld [vmem:[#allocation5 + $0x3b8] sm:$0xff]
    %v228 = vld [vmem:[#allocation5 + $0x3c0] sm:$0xff]
    %v229 = vld [vmem:[#allocation5 + $0x3c8] sm:$0xff]
    %v230 = vld [vmem:[#allocation5 + $0x3d0] sm:$0xff]
    %v231 = vld [vmem:[#allocation5 + $0x3d8] sm:$0xff]
    %v232 = vld [vmem:[#allocation5 + $0x3e0] sm:$0xff]
    %v233 = vld [vmem:[#allocation5 + $0x3e8] sm:$0xff]
    %v234 = vld [vmem:[#allocation5 + $0x3f0] sm:$0xff]
    %v235 = vld [vmem:[#allocation5 + $0x3f8] sm:$0xff]
    %v236 = vld [vmem:[#allocation5 + $0x400] sm:$0xff]
    %v237 = vld [vmem:[#allocation5 + $0x408] sm:$0xff]
    %v238 = vld [vmem:[#allocation5 + $0x410] sm:$0xff]
    %v239 = vld [vmem:[#allocation5 + $0x418] sm:$0xff]
    %v240 = vld [vmem:[#allocation5 + $0x420] sm:$0xff]
    %v241 = vld [vmem:[#allocation5 + $0x428] sm:$0xff]
    %v242 = vld [vmem:[#allocation5 + $0x430] sm:$0xff]
    %v243 = vld [vmem:[#allocation5 + $0x438] sm:$0xff]
    %v244 = vld [vmem:[#allocation5 + $0x440] sm:$0xff]
    %v245 = vld [vmem:[#allocation5 + $0x448] sm:$0xff]
    %v246 = vld [vmem:[#allocation5 + $0x450] sm:$0xff]
    %v247 = vld [vmem:[#allocation5 + $0x458] sm:$0xff]
    %v248 = vld [vmem:[#allocation5 + $0x460] sm:$0xff]
    %v249 = vld [vmem:[#allocation5 + $0x468] sm:$0xff]
    %v250 = vld [vmem:[#allocation5 + $0x470] sm:$0xff]
    %v251 = vld [vmem:[#allocation5 + $0x478] sm:$0xff]
    %v252 = vld [vmem:[#allocation5 + $0x480] sm:$0xff]
    %v253 = vld [vmem:[#allocation5 + $0x488] sm:$0xff]
    %v254 = vld [vmem:[#allocation5 + $0x490] sm:$0xff]
    %v255 = vld [vmem:[#allocation5 + $0x498] sm:$0xff]
    %v256 = vld [vmem:[#allocation5 + $0x4a0] sm:$0xff]
    %v257 = vld [vmem:[#allocation5 + $0x4a8] sm:$0xff]
    %v258 = vld [vmem:[#allocation5 + $0x4b0] sm:$0xff]
    %v259 = vld [vmem:[#allocation5 + $0x4b8] sm:$0xff]
    %v260 = vld [vmem:[#allocation5 + $0x4c0] sm:$0xff]
    %v261 = vld [vmem:[#allocation5 + $0x4c8] sm:$0xff]
    %v262 = vld [vmem:[#allocation5 + $0x4d0] sm:$0xff]
    %v263 = vld [vmem:[#allocation5 + $0x4d8] sm:$0xff]
    %v264 = vld [vmem:[#allocation5 + $0x4e0] sm:$0xff]
    %v265 = vld [vmem:[#allocation5 + $0x4e8] sm:$0xff]
    %v266 = vld [vmem:[#allocation5 + $0x4f0] sm:$0xff]
    %v267 = vld [vmem:[#allocation5 + $0x4f8] sm:$0xff]
    %v268 = vld [vmem:[#allocation5 + $0x500] sm:$0xff]
    %v269 = vld [vmem:[#allocation5 + $0x508] sm:$0xff]
    %v270 = vld [vmem:[#allocation5 + $0x510] sm:$0xff]
    %v271 = vld [vmem:[#allocation5 + $0x518] sm:$0xff]
    %v272 = vld [vmem:[#allocation5 + $0x520] sm:$0xff]
    %v273 = vld [vmem:[#allocation5 + $0x528] sm:$0xff]
    %v274 = vld [vmem:[#allocation5 + $0x530] sm:$0xff]
    %v275 = vld [vmem:[#allocation5 + $0x538] sm:$0xff]
    %v276 = vld [vmem:[#allocation5 + $0x540] sm:$0xff]
    %v277 = vld [vmem:[#allocation5 + $0x548] sm:$0xff]
    %v278 = vld [vmem:[#allocation5 + $0x550] sm:$0xff]
    %v279 = vld [vmem:[#allocation5 + $0x558] sm:$0xff]
    %v280 = vld [vmem:[#allocation5 + $0x560] sm:$0xff]
    %v281 = vld [vmem:[#allocation5 + $0x568] sm:$0xff]
    %v282 = vld [vmem:[#allocation5 + $0x570] sm:$0xff]
    %v283 = vld [vmem:[#allocation5 + $0x578] sm:$0xff]
    %v284 = vld [vmem:[#allocation5 + $0x580] sm:$0xff]
    %v285 = vld [vmem:[#allocation5 + $0x588] sm:$0xff]
    %v286 = vld [vmem:[#allocation5 + $0x590] sm:$0xff]
    %v287 = vld [vmem:[#allocation5 + $0x598] sm:$0xff]
    %v288 = vld [vmem:[#allocation5 + $0x5a0] sm:$0xff]
    %v289 = vld [vmem:[#allocation5 + $0x5a8] sm:$0xff]
    %v290 = vld [vmem:[#allocation5 + $0x5b0] sm:$0xff]
    %v291 = vld [vmem:[#allocation5 + $0x5b8] sm:$0xff]
    %v292 = vld [vmem:[#allocation5 + $0x5c0] sm:$0xff]
    %v293 = vld [vmem:[#allocation5 + $0x5c8] sm:$0xff]
    %v294 = vld [vmem:[#allocation5 + $0x5d0] sm:$0xff]
    %v295 = vld [vmem:[#allocation5 + $0x5d8] sm:$0xff]
    %v296 = vld [vmem:[#allocation5 + $0x5e0] sm:$0xff]
    %v297 = vld [vmem:[#allocation5 + $0x5e8] sm:$0xff]
    %v298 = vld [vmem:[#allocation5 + $0x5f0] sm:$0xff]
    %v299 = vld [vmem:[#allocation5 + $0x5f8] sm:$0xff]
    %v300 = vld [vmem:[#allocation5 + $0x600] sm:$0xff]
    %v301 = vld [vmem:[#allocation5 + $0x608] sm:$0xff]
    %v302 = vld [vmem:[#allocation5 + $0x610] sm:$0xff]
    %v303 = vld [vmem:[#allocation5 + $0x618] sm:$0xff]
    %v304 = vld [vmem:[#allocation5 + $0x620] sm:$0xff]
    %v305 = vld [vmem:[#allocation5 + $0x628] sm:$0xff]
    %v306 = vld [vmem:[#allocation5 + $0x630] sm:$0xff]
    %v307 = vld [vmem:[#allocation5 + $0x638] sm:$0xff]
    %v308 = vld [vmem:[#allocation5 + $0x640] sm:$0xff]
    %v309 = vld [vmem:[#allocation5 + $0x648] sm:$0xff]
    %v310 = vld [vmem:[#allocation5 + $0x650] sm:$0xff]
    %v311 = vld [vmem:[#allocation5 + $0x658] sm:$0xff]
    %v312 = vld [vmem:[#allocation5 + $0x660] sm:$0xff]
    %v313 = vld [vmem:[#allocation5 + $0x668] sm:$0xff]
    %v314 = vld [vmem:[#allocation5 + $0x670] sm:$0xff]
    %v315 = vld [vmem:[#allocation5 + $0x678] sm:$0xff]
    %v316 = vld [vmem:[#allocation5 + $0x680] sm:$0xff]
    %v317 = vld [vmem:[#allocation5 + $0x688] sm:$0xff]
    %v318 = vld [vmem:[#allocation5 + $0x690] sm:$0xff]
    %v319 = vld [vmem:[#allocation5 + $0x698] sm:$0xff]
    %v320 = vld [vmem:[#allocation5 + $0x6a0] sm:$0xff]
    %v321 = vld [vmem:[#allocation5 + $0x6a8] sm:$0xff]
    %v322 = vld [vmem:[#allocation5 + $0x6b0] sm:$0xff]
    %v323 = vld [vmem:[#allocation5 + $0x6b8] sm:$0xff]
    %v324 = vld [vmem:[#allocation5 + $0x6c0] sm:$0xff]
    %v325 = vld [vmem:[#allocation5 + $0x6c8] sm:$0xff]
    %v326 = vld [vmem:[#allocation5 + $0x6d0] sm:$0xff]
    %v327 = vld [vmem:[#allocation5 + $0x6d8] sm:$0xff]
    %v328 = vld [vmem:[#allocation5 + $0x6e0] sm:$0xff]
    %v329 = vld [vmem:[#allocation5 + $0x6e8] sm:$0xff]
    %v330 = vld [vmem:[#allocation5 + $0x6f0] sm:$0xff]
    %v331 = vld [vmem:[#allocation5 + $0x6f8] sm:$0xff]
    %v332 = vld [vmem:[#allocation5 + $0x700] sm:$0xff]
    %v333 = vld [vmem:[#allocation5 + $0x708] sm:$0xff]
    %v334 = vld [vmem:[#allocation5 + $0x710] sm:$0xff]
    %v335 = vld [vmem:[#allocation5 + $0x718] sm:$0xff]
    %v336 = vld [vmem:[#allocation5 + $0x720] sm:$0xff]
    %v337 = vld [vmem:[#allocation5 + $0x728] sm:$0xff]
    %v338 = vld [vmem:[#allocation5 + $0x730] sm:$0xff]
    %v339 = vld [vmem:[#allocation5 + $0x738] sm:$0xff]
    %v340 = vld [vmem:[#allocation5 + $0x740] sm:$0xff]
    %v341 = vld [vmem:[#allocation5 + $0x748] sm:$0xff]
    %v342 = vld [vmem:[#allocation5 + $0x750] sm:$0xff]
    %v343 = vld [vmem:[#allocation5 + $0x758] sm:$0xff]
    %v344 = vld [vmem:[#allocation5 + $0x760] sm:$0xff]
    %v345 = vld [vmem:[#allocation5 + $0x768] sm:$0xff]
    %v346 = vld [vmem:[#allocation5 + $0x770] sm:$0xff]
    %v347 = vld [vmem:[#allocation5 + $0x778] sm:$0xff]
    %v348 = vld [vmem:[#allocation5 + $0x780] sm:$0xff]
    %v349 = vld [vmem:[#allocation5 + $0x788] sm:$0xff]
    %v350 = vld [vmem:[#allocation5 + $0x790] sm:$0xff]
    %v351 = vld [vmem:[#allocation5 + $0x798] sm:$0xff]
    %v352 = vld [vmem:[#allocation5 + $0x7a0] sm:$0xff]
    %v353 = vld [vmem:[#allocation5 + $0x7a8] sm:$0xff]
    %v354 = vld [vmem:[#allocation5 + $0x7b0] sm:$0xff]
    %v355 = vld [vmem:[#allocation5 + $0x7b8] sm:$0xff]
    %v356 = vld [vmem:[#allocation5 + $0x7c0] sm:$0xff]
    %v357 = vld [vmem:[#allocation5 + $0x7c8] sm:$0xff]
    %v358 = vld [vmem:[#allocation5 + $0x7d0] sm:$0xff]
    %v359 = vld [vmem:[#allocation5 + $0x7d8] sm:$0xff]
    %v360 = vld [vmem:[#allocation5 + $0x7e0] sm:$0xff]
    %v361 = vld [vmem:[#allocation5 + $0x7e8] sm:$0xff]
    %v362 = vld [vmem:[#allocation5 + $0x7f0] sm:$0xff]
    %v363 = vld [vmem:[#allocation5 + $0x7f8] sm:$0xff]
    %v364 = vld [vmem:[#allocation5 + $0x800] sm:$0xff]
    %v365 = vld [vmem:[#allocation5 + $0x808] sm:$0xff]
    %v366 = vld [vmem:[#allocation5 + $0x810] sm:$0xff]
    %v367 = vld [vmem:[#allocation5 + $0x818] sm:$0xff]
    %v368 = vld [vmem:[#allocation5 + $0x820] sm:$0xff]
    %v369 = vld [vmem:[#allocation5 + $0x828] sm:$0xff]
    %v370 = vld [vmem:[#allocation5 + $0x830] sm:$0xff]
    %v371 = vld [vmem:[#allocation5 + $0x838] sm:$0xff]
    %v372 = vld [vmem:[#allocation5 + $0x840] sm:$0xff]
    %v373 = vld [vmem:[#allocation5 + $0x848] sm:$0xff]
    %v374 = vld [vmem:[#allocation5 + $0x850] sm:$0xff]
    %v375 = vld [vmem:[#allocation5 + $0x858] sm:$0xff]
    %v376 = vld [vmem:[#allocation5 + $0x860] sm:$0xff]
    %v377 = vld [vmem:[#allocation5 + $0x868] sm:$0xff]
    %v378 = vld [vmem:[#allocation5 + $0x870] sm:$0xff]
    %v379 = vld [vmem:[#allocation5 + $0x878] sm:$0xff]
    %v380 = vld [vmem:[#allocation5 + $0x880] sm:$0xff]
    %v381 = vld [vmem:[#allocation5 + $0x888] sm:$0xff]
    %v382 = vld [vmem:[#allocation5 + $0x890] sm:$0xff]
    %v383 = vld [vmem:[#allocation5 + $0x898] sm:$0xff]
    %v384 = vld [vmem:[#allocation5 + $0x8a0] sm:$0xff]
    %v385 = vld [vmem:[#allocation5 + $0x8a8] sm:$0xff]
    %v386 = vld [vmem:[#allocation5 + $0x8b0] sm:$0xff]
    %v387 = vld [vmem:[#allocation5 + $0x8b8] sm:$0xff]
    %v388 = vld [vmem:[#allocation5 + $0x8c0] sm:$0xff]
    %v389 = vld [vmem:[#allocation5 + $0x8c8] sm:$0xff]
    %v390 = vld [vmem:[#allocation5 + $0x8d0] sm:$0xff]
    %v391 = vld [vmem:[#allocation5 + $0x8d8] sm:$0xff]
    %v392 = vld [vmem:[#allocation5 + $0x8e0] sm:$0xff]
    %v393 = vld [vmem:[#allocation5 + $0x8e8] sm:$0xff]
    %v394 = vld [vmem:[#allocation5 + $0x8f0] sm:$0xff]
    %v395 = vld [vmem:[#allocation5 + $0x8f8] sm:$0xff]
    %v396 = vld [vmem:[#allocation5 + $0x900] sm:$0xff]
    %v397 = vld [vmem:[#allocation5 + $0x908] sm:$0xff]
    %v398 = vld [vmem:[#allocation5 + $0x910] sm:$0xff]
    %v399 = vld [vmem:[#allocation5 + $0x918] sm:$0xff]
    %v400 = vld [vmem:[#allocation5 + $0x920] sm:$0xff]
    %v401 = vld [vmem:[#allocation5 + $0x928] sm:$0xff]
    %v402 = vld [vmem:[#allocation5 + $0x930] sm:$0xff]
    %v403 = vld [vmem:[#allocation5 + $0x938] sm:$0xff]
    %v404 = vld [vmem:[#allocation5 + $0x940] sm:$0xff]
    %v405 = vld [vmem:[#allocation5 + $0x948] sm:$0xff]
    %v406 = vld [vmem:[#allocation5 + $0x950] sm:$0xff]
    %v407 = vld [vmem:[#allocation5 + $0x958] sm:$0xff]
    %v408 = vld [vmem:[#allocation5 + $0x960] sm:$0xff]
    %v409 = vld [vmem:[#allocation5 + $0x968] sm:$0xff]
    %v410 = vld [vmem:[#allocation5 + $0x970] sm:$0xff]
    %v411 = vld [vmem:[#allocation5 + $0x978] sm:$0xff]
    %v412 = vld [vmem:[#allocation5 + $0x980] sm:$0xff]
    %v413 = vld [vmem:[#allocation5 + $0x988] sm:$0xff]
    %v414 = vld [vmem:[#allocation5 + $0x990] sm:$0xff]
    %v415 = vld [vmem:[#allocation5 + $0x998] sm:$0xff]
    %v416 = vld [vmem:[#allocation5 + $0x9a0] sm:$0xff]
    %v417 = vld [vmem:[#allocation5 + $0x9a8] sm:$0xff]
    %v418 = vld [vmem:[#allocation5 + $0x9b0] sm:$0xff]
    %v419 = vld [vmem:[#allocation5 + $0x9b8] sm:$0xff]
    %v420 = vld [vmem:[#allocation5 + $0x9c0] sm:$0xff]
    %v421 = vld [vmem:[#allocation5 + $0x9c8] sm:$0xff]
    %v422 = vld [vmem:[#allocation5 + $0x9d0] sm:$0xff]
    %v423 = vld [vmem:[#allocation5 + $0x9d8] sm:$0xff]
    %v424 = vld [vmem:[#allocation5 + $0x9e0] sm:$0xff]
    %v425 = vld [vmem:[#allocation5 + $0x9e8] sm:$0xff]
    %v426 = vld [vmem:[#allocation5 + $0x9f0] sm:$0xff]
    %v427 = vld [vmem:[#allocation5 + $0x9f8] sm:$0xff]
    %v428 = vld [vmem:[#allocation5 + $0xa00] sm:$0xff]
    %v429 = vld [vmem:[#allocation5 + $0xa08] sm:$0xff]
    %v430 = vld [vmem:[#allocation5 + $0xa10] sm:$0xff]
    %v431 = vld [vmem:[#allocation5 + $0xa18] sm:$0xff]
    %v432 = vld [vmem:[#allocation5 + $0xa20] sm:$0xff]
    %v433 = vld [vmem:[#allocation5 + $0xa28] sm:$0xff]
    %v434 = vld [vmem:[#allocation5 + $0xa30] sm:$0xff]
    %v435 = vld [vmem:[#allocation5 + $0xa38] sm:$0xff]
    %v436 = vld [vmem:[#allocation5 + $0xa40] sm:$0xff]
    %v437 = vld [vmem:[#allocation5 + $0xa48] sm:$0xff]
    %v438 = vld [vmem:[#allocation5 + $0xa50] sm:$0xff]
    %v439 = vld [vmem:[#allocation5 + $0xa58] sm:$0xff]
    %v440 = vld [vmem:[#allocation5 + $0xa60] sm:$0xff]
    %v441 = vld [vmem:[#allocation5 + $0xa68] sm:$0xff]
    %v442 = vld [vmem:[#allocation5 + $0xa70] sm:$0xff]
    %v443 = vld [vmem:[#allocation5 + $0xa78] sm:$0xff]
    %v444 = vld [vmem:[#allocation5 + $0xa80] sm:$0xff]
    %v445 = vld [vmem:[#allocation5 + $0xa88] sm:$0xff]
    %v446 = vld [vmem:[#allocation5 + $0xa90] sm:$0xff]
    %v447 = vld [vmem:[#allocation5 + $0xa98] sm:$0xff]
    %v448 = vld [vmem:[#allocation5 + $0xaa0] sm:$0xff]
    %v449 = vld [vmem:[#allocation5 + $0xaa8] sm:$0xff]
    %v450 = vld [vmem:[#allocation5 + $0xab0] sm:$0xff]
    %v451 = vld [vmem:[#allocation5 + $0xab8] sm:$0xff]
    %v452 = vld [vmem:[#allocation5 + $0xac0] sm:$0xff]
    %v453 = vld [vmem:[#allocation5 + $0xac8] sm:$0xff]
    %v454 = vld [vmem:[#allocation5 + $0xad0] sm:$0xff]
    %v455 = vld [vmem:[#allocation5 + $0xad8] sm:$0xff]
    %v456 = vld [vmem:[#allocation5 + $0xae0] sm:$0xff]
    %v457 = vld [vmem:[#allocation5 + $0xae8] sm:$0xff]
    %v458 = vld [vmem:[#allocation5 + $0xaf0] sm:$0xff]
    %v459 = vld [vmem:[#allocation5 + $0xaf8] sm:$0xff]
    %v460 = vld [vmem:[#allocation5 + $0xb00] sm:$0xff]
    %v461 = vld [vmem:[#allocation5 + $0xb08] sm:$0xff]
    %v462 = vld [vmem:[#allocation5 + $0xb10] sm:$0xff]
    %v463 = vld [vmem:[#allocation5 + $0xb18] sm:$0xff]
    %v464 = vld [vmem:[#allocation5 + $0xb20] sm:$0xff]
    %v465 = vld [vmem:[#allocation5 + $0xb28] sm:$0xff]
    %v466 = vld [vmem:[#allocation5 + $0xb30] sm:$0xff]
    %v467 = vld [vmem:[#allocation5 + $0xb38] sm:$0xff]
    %v468 = vld [vmem:[#allocation5 + $0xb40] sm:$0xff]
    %v469 = vld [vmem:[#allocation5 + $0xb48] sm:$0xff]
    %v470 = vld [vmem:[#allocation5 + $0xb50] sm:$0xff]
    %v471 = vld [vmem:[#allocation5 + $0xb58] sm:$0xff]
    %v472 = vld [vmem:[#allocation5 + $0xb60] sm:$0xff]
    %v473 = vld [vmem:[#allocation5 + $0xb68] sm:$0xff]
    %v474 = vld [vmem:[#allocation5 + $0xb70] sm:$0xff]
    %v475 = vld [vmem:[#allocation5 + $0xb78] sm:$0xff]
    %v476 = vld [vmem:[#allocation5 + $0xb80] sm:$0xff]
    %v477 = vld [vmem:[#allocation5 + $0xb88] sm:$0xff]
    %v478 = vld [vmem:[#allocation5 + $0xb90] sm:$0xff]
    %v479 = vld [vmem:[#allocation5 + $0xb98] sm:$0xff]
    %v480 = vld [vmem:[#allocation5 + $0xba0] sm:$0xff]
    %v481 = vld [vmem:[#allocation5 + $0xba8] sm:$0xff]
    %v482 = vld [vmem:[#allocation5 + $0xbb0] sm:$0xff]
    %v483 = vld [vmem:[#allocation5 + $0xbb8] sm:$0xff]
    %v484 = vld [vmem:[#allocation5 + $0xbc0] sm:$0xff]
    %v485 = vld [vmem:[#allocation5 + $0xbc8] sm:$0xff]
    %v486 = vld [vmem:[#allocation5 + $0xbd0] sm:$0xff]
    %v487 = vld [vmem:[#allocation5 + $0xbd8] sm:$0xff]
    %v488 = vld [vmem:[#allocation5 + $0xbe0] sm:$0xff]
    %v489 = vld [vmem:[#allocation5 + $0xbe8] sm:$0xff]
    %v490 = vld [vmem:[#allocation5 + $0xbf0] sm:$0xff]
    %v491 = vld [vmem:[#allocation5 + $0xbf8] sm:$0xff]
    %v492 = vld [vmem:[#allocation5 + $0xc00] sm:$0xff]
    %v493 = vld [vmem:[#allocation5 + $0xc08] sm:$0xff]
    %v494 = vld [vmem:[#allocation5 + $0xc10] sm:$0xff]
    %v495 = vld [vmem:[#allocation5 + $0xc18] sm:$0xff]
    %v496 = vld [vmem:[#allocation5 + $0xc20] sm:$0xff]
    %v497 = vld [vmem:[#allocation5 + $0xc28] sm:$0xff]
    %v498 = vld [vmem:[#allocation5 + $0xc30] sm:$0xff]
    %v499 = vld [vmem:[#allocation5 + $0xc38] sm:$0xff]
    %v500 = vld [vmem:[#allocation7] sm:$0xff]
    %v502 = vperm.slane %v500, 0
    %v503 = vperm.slane %v500, 1
    %v504 = vperm.slane %v500, 2
    %v505 = vperm.slane %v500, 3
    %v506 = vperm.slane %v500, 4
    %v507 = vperm.slane %v500, 5
    %v508 = vperm.slane %v500, 6
    %v509 = vperm.slane %v500, 7
    %v910 = vunpack.c.l.b16 %v108
    %v911 = vunpack.c.h.b16 %v108
    %v912 = vunpack.c.l.b16 %v109
    %v913 = vunpack.c.h.b16 %v109
    %v914 = vunpack.c.l.b16 %v110
    %v915 = vunpack.c.h.b16 %v110
    %v916 = vunpack.c.l.b16 %v111
    %v917 = vunpack.c.h.b16 %v111
    %v918 = vunpack.c.l.b16 %v112
    %v919 = vunpack.c.h.b16 %v112
    %v920 = vunpack.c.l.b16 %v113
    %v921 = vunpack.c.h.b16 %v113
    %v922 = vunpack.c.l.b16 %v114
    %v923 = vunpack.c.h.b16 %v114
    %v924 = vunpack.c.l.b16 %v115
    %v925 = vunpack.c.h.b16 %v115
    %v926 = vunpack.c.l.b16 %v116
    %v927 = vunpack.c.h.b16 %v116
    %v928 = vunpack.c.l.b16 %v117
    %v929 = vunpack.c.h.b16 %v117
    %v930 = vunpack.c.l.b16 %v118
    %v931 = vunpack.c.h.b16 %v118
    %v932 = vunpack.c.l.b16 %v119
    %v933 = vunpack.c.h.b16 %v119
    %v934 = vunpack.c.l.b16 %v120
    %v935 = vunpack.c.h.b16 %v120
    %v936 = vunpack.c.l.b16 %v121
    %v937 = vunpack.c.h.b16 %v121
    %v938 = vunpack.c.l.b16 %v122
    %v939 = vunpack.c.h.b16 %v122
    %v940 = vunpack.c.l.b16 %v123
    %v941 = vunpack.c.h.b16 %v123
    %v942 = vunpack.c.l.b16 %v124
    %v943 = vunpack.c.h.b16 %v124
    %v944 = vunpack.c.l.b16 %v125
    %v945 = vunpack.c.h.b16 %v125
    %v946 = vunpack.c.l.b16 %v126
    %v947 = vunpack.c.h.b16 %v126
    %v948 = vunpack.c.l.b16 %v127
    %v949 = vunpack.c.h.b16 %v127
    %v950 = vunpack.c.l.b16 %v128
    %v951 = vunpack.c.h.b16 %v128
    %v952 = vunpack.c.l.b16 %v129
    %v953 = vunpack.c.h.b16 %v129
    %v954 = vunpack.c.l.b16 %v130
    %v955 = vunpack.c.h.b16 %v130
    %v956 = vunpack.c.l.b16 %v131
    %v957 = vunpack.c.h.b16 %v131
    %v958 = vunpack.c.l.b16 %v132
    %v959 = vunpack.c.h.b16 %v132
    %v960 = vunpack.c.l.b16 %v133
    %v961 = vunpack.c.h.b16 %v133
    %v962 = vunpack.c.l.b16 %v134
    %v963 = vunpack.c.h.b16 %v134
    %v964 = vunpack.c.l.b16 %v135
    %v965 = vunpack.c.h.b16 %v135
    %v966 = vunpack.c.l.b16 %v136
    %v967 = vunpack.c.h.b16 %v136
    %v968 = vunpack.c.l.b16 %v137
    %v969 = vunpack.c.h.b16 %v137
    %v970 = vunpack.c.l.b16 %v138
    %v971 = vunpack.c.h.b16 %v138
    %v972 = vunpack.c.l.b16 %v139
    %v973 = vunpack.c.h.b16 %v139
    %v974 = vunpack.c.l.b16 %v140
    %v975 = vunpack.c.h.b16 %v140
    %v976 = vunpack.c.l.b16 %v141
    %v977 = vunpack.c.h.b16 %v141
    %v978 = vunpack.c.l.b16 %v142
    %v979 = vunpack.c.h.b16 %v142
    %v980 = vunpack.c.l.b16 %v143
    %v981 = vunpack.c.h.b16 %v143
    %v982 = vunpack.c.l.b16 %v144
    %v983 = vunpack.c.h.b16 %v144
    %v984 = vunpack.c.l.b16 %v145
    %v985 = vunpack.c.h.b16 %v145
    %v986 = vunpack.c.l.b16 %v146
    %v987 = vunpack.c.h.b16 %v146
    %v988 = vunpack.c.l.b16 %v147
    %v989 = vunpack.c.h.b16 %v147
    %v990 = vunpack.c.l.b16 %v148
    %v991 = vunpack.c.h.b16 %v148
    %v992 = vunpack.c.l.b16 %v149
    %v993 = vunpack.c.h.b16 %v149
    %v994 = vunpack.c.l.b16 %v150
    %v995 = vunpack.c.h.b16 %v150
    %v996 = vunpack.c.l.b16 %v151
    %v997 = vunpack.c.h.b16 %v151
    %v998 = vunpack.c.l.b16 %v152
    %v999 = vunpack.c.h.b16 %v152
    %v1000 = vunpack.c.l.b16 %v153
    %v1001 = vunpack.c.h.b16 %v153
    %v1002 = vunpack.c.l.b16 %v154
    %v1003 = vunpack.c.h.b16 %v154
    %v1004 = vunpack.c.l.b16 %v155
    %v1005 = vunpack.c.h.b16 %v155
    %v1006 = vunpack.c.l.b16 %v156
    %v1007 = vunpack.c.h.b16 %v156
    %v1008 = vunpack.c.l.b16 %v157
    %v1009 = vunpack.c.h.b16 %v157
    %v1010 = vunpack.c.l.b16 %v158
    %v1011 = vunpack.c.h.b16 %v158
    %v1012 = vunpack.c.l.b16 %v159
    %v1013 = vunpack.c.h.b16 %v159
    %v1014 = vunpack.c.l.b16 %v160
    %v1015 = vunpack.c.h.b16 %v160
    %v1016 = vunpack.c.l.b16 %v161
    %v1017 = vunpack.c.h.b16 %v161
    %v1018 = vunpack.c.l.b16 %v162
    %v1019 = vunpack.c.h.b16 %v162
    %v1020 = vunpack.c.l.b16 %v163
    %v1021 = vunpack.c.h.b16 %v163
    %v1022 = vunpack.c.l.b16 %v164
    %v1023 = vunpack.c.h.b16 %v164
    %v1024 = vunpack.c.l.b16 %v165
    %v1025 = vunpack.c.h.b16 %v165
    %v1026 = vunpack.c.l.b16 %v166
    %v1027 = vunpack.c.h.b16 %v166
    %v1028 = vunpack.c.l.b16 %v167
    %v1029 = vunpack.c.h.b16 %v167
    %v1030 = vunpack.c.l.b16 %v168
    %v1031 = vunpack.c.h.b16 %v168
    %v1032 = vunpack.c.l.b16 %v169
    %v1033 = vunpack.c.h.b16 %v169
    %v1034 = vunpack.c.l.b16 %v170
    %v1035 = vunpack.c.h.b16 %v170
    %v1036 = vunpack.c.l.b16 %v171
    %v1037 = vunpack.c.h.b16 %v171
    %v1038 = vunpack.c.l.b16 %v172
    %v1039 = vunpack.c.h.b16 %v172
    %v1040 = vunpack.c.l.b16 %v173
    %v1041 = vunpack.c.h.b16 %v173
    %v1042 = vunpack.c.l.b16 %v174
    %v1043 = vunpack.c.h.b16 %v174
    %v1044 = vunpack.c.l.b16 %v175
    %v1045 = vunpack.c.h.b16 %v175
    %v1046 = vunpack.c.l.b16 %v176
    %v1047 = vunpack.c.h.b16 %v176
    %v1048 = vunpack.c.l.b16 %v177
    %v1049 = vunpack.c.h.b16 %v177
    %v1050 = vunpack.c.l.b16 %v178
    %v1051 = vunpack.c.h.b16 %v178
    %v1052 = vunpack.c.l.b16 %v179
    %v1053 = vunpack.c.h.b16 %v179
    %v1054 = vunpack.c.l.b16 %v180
    %v1055 = vunpack.c.h.b16 %v180
    %v1056 = vunpack.c.l.b16 %v181
    %v1057 = vunpack.c.h.b16 %v181
    %v1058 = vunpack.c.l.b16 %v182
    %v1059 = vunpack.c.h.b16 %v182
    %v1060 = vunpack.c.l.b16 %v183
    %v1061 = vunpack.c.h.b16 %v183
    %v1062 = vunpack.c.l.b16 %v184
    %v1063 = vunpack.c.h.b16 %v184
    %v1064 = vunpack.c.l.b16 %v185
    %v1065 = vunpack.c.h.b16 %v185
    %v1066 = vunpack.c.l.b16 %v186
    %v1067 = vunpack.c.h.b16 %v186
    %v1068 = vunpack.c.l.b16 %v187
    %v1069 = vunpack.c.h.b16 %v187
    %v1070 = vunpack.c.l.b16 %v188
    %v1071 = vunpack.c.h.b16 %v188
    %v1072 = vunpack.c.l.b16 %v189
    %v1073 = vunpack.c.h.b16 %v189
    %v1074 = vunpack.c.l.b16 %v190
    %v1075 = vunpack.c.h.b16 %v190
    %v1076 = vunpack.c.l.b16 %v191
    %v1077 = vunpack.c.h.b16 %v191
    %v1078 = vunpack.c.l.b16 %v192
    %v1079 = vunpack.c.h.b16 %v192
    %v1080 = vunpack.c.l.b16 %v193
    %v1081 = vunpack.c.h.b16 %v193
    %v1082 = vunpack.c.l.b16 %v194
    %v1083 = vunpack.c.h.b16 %v194
    %v1084 = vunpack.c.l.b16 %v195
    %v1085 = vunpack.c.h.b16 %v195
    %v1086 = vunpack.c.l.b16 %v196
    %v1087 = vunpack.c.h.b16 %v196
    %v1088 = vunpack.c.l.b16 %v197
    %v1089 = vunpack.c.h.b16 %v197
    %v1090 = vunpack.c.l.b16 %v198
    %v1091 = vunpack.c.h.b16 %v198
    %v1092 = vunpack.c.l.b16 %v199
    %v1093 = vunpack.c.h.b16 %v199
    %v1094 = vunpack.c.l.b16 %v200
    %v1095 = vunpack.c.h.b16 %v200
    %v1096 = vunpack.c.l.b16 %v201
    %v1097 = vunpack.c.h.b16 %v201
    %v1098 = vunpack.c.l.b16 %v202
    %v1099 = vunpack.c.h.b16 %v202
    %v1100 = vunpack.c.l.b16 %v203
    %v1101 = vunpack.c.h.b16 %v203
    %v1102 = vunpack.c.l.b16 %v204
    %v1103 = vunpack.c.h.b16 %v204
    %v1104 = vunpack.c.l.b16 %v205
    %v1105 = vunpack.c.h.b16 %v205
    %v1106 = vunpack.c.l.b16 %v206
    %v1107 = vunpack.c.h.b16 %v206
    %v1108 = vunpack.c.l.b16 %v207
    %v1109 = vunpack.c.h.b16 %v207
    %v1110 = vunpack.c.l.b16 %v208
    %v1111 = vunpack.c.h.b16 %v208
    %v1112 = vunpack.c.l.b16 %v209
    %v1113 = vunpack.c.h.b16 %v209
    %v1114 = vunpack.c.l.b16 %v210
    %v1115 = vunpack.c.h.b16 %v210
    %v1116 = vunpack.c.l.b16 %v211
    %v1117 = vunpack.c.h.b16 %v211
    %v1118 = vunpack.c.l.b16 %v212
    %v1119 = vunpack.c.h.b16 %v212
    %v1120 = vunpack.c.l.b16 %v213
    %v1121 = vunpack.c.h.b16 %v213
    %v1122 = vunpack.c.l.b16 %v214
    %v1123 = vunpack.c.h.b16 %v214
    %v1124 = vunpack.c.l.b16 %v215
    %v1125 = vunpack.c.h.b16 %v215
    %v1126 = vunpack.c.l.b16 %v216
    %v1127 = vunpack.c.h.b16 %v216
    %v1128 = vunpack.c.l.b16 %v217
    %v1129 = vunpack.c.h.b16 %v217
    %v1130 = vunpack.c.l.b16 %v218
    %v1131 = vunpack.c.h.b16 %v218
    %v1132 = vunpack.c.l.b16 %v219
    %v1133 = vunpack.c.h.b16 %v219
    %v1134 = vunpack.c.l.b16 %v220
    %v1135 = vunpack.c.h.b16 %v220
    %v1136 = vunpack.c.l.b16 %v221
    %v1137 = vunpack.c.h.b16 %v221
    %v1138 = vunpack.c.l.b16 %v222
    %v1139 = vunpack.c.h.b16 %v222
    %v1140 = vunpack.c.l.b16 %v223
    %v1141 = vunpack.c.h.b16 %v223
    %v1142 = vunpack.c.l.b16 %v224
    %v1143 = vunpack.c.h.b16 %v224
    %v1144 = vunpack.c.l.b16 %v225
    %v1145 = vunpack.c.h.b16 %v225
    %v1146 = vunpack.c.l.b16 %v226
    %v1147 = vunpack.c.h.b16 %v226
    %v1148 = vunpack.c.l.b16 %v227
    %v1149 = vunpack.c.h.b16 %v227
    %v1150 = vunpack.c.l.b16 %v228
    %v1151 = vunpack.c.h.b16 %v228
    %v1152 = vunpack.c.l.b16 %v229
    %v1153 = vunpack.c.h.b16 %v229
    %v1154 = vunpack.c.l.b16 %v230
    %v1155 = vunpack.c.h.b16 %v230
    %v1156 = vunpack.c.l.b16 %v231
    %v1157 = vunpack.c.h.b16 %v231
    %v1158 = vunpack.c.l.b16 %v232
    %v1159 = vunpack.c.h.b16 %v232
    %v1160 = vunpack.c.l.b16 %v233
    %v1161 = vunpack.c.h.b16 %v233
    %v1162 = vunpack.c.l.b16 %v234
    %v1163 = vunpack.c.h.b16 %v234
    %v1164 = vunpack.c.l.b16 %v235
    %v1165 = vunpack.c.h.b16 %v235
    %v1166 = vunpack.c.l.b16 %v236
    %v1167 = vunpack.c.h.b16 %v236
    %v1168 = vunpack.c.l.b16 %v237
    %v1169 = vunpack.c.h.b16 %v237
    %v1170 = vunpack.c.l.b16 %v238
    %v1171 = vunpack.c.h.b16 %v238
    %v1172 = vunpack.c.l.b16 %v239
    %v1173 = vunpack.c.h.b16 %v239
    %v1174 = vunpack.c.l.b16 %v240
    %v1175 = vunpack.c.h.b16 %v240
    %v1176 = vunpack.c.l.b16 %v241
    %v1177 = vunpack.c.h.b16 %v241
    %v1178 = vunpack.c.l.b16 %v242
    %v1179 = vunpack.c.h.b16 %v242
    %v1180 = vunpack.c.l.b16 %v243
    %v1181 = vunpack.c.h.b16 %v243
    %v1182 = vunpack.c.l.b16 %v244
    %v1183 = vunpack.c.h.b16 %v244
    %v1184 = vunpack.c.l.b16 %v245
    %v1185 = vunpack.c.h.b16 %v245
    %v1186 = vunpack.c.l.b16 %v246
    %v1187 = vunpack.c.h.b16 %v246
    %v1188 = vunpack.c.l.b16 %v247
    %v1189 = vunpack.c.h.b16 %v247
    %v1190 = vunpack.c.l.b16 %v248
    %v1191 = vunpack.c.h.b16 %v248
    %v1192 = vunpack.c.l.b16 %v249
    %v1193 = vunpack.c.h.b16 %v249
    %v1194 = vunpack.c.l.b16 %v250
    %v1195 = vunpack.c.h.b16 %v250
    %v1196 = vunpack.c.l.b16 %v251
    %v1197 = vunpack.c.h.b16 %v251
    %v1198 = vunpack.c.l.b16 %v252
    %v1199 = vunpack.c.h.b16 %v252
    %v1200 = vunpack.c.l.b16 %v253
    %v1201 = vunpack.c.h.b16 %v253
    %v1202 = vunpack.c.l.b16 %v254
    %v1203 = vunpack.c.h.b16 %v254
    %v1204 = vunpack.c.l.b16 %v255
    %v1205 = vunpack.c.h.b16 %v255
    %v1206 = vunpack.c.l.b16 %v256
    %v1207 = vunpack.c.h.b16 %v256
    %v1208 = vunpack.c.l.b16 %v257
    %v1209 = vunpack.c.h.b16 %v257
    %v1210 = vunpack.c.l.b16 %v258
    %v1211 = vunpack.c.h.b16 %v258
    %v1212 = vunpack.c.l.b16 %v259
    %v1213 = vunpack.c.h.b16 %v259
    %v1214 = vunpack.c.l.b16 %v260
    %v1215 = vunpack.c.h.b16 %v260
    %v1216 = vunpack.c.l.b16 %v261
    %v1217 = vunpack.c.h.b16 %v261
    %v1218 = vunpack.c.l.b16 %v262
    %v1219 = vunpack.c.h.b16 %v262
    %v1220 = vunpack.c.l.b16 %v263
    %v1221 = vunpack.c.h.b16 %v263
    %v1222 = vunpack.c.l.b16 %v264
    %v1223 = vunpack.c.h.b16 %v264
    %v1224 = vunpack.c.l.b16 %v265
    %v1225 = vunpack.c.h.b16 %v265
    %v1226 = vunpack.c.l.b16 %v266
    %v1227 = vunpack.c.h.b16 %v266
    %v1228 = vunpack.c.l.b16 %v267
    %v1229 = vunpack.c.h.b16 %v267
    %v1230 = vunpack.c.l.b16 %v268
    %v1231 = vunpack.c.h.b16 %v268
    %v1232 = vunpack.c.l.b16 %v269
    %v1233 = vunpack.c.h.b16 %v269
    %v1234 = vunpack.c.l.b16 %v270
    %v1235 = vunpack.c.h.b16 %v270
    %v1236 = vunpack.c.l.b16 %v271
    %v1237 = vunpack.c.h.b16 %v271
    %v1238 = vunpack.c.l.b16 %v272
    %v1239 = vunpack.c.h.b16 %v272
    %v1240 = vunpack.c.l.b16 %v273
    %v1241 = vunpack.c.h.b16 %v273
    %v1242 = vunpack.c.l.b16 %v274
    %v1243 = vunpack.c.h.b16 %v274
    %v1244 = vunpack.c.l.b16 %v275
    %v1245 = vunpack.c.h.b16 %v275
    %v1246 = vunpack.c.l.b16 %v276
    %v1247 = vunpack.c.h.b16 %v276
    %v1248 = vunpack.c.l.b16 %v277
    %v1249 = vunpack.c.h.b16 %v277
    %v1250 = vunpack.c.l.b16 %v278
    %v1251 = vunpack.c.h.b16 %v278
    %v1252 = vunpack.c.l.b16 %v279
    %v1253 = vunpack.c.h.b16 %v279
    %v1254 = vunpack.c.l.b16 %v280
    %v1255 = vunpack.c.h.b16 %v280
    %v1256 = vunpack.c.l.b16 %v281
    %v1257 = vunpack.c.h.b16 %v281
    %v1258 = vunpack.c.l.b16 %v282
    %v1259 = vunpack.c.h.b16 %v282
    %v1260 = vunpack.c.l.b16 %v283
    %v1261 = vunpack.c.h.b16 %v283
    %v1262 = vunpack.c.l.b16 %v284
    %v1263 = vunpack.c.h.b16 %v284
    %v1264 = vunpack.c.l.b16 %v285
    %v1265 = vunpack.c.h.b16 %v285
    %v1266 = vunpack.c.l.b16 %v286
    %v1267 = vunpack.c.h.b16 %v286
    %v1268 = vunpack.c.l.b16 %v287
    %v1269 = vunpack.c.h.b16 %v287
    %v1270 = vunpack.c.l.b16 %v288
    %v1271 = vunpack.c.h.b16 %v288
    %v1272 = vunpack.c.l.b16 %v289
    %v1273 = vunpack.c.h.b16 %v289
    %v1274 = vunpack.c.l.b16 %v290
    %v1275 = vunpack.c.h.b16 %v290
    %v1276 = vunpack.c.l.b16 %v291
    %v1277 = vunpack.c.h.b16 %v291
    %v1278 = vunpack.c.l.b16 %v292
    %v1279 = vunpack.c.h.b16 %v292
    %v1280 = vunpack.c.l.b16 %v293
    %v1281 = vunpack.c.h.b16 %v293
    %v1282 = vunpack.c.l.b16 %v294
    %v1283 = vunpack.c.h.b16 %v294
    %v1284 = vunpack.c.l.b16 %v295
    %v1285 = vunpack.c.h.b16 %v295
    %v1286 = vunpack.c.l.b16 %v296
    %v1287 = vunpack.c.h.b16 %v296
    %v1288 = vunpack.c.l.b16 %v297
    %v1289 = vunpack.c.h.b16 %v297
    %v1290 = vunpack.c.l.b16 %v298
    %v1291 = vunpack.c.h.b16 %v298
    %v1292 = vunpack.c.l.b16 %v299
    %v1293 = vunpack.c.h.b16 %v299
    %v1294 = vunpack.c.l.b16 %v300
    %v1295 = vunpack.c.h.b16 %v300
    %v1296 = vunpack.c.l.b16 %v301
    %v1297 = vunpack.c.h.b16 %v301
    %v1298 = vunpack.c.l.b16 %v302
    %v1299 = vunpack.c.h.b16 %v302
    %v1300 = vunpack.c.l.b16 %v303
    %v1301 = vunpack.c.h.b16 %v303
    %v1302 = vunpack.c.l.b16 %v304
    %v1303 = vunpack.c.h.b16 %v304
    %v1304 = vunpack.c.l.b16 %v305
    %v1305 = vunpack.c.h.b16 %v305
    %v1306 = vunpack.c.l.b16 %v306
    %v1307 = vunpack.c.h.b16 %v306
    %v1308 = vunpack.c.l.b16 %v307
    %v1309 = vunpack.c.h.b16 %v307
    %v1310 = vunpack.c.l.b16 %v308
    %v1311 = vunpack.c.h.b16 %v308
    %v1312 = vunpack.c.l.b16 %v309
    %v1313 = vunpack.c.h.b16 %v309
    %v1314 = vunpack.c.l.b16 %v310
    %v1315 = vunpack.c.h.b16 %v310
    %v1316 = vunpack.c.l.b16 %v311
    %v1317 = vunpack.c.h.b16 %v311
    %v1318 = vunpack.c.l.b16 %v312
    %v1319 = vunpack.c.h.b16 %v312
    %v1320 = vunpack.c.l.b16 %v313
    %v1321 = vunpack.c.h.b16 %v313
    %v1322 = vunpack.c.l.b16 %v314
    %v1323 = vunpack.c.h.b16 %v314
    %v1324 = vunpack.c.l.b16 %v315
    %v1325 = vunpack.c.h.b16 %v315
    %v1326 = vunpack.c.l.b16 %v316
    %v1327 = vunpack.c.h.b16 %v316
    %v1328 = vunpack.c.l.b16 %v317
    %v1329 = vunpack.c.h.b16 %v317
    %v1330 = vunpack.c.l.b16 %v318
    %v1331 = vunpack.c.h.b16 %v318
    %v1332 = vunpack.c.l.b16 %v319
    %v1333 = vunpack.c.h.b16 %v319
    %v1334 = vunpack.c.l.b16 %v320
    %v1335 = vunpack.c.h.b16 %v320
    %v1336 = vunpack.c.l.b16 %v321
    %v1337 = vunpack.c.h.b16 %v321
    %v1338 = vunpack.c.l.b16 %v322
    %v1339 = vunpack.c.h.b16 %v322
    %v1340 = vunpack.c.l.b16 %v323
    %v1341 = vunpack.c.h.b16 %v323
    %v1342 = vunpack.c.l.b16 %v324
    %v1343 = vunpack.c.h.b16 %v324
    %v1344 = vunpack.c.l.b16 %v325
    %v1345 = vunpack.c.h.b16 %v325
    %v1346 = vunpack.c.l.b16 %v326
    %v1347 = vunpack.c.h.b16 %v326
    %v1348 = vunpack.c.l.b16 %v327
    %v1349 = vunpack.c.h.b16 %v327
    %v1350 = vunpack.c.l.b16 %v328
    %v1351 = vunpack.c.h.b16 %v328
    %v1352 = vunpack.c.l.b16 %v329
    %v1353 = vunpack.c.h.b16 %v329
    %v1354 = vunpack.c.l.b16 %v330
    %v1355 = vunpack.c.h.b16 %v330
    %v1356 = vunpack.c.l.b16 %v331
    %v1357 = vunpack.c.h.b16 %v331
    %v1358 = vunpack.c.l.b16 %v332
    %v1359 = vunpack.c.h.b16 %v332
    %v1360 = vunpack.c.l.b16 %v333
    %v1361 = vunpack.c.h.b16 %v333
    %v1362 = vunpack.c.l.b16 %v334
    %v1363 = vunpack.c.h.b16 %v334
    %v1364 = vunpack.c.l.b16 %v335
    %v1365 = vunpack.c.h.b16 %v335
    %v1366 = vunpack.c.l.b16 %v336
    %v1367 = vunpack.c.h.b16 %v336
    %v1368 = vunpack.c.l.b16 %v337
    %v1369 = vunpack.c.h.b16 %v337
    %v1370 = vunpack.c.l.b16 %v338
    %v1371 = vunpack.c.h.b16 %v338
    %v1372 = vunpack.c.l.b16 %v339
    %v1373 = vunpack.c.h.b16 %v339
    %v1374 = vunpack.c.l.b16 %v340
    %v1375 = vunpack.c.h.b16 %v340
    %v1376 = vunpack.c.l.b16 %v341
    %v1377 = vunpack.c.h.b16 %v341
    %v1378 = vunpack.c.l.b16 %v342
    %v1379 = vunpack.c.h.b16 %v342
    %v1380 = vunpack.c.l.b16 %v343
    %v1381 = vunpack.c.h.b16 %v343
    %v1382 = vunpack.c.l.b16 %v344
    %v1383 = vunpack.c.h.b16 %v344
    %v1384 = vunpack.c.l.b16 %v345
    %v1385 = vunpack.c.h.b16 %v345
    %v1386 = vunpack.c.l.b16 %v346
    %v1387 = vunpack.c.h.b16 %v346
    %v1388 = vunpack.c.l.b16 %v347
    %v1389 = vunpack.c.h.b16 %v347
    %v1390 = vunpack.c.l.b16 %v348
    %v1391 = vunpack.c.h.b16 %v348
    %v1392 = vunpack.c.l.b16 %v349
    %v1393 = vunpack.c.h.b16 %v349
    %v1394 = vunpack.c.l.b16 %v350
    %v1395 = vunpack.c.h.b16 %v350
    %v1396 = vunpack.c.l.b16 %v351
    %v1397 = vunpack.c.h.b16 %v351
    %v1398 = vunpack.c.l.b16 %v352
    %v1399 = vunpack.c.h.b16 %v352
    %v1400 = vunpack.c.l.b16 %v353
    %v1401 = vunpack.c.h.b16 %v353
    %v1402 = vunpack.c.l.b16 %v354
    %v1403 = vunpack.c.h.b16 %v354
    %v1404 = vunpack.c.l.b16 %v355
    %v1405 = vunpack.c.h.b16 %v355
    %v1406 = vunpack.c.l.b16 %v356
    %v1407 = vunpack.c.h.b16 %v356
    %v1408 = vunpack.c.l.b16 %v357
    %v1409 = vunpack.c.h.b16 %v357
    %v1410 = vunpack.c.l.b16 %v358
    %v1411 = vunpack.c.h.b16 %v358
    %v1412 = vunpack.c.l.b16 %v359
    %v1413 = vunpack.c.h.b16 %v359
    %v1414 = vunpack.c.l.b16 %v360
    %v1415 = vunpack.c.h.b16 %v360
    %v1416 = vunpack.c.l.b16 %v361
    %v1417 = vunpack.c.h.b16 %v361
    %v1418 = vunpack.c.l.b16 %v362
    %v1419 = vunpack.c.h.b16 %v362
    %v1420 = vunpack.c.l.b16 %v363
    %v1421 = vunpack.c.h.b16 %v363
    %v1422 = vunpack.c.l.b16 %v364
    %v1423 = vunpack.c.h.b16 %v364
    %v1424 = vunpack.c.l.b16 %v365
    %v1425 = vunpack.c.h.b16 %v365
    %v1426 = vunpack.c.l.b16 %v366
    %v1427 = vunpack.c.h.b16 %v366
    %v1428 = vunpack.c.l.b16 %v367
    %v1429 = vunpack.c.h.b16 %v367
    %v1430 = vunpack.c.l.b16 %v368
    %v1431 = vunpack.c.h.b16 %v368
    %v1432 = vunpack.c.l.b16 %v369
    %v1433 = vunpack.c.h.b16 %v369
    %v1434 = vunpack.c.l.b16 %v370
    %v1435 = vunpack.c.h.b16 %v370
    %v1436 = vunpack.c.l.b16 %v371
    %v1437 = vunpack.c.h.b16 %v371
    %v1438 = vunpack.c.l.b16 %v372
    %v1439 = vunpack.c.h.b16 %v372
    %v1440 = vunpack.c.l.b16 %v373
    %v1441 = vunpack.c.h.b16 %v373
    %v1442 = vunpack.c.l.b16 %v374
    %v1443 = vunpack.c.h.b16 %v374
    %v1444 = vunpack.c.l.b16 %v375
    %v1445 = vunpack.c.h.b16 %v375
    %v1446 = vunpack.c.l.b16 %v376
    %v1447 = vunpack.c.h.b16 %v376
    %v1448 = vunpack.c.l.b16 %v377
    %v1449 = vunpack.c.h.b16 %v377
    %v1450 = vunpack.c.l.b16 %v378
    %v1451 = vunpack.c.h.b16 %v378
    %v1452 = vunpack.c.l.b16 %v379
    %v1453 = vunpack.c.h.b16 %v379
    %v1454 = vunpack.c.l.b16 %v380
    %v1455 = vunpack.c.h.b16 %v380
    %v1456 = vunpack.c.l.b16 %v381
    %v1457 = vunpack.c.h.b16 %v381
    %v1458 = vunpack.c.l.b16 %v382
    %v1459 = vunpack.c.h.b16 %v382
    %v1460 = vunpack.c.l.b16 %v383
    %v1461 = vunpack.c.h.b16 %v383
    %v1462 = vunpack.c.l.b16 %v384
    %v1463 = vunpack.c.h.b16 %v384
    %v1464 = vunpack.c.l.b16 %v385
    %v1465 = vunpack.c.h.b16 %v385
    %v1466 = vunpack.c.l.b16 %v386
    %v1467 = vunpack.c.h.b16 %v386
    %v1468 = vunpack.c.l.b16 %v387
    %v1469 = vunpack.c.h.b16 %v387
    %v1470 = vunpack.c.l.b16 %v388
    %v1471 = vunpack.c.h.b16 %v388
    %v1472 = vunpack.c.l.b16 %v389
    %v1473 = vunpack.c.h.b16 %v389
    %v1474 = vunpack.c.l.b16 %v390
    %v1475 = vunpack.c.h.b16 %v390
    %v1476 = vunpack.c.l.b16 %v391
    %v1477 = vunpack.c.h.b16 %v391
    %v1478 = vunpack.c.l.b16 %v392
    %v1479 = vunpack.c.h.b16 %v392
    %v1480 = vunpack.c.l.b16 %v393
    %v1481 = vunpack.c.h.b16 %v393
    %v1482 = vunpack.c.l.b16 %v394
    %v1483 = vunpack.c.h.b16 %v394
    %v1484 = vunpack.c.l.b16 %v395
    %v1485 = vunpack.c.h.b16 %v395
    %v1486 = vunpack.c.l.b16 %v396
    %v1487 = vunpack.c.h.b16 %v396
    %v1488 = vunpack.c.l.b16 %v397
    %v1489 = vunpack.c.h.b16 %v397
    %v1490 = vunpack.c.l.b16 %v398
    %v1491 = vunpack.c.h.b16 %v398
    %v1492 = vunpack.c.l.b16 %v399
    %v1493 = vunpack.c.h.b16 %v399
    %v1494 = vunpack.c.l.b16 %v400
    %v1495 = vunpack.c.h.b16 %v400
    %v1496 = vunpack.c.l.b16 %v401
    %v1497 = vunpack.c.h.b16 %v401
    %v1498 = vunpack.c.l.b16 %v402
    %v1499 = vunpack.c.h.b16 %v402
    %v1500 = vunpack.c.l.b16 %v403
    %v1501 = vunpack.c.h.b16 %v403
    %v1502 = vunpack.c.l.b16 %v404
    %v1503 = vunpack.c.h.b16 %v404
    %v1504 = vunpack.c.l.b16 %v405
    %v1505 = vunpack.c.h.b16 %v405
    %v1506 = vunpack.c.l.b16 %v406
    %v1507 = vunpack.c.h.b16 %v406
    %v1508 = vunpack.c.l.b16 %v407
    %v1509 = vunpack.c.h.b16 %v407
    %v1510 = vunpack.c.l.b16 %v408
    %v1511 = vunpack.c.h.b16 %v408
    %v1512 = vunpack.c.l.b16 %v409
    %v1513 = vunpack.c.h.b16 %v409
    %v1514 = vunpack.c.l.b16 %v410
    %v1515 = vunpack.c.h.b16 %v410
    %v1516 = vunpack.c.l.b16 %v411
    %v1517 = vunpack.c.h.b16 %v411
    %v1518 = vunpack.c.l.b16 %v412
    %v1519 = vunpack.c.h.b16 %v412
    %v1520 = vunpack.c.l.b16 %v413
    %v1521 = vunpack.c.h.b16 %v413
    %v1522 = vunpack.c.l.b16 %v414
    %v1523 = vunpack.c.h.b16 %v414
    %v1524 = vunpack.c.l.b16 %v415
    %v1525 = vunpack.c.h.b16 %v415
    %v1526 = vunpack.c.l.b16 %v416
    %v1527 = vunpack.c.h.b16 %v416
    %v1528 = vunpack.c.l.b16 %v417
    %v1529 = vunpack.c.h.b16 %v417
    %v1530 = vunpack.c.l.b16 %v418
    %v1531 = vunpack.c.h.b16 %v418
    %v1532 = vunpack.c.l.b16 %v419
    %v1533 = vunpack.c.h.b16 %v419
    %v1534 = vunpack.c.l.b16 %v420
    %v1535 = vunpack.c.h.b16 %v420
    %v1536 = vunpack.c.l.b16 %v421
    %v1537 = vunpack.c.h.b16 %v421
    %v1538 = vunpack.c.l.b16 %v422
    %v1539 = vunpack.c.h.b16 %v422
    %v1540 = vunpack.c.l.b16 %v423
    %v1541 = vunpack.c.h.b16 %v423
    %v1542 = vunpack.c.l.b16 %v424
    %v1543 = vunpack.c.h.b16 %v424
    %v1544 = vunpack.c.l.b16 %v425
    %v1545 = vunpack.c.h.b16 %v425
    %v1546 = vunpack.c.l.b16 %v426
    %v1547 = vunpack.c.h.b16 %v426
    %v1548 = vunpack.c.l.b16 %v427
    %v1549 = vunpack.c.h.b16 %v427
    %v1550 = vunpack.c.l.b16 %v428
    %v1551 = vunpack.c.h.b16 %v428
    %v1552 = vunpack.c.l.b16 %v429
    %v1553 = vunpack.c.h.b16 %v429
    %v1554 = vunpack.c.l.b16 %v430
    %v1555 = vunpack.c.h.b16 %v430
    %v1556 = vunpack.c.l.b16 %v431
    %v1557 = vunpack.c.h.b16 %v431
    %v1558 = vunpack.c.l.b16 %v432
    %v1559 = vunpack.c.h.b16 %v432
    %v1560 = vunpack.c.l.b16 %v433
    %v1561 = vunpack.c.h.b16 %v433
    %v1562 = vunpack.c.l.b16 %v434
    %v1563 = vunpack.c.h.b16 %v434
    %v1564 = vunpack.c.l.b16 %v435
    %v1565 = vunpack.c.h.b16 %v435
    %v1566 = vunpack.c.l.b16 %v436
    %v1567 = vunpack.c.h.b16 %v436
    %v1568 = vunpack.c.l.b16 %v437
    %v1569 = vunpack.c.h.b16 %v437
    %v1570 = vunpack.c.l.b16 %v438
    %v1571 = vunpack.c.h.b16 %v438
    %v1572 = vunpack.c.l.b16 %v439
    %v1573 = vunpack.c.h.b16 %v439
    %v1574 = vunpack.c.l.b16 %v440
    %v1575 = vunpack.c.h.b16 %v440
    %v1576 = vunpack.c.l.b16 %v441
    %v1577 = vunpack.c.h.b16 %v441
    %v1578 = vunpack.c.l.b16 %v442
    %v1579 = vunpack.c.h.b16 %v442
    %v1580 = vunpack.c.l.b16 %v443
    %v1581 = vunpack.c.h.b16 %v443
    %v1582 = vunpack.c.l.b16 %v444
    %v1583 = vunpack.c.h.b16 %v444
    %v1584 = vunpack.c.l.b16 %v445
    %v1585 = vunpack.c.h.b16 %v445
    %v1586 = vunpack.c.l.b16 %v446
    %v1587 = vunpack.c.h.b16 %v446
    %v1588 = vunpack.c.l.b16 %v447
    %v1589 = vunpack.c.h.b16 %v447
    %v1590 = vunpack.c.l.b16 %v448
    %v1591 = vunpack.c.h.b16 %v448
    %v1592 = vunpack.c.l.b16 %v449
    %v1593 = vunpack.c.h.b16 %v449
    %v1594 = vunpack.c.l.b16 %v450
    %v1595 = vunpack.c.h.b16 %v450
    %v1596 = vunpack.c.l.b16 %v451
    %v1597 = vunpack.c.h.b16 %v451
    %v1598 = vunpack.c.l.b16 %v452
    %v1599 = vunpack.c.h.b16 %v452
    %v1600 = vunpack.c.l.b16 %v453
    %v1601 = vunpack.c.h.b16 %v453
    %v1602 = vunpack.c.l.b16 %v454
    %v1603 = vunpack.c.h.b16 %v454
    %v1604 = vunpack.c.l.b16 %v455
    %v1605 = vunpack.c.h.b16 %v455
    %v1606 = vunpack.c.l.b16 %v456
    %v1607 = vunpack.c.h.b16 %v456
    %v1608 = vunpack.c.l.b16 %v457
    %v1609 = vunpack.c.h.b16 %v457
    %v1610 = vunpack.c.l.b16 %v458
    %v1611 = vunpack.c.h.b16 %v458
    %v1612 = vunpack.c.l.b16 %v459
    %v1613 = vunpack.c.h.b16 %v459
    %v1614 = vunpack.c.l.b16 %v460
    %v1615 = vunpack.c.h.b16 %v460
    %v1616 = vunpack.c.l.b16 %v461
    %v1617 = vunpack.c.h.b16 %v461
    %v1618 = vunpack.c.l.b16 %v462
    %v1619 = vunpack.c.h.b16 %v462
    %v1620 = vunpack.c.l.b16 %v463
    %v1621 = vunpack.c.h.b16 %v463
    %v1622 = vunpack.c.l.b16 %v464
    %v1623 = vunpack.c.h.b16 %v464
    %v1624 = vunpack.c.l.b16 %v465
    %v1625 = vunpack.c.h.b16 %v465
    %v1626 = vunpack.c.l.b16 %v466
    %v1627 = vunpack.c.h.b16 %v466
    %v1628 = vunpack.c.l.b16 %v467
    %v1629 = vunpack.c.h.b16 %v467
    %v1630 = vunpack.c.l.b16 %v468
    %v1631 = vunpack.c.h.b16 %v468
    %v1632 = vunpack.c.l.b16 %v469
    %v1633 = vunpack.c.h.b16 %v469
    %v1634 = vunpack.c.l.b16 %v470
    %v1635 = vunpack.c.h.b16 %v470
    %v1636 = vunpack.c.l.b16 %v471
    %v1637 = vunpack.c.h.b16 %v471
    %v1638 = vunpack.c.l.b16 %v472
    %v1639 = vunpack.c.h.b16 %v472
    %v1640 = vunpack.c.l.b16 %v473
    %v1641 = vunpack.c.h.b16 %v473
    %v1642 = vunpack.c.l.b16 %v474
    %v1643 = vunpack.c.h.b16 %v474
    %v1644 = vunpack.c.l.b16 %v475
    %v1645 = vunpack.c.h.b16 %v475
    %v1646 = vunpack.c.l.b16 %v476
    %v1647 = vunpack.c.h.b16 %v476
    %v1648 = vunpack.c.l.b16 %v477
    %v1649 = vunpack.c.h.b16 %v477
    %v1650 = vunpack.c.l.b16 %v478
    %v1651 = vunpack.c.h.b16 %v478
    %v1652 = vunpack.c.l.b16 %v479
    %v1653 = vunpack.c.h.b16 %v479
    %v1654 = vunpack.c.l.b16 %v480
    %v1655 = vunpack.c.h.b16 %v480
    %v1656 = vunpack.c.l.b16 %v481
    %v1657 = vunpack.c.h.b16 %v481
    %v1658 = vunpack.c.l.b16 %v482
    %v1659 = vunpack.c.h.b16 %v482
    %v1660 = vunpack.c.l.b16 %v483
    %v1661 = vunpack.c.h.b16 %v483
    %v1662 = vunpack.c.l.b16 %v484
    %v1663 = vunpack.c.h.b16 %v484
    %v1664 = vunpack.c.l.b16 %v485
    %v1665 = vunpack.c.h.b16 %v485
    %v1666 = vunpack.c.l.b16 %v486
    %v1667 = vunpack.c.h.b16 %v486
    %v1668 = vunpack.c.l.b16 %v487
    %v1669 = vunpack.c.h.b16 %v487
    %v1670 = vunpack.c.l.b16 %v488
    %v1671 = vunpack.c.h.b16 %v488
    %v1672 = vunpack.c.l.b16 %v489
    %v1673 = vunpack.c.h.b16 %v489
    %v1674 = vunpack.c.l.b16 %v490
    %v1675 = vunpack.c.h.b16 %v490
    %v1676 = vunpack.c.l.b16 %v491
    %v1677 = vunpack.c.h.b16 %v491
    %v1678 = vunpack.c.l.b16 %v492
    %v1679 = vunpack.c.h.b16 %v492
    %v1680 = vunpack.c.l.b16 %v493
    %v1681 = vunpack.c.h.b16 %v493
    %v1682 = vunpack.c.l.b16 %v494
    %v1683 = vunpack.c.h.b16 %v494
    %v1684 = vunpack.c.l.b16 %v495
    %v1685 = vunpack.c.h.b16 %v495
    %v1686 = vunpack.c.l.b16 %v496
    %v1687 = vunpack.c.h.b16 %v496
    %v1688 = vunpack.c.l.b16 %v497
    %v1689 = vunpack.c.h.b16 %v497
    %v1690 = vunpack.c.l.b16 %v498
    %v1691 = vunpack.c.h.b16 %v498
    %v1692 = vunpack.c.l.b16 %v499
    %v1693 = vunpack.c.h.b16 %v499
    %v1694 = vpack.c.b16 %v918, %v910
    %v1695 = vpack.c.b16 %v919, %v911
    %v1696 = vpack.c.b16 %v920, %v912
    %v1697 = vpack.c.b16 %v921, %v913
    %v1698 = vpack.c.b16 %v922, %v914
    %v1699 = vpack.c.b16 %v923, %v915
    %v1700 = vpack.c.b16 %v924, %v916
    %v1701 = vpack.c.b16 %v925, %v917
    %v1702 = vpack.c.b16 %v934, %v926
    %v1703 = vpack.c.b16 %v935, %v927
    %v1704 = vpack.c.b16 %v936, %v928
    %v1705 = vpack.c.b16 %v937, %v929
    %v1706 = vpack.c.b16 %v938, %v930
    %v1707 = vpack.c.b16 %v939, %v931
    %v1708 = vpack.c.b16 %v940, %v932
    %v1709 = vpack.c.b16 %v941, %v933
    %v1710 = vpack.c.b16 %v950, %v942
    %v1711 = vpack.c.b16 %v951, %v943
    %v1712 = vpack.c.b16 %v952, %v944
    %v1713 = vpack.c.b16 %v953, %v945
    %v1714 = vpack.c.b16 %v954, %v946
    %v1715 = vpack.c.b16 %v955, %v947
    %v1716 = vpack.c.b16 %v956, %v948
    %v1717 = vpack.c.b16 %v957, %v949
    %v1718 = vpack.c.b16 %v966, %v958
    %v1719 = vpack.c.b16 %v967, %v959
    %v1720 = vpack.c.b16 %v968, %v960
    %v1721 = vpack.c.b16 %v969, %v961
    %v1722 = vpack.c.b16 %v970, %v962
    %v1723 = vpack.c.b16 %v971, %v963
    %v1724 = vpack.c.b16 %v972, %v964
    %v1725 = vpack.c.b16 %v973, %v965
    %v1726 = vpack.c.b16 %v982, %v974
    %v1727 = vpack.c.b16 %v983, %v975
    %v1728 = vpack.c.b16 %v984, %v976
    %v1729 = vpack.c.b16 %v985, %v977
    %v1730 = vpack.c.b16 %v986, %v978
    %v1731 = vpack.c.b16 %v987, %v979
    %v1732 = vpack.c.b16 %v988, %v980
    %v1733 = vpack.c.b16 %v989, %v981
    %v1734 = vpack.c.b16 %v998, %v990
    %v1735 = vpack.c.b16 %v999, %v991
    %v1736 = vpack.c.b16 %v1000, %v992
    %v1737 = vpack.c.b16 %v1001, %v993
    %v1738 = vpack.c.b16 %v1002, %v994
    %v1739 = vpack.c.b16 %v1003, %v995
    %v1740 = vpack.c.b16 %v1004, %v996
    %v1741 = vpack.c.b16 %v1005, %v997
    %v1742 = vpack.c.b16 %v1014, %v1006
    %v1743 = vpack.c.b16 %v1015, %v1007
    %v1744 = vpack.c.b16 %v1016, %v1008
    %v1745 = vpack.c.b16 %v1017, %v1009
    %v1746 = vpack.c.b16 %v1018, %v1010
    %v1747 = vpack.c.b16 %v1019, %v1011
    %v1748 = vpack.c.b16 %v1020, %v1012
    %v1749 = vpack.c.b16 %v1021, %v1013
    %v1750 = vpack.c.b16 %v1030, %v1022
    %v1751 = vpack.c.b16 %v1031, %v1023
    %v1752 = vpack.c.b16 %v1032, %v1024
    %v1753 = vpack.c.b16 %v1033, %v1025
    %v1754 = vpack.c.b16 %v1034, %v1026
    %v1755 = vpack.c.b16 %v1035, %v1027
    %v1756 = vpack.c.b16 %v1036, %v1028
    %v1757 = vpack.c.b16 %v1037, %v1029
    %v1758 = vpack.c.b16 %v1046, %v1038
    %v1759 = vpack.c.b16 %v1047, %v1039
    %v1760 = vpack.c.b16 %v1048, %v1040
    %v1761 = vpack.c.b16 %v1049, %v1041
    %v1762 = vpack.c.b16 %v1050, %v1042
    %v1763 = vpack.c.b16 %v1051, %v1043
    %v1764 = vpack.c.b16 %v1052, %v1044
    %v1765 = vpack.c.b16 %v1053, %v1045
    %v1766 = vpack.c.b16 %v1062, %v1054
    %v1767 = vpack.c.b16 %v1063, %v1055
    %v1768 = vpack.c.b16 %v1064, %v1056
    %v1769 = vpack.c.b16 %v1065, %v1057
    %v1770 = vpack.c.b16 %v1066, %v1058
    %v1771 = vpack.c.b16 %v1067, %v1059
    %v1772 = vpack.c.b16 %v1068, %v1060
    %v1773 = vpack.c.b16 %v1069, %v1061
    %v1774 = vpack.c.b16 %v1078, %v1070
    %v1775 = vpack.c.b16 %v1079, %v1071
    %v1776 = vpack.c.b16 %v1080, %v1072
    %v1777 = vpack.c.b16 %v1081, %v1073
    %v1778 = vpack.c.b16 %v1082, %v1074
    %v1779 = vpack.c.b16 %v1083, %v1075
    %v1780 = vpack.c.b16 %v1084, %v1076
    %v1781 = vpack.c.b16 %v1085, %v1077
    %v1782 = vpack.c.b16 %v1094, %v1086
    %v1783 = vpack.c.b16 %v1095, %v1087
    %v1784 = vpack.c.b16 %v1096, %v1088
    %v1785 = vpack.c.b16 %v1097, %v1089
    %v1786 = vpack.c.b16 %v1098, %v1090
    %v1787 = vpack.c.b16 %v1099, %v1091
    %v1788 = vpack.c.b16 %v1100, %v1092
    %v1789 = vpack.c.b16 %v1101, %v1093
    %v1790 = vpack.c.b16 %v1110, %v1102
    %v1791 = vpack.c.b16 %v1111, %v1103
    %v1792 = vpack.c.b16 %v1112, %v1104
    %v1793 = vpack.c.b16 %v1113, %v1105
    %v1794 = vpack.c.b16 %v1114, %v1106
    %v1795 = vpack.c.b16 %v1115, %v1107
    %v1796 = vpack.c.b16 %v1116, %v1108
    %v1797 = vpack.c.b16 %v1117, %v1109
    %v1798 = vpack.c.b16 %v1126, %v1118
    %v1799 = vpack.c.b16 %v1127, %v1119
    %v1800 = vpack.c.b16 %v1128, %v1120
    %v1801 = vpack.c.b16 %v1129, %v1121
    %v1802 = vpack.c.b16 %v1130, %v1122
    %v1803 = vpack.c.b16 %v1131, %v1123
    %v1804 = vpack.c.b16 %v1132, %v1124
    %v1805 = vpack.c.b16 %v1133, %v1125
    %v1806 = vpack.c.b16 %v1142, %v1134
    %v1807 = vpack.c.b16 %v1143, %v1135
    %v1808 = vpack.c.b16 %v1144, %v1136
    %v1809 = vpack.c.b16 %v1145, %v1137
    %v1810 = vpack.c.b16 %v1146, %v1138
    %v1811 = vpack.c.b16 %v1147, %v1139
    %v1812 = vpack.c.b16 %v1148, %v1140
    %v1813 = vpack.c.b16 %v1149, %v1141
    %v1814 = vpack.c.b16 %v1158, %v1150
    %v1815 = vpack.c.b16 %v1159, %v1151
    %v1816 = vpack.c.b16 %v1160, %v1152
    %v1817 = vpack.c.b16 %v1161, %v1153
    %v1818 = vpack.c.b16 %v1162, %v1154
    %v1819 = vpack.c.b16 %v1163, %v1155
    %v1820 = vpack.c.b16 %v1164, %v1156
    %v1821 = vpack.c.b16 %v1165, %v1157
    %v1822 = vpack.c.b16 %v1174, %v1166
    %v1823 = vpack.c.b16 %v1175, %v1167
    %v1824 = vpack.c.b16 %v1176, %v1168
    %v1825 = vpack.c.b16 %v1177, %v1169
    %v1826 = vpack.c.b16 %v1178, %v1170
    %v1827 = vpack.c.b16 %v1179, %v1171
    %v1828 = vpack.c.b16 %v1180, %v1172
    %v1829 = vpack.c.b16 %v1181, %v1173
    %v1830 = vpack.c.b16 %v1190, %v1182
    %v1831 = vpack.c.b16 %v1191, %v1183
    %v1832 = vpack.c.b16 %v1192, %v1184
    %v1833 = vpack.c.b16 %v1193, %v1185
    %v1834 = vpack.c.b16 %v1194, %v1186
    %v1835 = vpack.c.b16 %v1195, %v1187
    %v1836 = vpack.c.b16 %v1196, %v1188
    %v1837 = vpack.c.b16 %v1197, %v1189
    %v1838 = vpack.c.b16 %v1206, %v1198
    %v1839 = vpack.c.b16 %v1207, %v1199
    %v1840 = vpack.c.b16 %v1208, %v1200
    %v1841 = vpack.c.b16 %v1209, %v1201
    %v1842 = vpack.c.b16 %v1210, %v1202
    %v1843 = vpack.c.b16 %v1211, %v1203
    %v1844 = vpack.c.b16 %v1212, %v1204
    %v1845 = vpack.c.b16 %v1213, %v1205
    %v1846 = vpack.c.b16 %v1222, %v1214
    %v1847 = vpack.c.b16 %v1223, %v1215
    %v1848 = vpack.c.b16 %v1224, %v1216
    %v1849 = vpack.c.b16 %v1225, %v1217
    %v1850 = vpack.c.b16 %v1226, %v1218
    %v1851 = vpack.c.b16 %v1227, %v1219
    %v1852 = vpack.c.b16 %v1228, %v1220
    %v1853 = vpack.c.b16 %v1229, %v1221
    %v1854 = vpack.c.b16 %v1238, %v1230
    %v1855 = vpack.c.b16 %v1239, %v1231
    %v1856 = vpack.c.b16 %v1240, %v1232
    %v1857 = vpack.c.b16 %v1241, %v1233
    %v1858 = vpack.c.b16 %v1242, %v1234
    %v1859 = vpack.c.b16 %v1243, %v1235
    %v1860 = vpack.c.b16 %v1244, %v1236
    %v1861 = vpack.c.b16 %v1245, %v1237
    %v1862 = vpack.c.b16 %v1254, %v1246
    %v1863 = vpack.c.b16 %v1255, %v1247
    %v1864 = vpack.c.b16 %v1256, %v1248
    %v1865 = vpack.c.b16 %v1257, %v1249
    %v1866 = vpack.c.b16 %v1258, %v1250
    %v1867 = vpack.c.b16 %v1259, %v1251
    %v1868 = vpack.c.b16 %v1260, %v1252
    %v1869 = vpack.c.b16 %v1261, %v1253
    %v1870 = vpack.c.b16 %v1270, %v1262
    %v1871 = vpack.c.b16 %v1271, %v1263
    %v1872 = vpack.c.b16 %v1272, %v1264
    %v1873 = vpack.c.b16 %v1273, %v1265
    %v1874 = vpack.c.b16 %v1274, %v1266
    %v1875 = vpack.c.b16 %v1275, %v1267
    %v1876 = vpack.c.b16 %v1276, %v1268
    %v1877 = vpack.c.b16 %v1277, %v1269
    %v1878 = vpack.c.b16 %v1286, %v1278
    %v1879 = vpack.c.b16 %v1287, %v1279
    %v1880 = vpack.c.b16 %v1288, %v1280
    %v1881 = vpack.c.b16 %v1289, %v1281
    %v1882 = vpack.c.b16 %v1290, %v1282
    %v1883 = vpack.c.b16 %v1291, %v1283
    %v1884 = vpack.c.b16 %v1292, %v1284
    %v1885 = vpack.c.b16 %v1293, %v1285
    %v1886 = vpack.c.b16 %v1302, %v1294
    %v1887 = vpack.c.b16 %v1303, %v1295
    %v1888 = vpack.c.b16 %v1304, %v1296
    %v1889 = vpack.c.b16 %v1305, %v1297
    %v1890 = vpack.c.b16 %v1306, %v1298
    %v1891 = vpack.c.b16 %v1307, %v1299
    %v1892 = vpack.c.b16 %v1308, %v1300
    %v1893 = vpack.c.b16 %v1309, %v1301
    %v1894 = vpack.c.b16 %v1318, %v1310
    %v1895 = vpack.c.b16 %v1319, %v1311
    %v1896 = vpack.c.b16 %v1320, %v1312
    %v1897 = vpack.c.b16 %v1321, %v1313
    %v1898 = vpack.c.b16 %v1322, %v1314
    %v1899 = vpack.c.b16 %v1323, %v1315
    %v1900 = vpack.c.b16 %v1324, %v1316
    %v1901 = vpack.c.b16 %v1325, %v1317
    %v1902 = vpack.c.b16 %v1334, %v1326
    %v1903 = vpack.c.b16 %v1335, %v1327
    %v1904 = vpack.c.b16 %v1336, %v1328
    %v1905 = vpack.c.b16 %v1337, %v1329
    %v1906 = vpack.c.b16 %v1338, %v1330
    %v1907 = vpack.c.b16 %v1339, %v1331
    %v1908 = vpack.c.b16 %v1340, %v1332
    %v1909 = vpack.c.b16 %v1341, %v1333
    %v1910 = vpack.c.b16 %v1350, %v1342
    %v1911 = vpack.c.b16 %v1351, %v1343
    %v1912 = vpack.c.b16 %v1352, %v1344
    %v1913 = vpack.c.b16 %v1353, %v1345
    %v1914 = vpack.c.b16 %v1354, %v1346
    %v1915 = vpack.c.b16 %v1355, %v1347
    %v1916 = vpack.c.b16 %v1356, %v1348
    %v1917 = vpack.c.b16 %v1357, %v1349
    %v1918 = vpack.c.b16 %v1366, %v1358
    %v1919 = vpack.c.b16 %v1367, %v1359
    %v1920 = vpack.c.b16 %v1368, %v1360
    %v1921 = vpack.c.b16 %v1369, %v1361
    %v1922 = vpack.c.b16 %v1370, %v1362
    %v1923 = vpack.c.b16 %v1371, %v1363
    %v1924 = vpack.c.b16 %v1372, %v1364
    %v1925 = vpack.c.b16 %v1373, %v1365
    %v1926 = vpack.c.b16 %v1382, %v1374
    %v1927 = vpack.c.b16 %v1383, %v1375
    %v1928 = vpack.c.b16 %v1384, %v1376
    %v1929 = vpack.c.b16 %v1385, %v1377
    %v1930 = vpack.c.b16 %v1386, %v1378
    %v1931 = vpack.c.b16 %v1387, %v1379
    %v1932 = vpack.c.b16 %v1388, %v1380
    %v1933 = vpack.c.b16 %v1389, %v1381
    %v1934 = vpack.c.b16 %v1398, %v1390
    %v1935 = vpack.c.b16 %v1399, %v1391
    %v1936 = vpack.c.b16 %v1400, %v1392
    %v1937 = vpack.c.b16 %v1401, %v1393
    %v1938 = vpack.c.b16 %v1402, %v1394
    %v1939 = vpack.c.b16 %v1403, %v1395
    %v1940 = vpack.c.b16 %v1404, %v1396
    %v1941 = vpack.c.b16 %v1405, %v1397
    %v1942 = vpack.c.b16 %v1414, %v1406
    %v1943 = vpack.c.b16 %v1415, %v1407
    %v1944 = vpack.c.b16 %v1416, %v1408
    %v1945 = vpack.c.b16 %v1417, %v1409
    %v1946 = vpack.c.b16 %v1418, %v1410
    %v1947 = vpack.c.b16 %v1419, %v1411
    %v1948 = vpack.c.b16 %v1420, %v1412
    %v1949 = vpack.c.b16 %v1421, %v1413
    %v1950 = vpack.c.b16 %v1430, %v1422
    %v1951 = vpack.c.b16 %v1431, %v1423
    %v1952 = vpack.c.b16 %v1432, %v1424
    %v1953 = vpack.c.b16 %v1433, %v1425
    %v1954 = vpack.c.b16 %v1434, %v1426
    %v1955 = vpack.c.b16 %v1435, %v1427
    %v1956 = vpack.c.b16 %v1436, %v1428
    %v1957 = vpack.c.b16 %v1437, %v1429
    %v1958 = vpack.c.b16 %v1446, %v1438
    %v1959 = vpack.c.b16 %v1447, %v1439
    %v1960 = vpack.c.b16 %v1448, %v1440
    %v1961 = vpack.c.b16 %v1449, %v1441
    %v1962 = vpack.c.b16 %v1450, %v1442
    %v1963 = vpack.c.b16 %v1451, %v1443
    %v1964 = vpack.c.b16 %v1452, %v1444
    %v1965 = vpack.c.b16 %v1453, %v1445
    %v1966 = vpack.c.b16 %v1462, %v1454
    %v1967 = vpack.c.b16 %v1463, %v1455
    %v1968 = vpack.c.b16 %v1464, %v1456
    %v1969 = vpack.c.b16 %v1465, %v1457
    %v1970 = vpack.c.b16 %v1466, %v1458
    %v1971 = vpack.c.b16 %v1467, %v1459
    %v1972 = vpack.c.b16 %v1468, %v1460
    %v1973 = vpack.c.b16 %v1469, %v1461
    %v1974 = vpack.c.b16 %v1478, %v1470
    %v1975 = vpack.c.b16 %v1479, %v1471
    %v1976 = vpack.c.b16 %v1480, %v1472
    %v1977 = vpack.c.b16 %v1481, %v1473
    %v1978 = vpack.c.b16 %v1482, %v1474
    %v1979 = vpack.c.b16 %v1483, %v1475
    %v1980 = vpack.c.b16 %v1484, %v1476
    %v1981 = vpack.c.b16 %v1485, %v1477
    %v1982 = vpack.c.b16 %v1494, %v1486
    %v1983 = vpack.c.b16 %v1495, %v1487
    %v1984 = vpack.c.b16 %v1496, %v1488
    %v1985 = vpack.c.b16 %v1497, %v1489
    %v1986 = vpack.c.b16 %v1498, %v1490
    %v1987 = vpack.c.b16 %v1499, %v1491
    %v1988 = vpack.c.b16 %v1500, %v1492
    %v1989 = vpack.c.b16 %v1501, %v1493
    %v1990 = vpack.c.b16 %v1510, %v1502
    %v1991 = vpack.c.b16 %v1511, %v1503
    %v1992 = vpack.c.b16 %v1512, %v1504
    %v1993 = vpack.c.b16 %v1513, %v1505
    %v1994 = vpack.c.b16 %v1514, %v1506
    %v1995 = vpack.c.b16 %v1515, %v1507
    %v1996 = vpack.c.b16 %v1516, %v1508
    %v1997 = vpack.c.b16 %v1517, %v1509
    %v1998 = vpack.c.b16 %v1526, %v1518
    %v1999 = vpack.c.b16 %v1527, %v1519
    %v2000 = vpack.c.b16 %v1528, %v1520
    %v2001 = vpack.c.b16 %v1529, %v1521
    %v2002 = vpack.c.b16 %v1530, %v1522
    %v2003 = vpack.c.b16 %v1531, %v1523
    %v2004 = vpack.c.b16 %v1532, %v1524
    %v2005 = vpack.c.b16 %v1533, %v1525
    %v2006 = vpack.c.b16 %v1542, %v1534
    %v2007 = vpack.c.b16 %v1543, %v1535
    %v2008 = vpack.c.b16 %v1544, %v1536
    %v2009 = vpack.c.b16 %v1545, %v1537
    %v2010 = vpack.c.b16 %v1546, %v1538
    %v2011 = vpack.c.b16 %v1547, %v1539
    %v2012 = vpack.c.b16 %v1548, %v1540
    %v2013 = vpack.c.b16 %v1549, %v1541
    %v2014 = vpack.c.b16 %v1558, %v1550
    %v2015 = vpack.c.b16 %v1559, %v1551
    %v2016 = vpack.c.b16 %v1560, %v1552
    %v2017 = vpack.c.b16 %v1561, %v1553
    %v2018 = vpack.c.b16 %v1562, %v1554
    %v2019 = vpack.c.b16 %v1563, %v1555
    %v2020 = vpack.c.b16 %v1564, %v1556
    %v2021 = vpack.c.b16 %v1565, %v1557
    %v2022 = vpack.c.b16 %v1574, %v1566
    %v2023 = vpack.c.b16 %v1575, %v1567
    %v2024 = vpack.c.b16 %v1576, %v1568
    %v2025 = vpack.c.b16 %v1577, %v1569
    %v2026 = vpack.c.b16 %v1578, %v1570
    %v2027 = vpack.c.b16 %v1579, %v1571
    %v2028 = vpack.c.b16 %v1580, %v1572
    %v2029 = vpack.c.b16 %v1581, %v1573
    %v2030 = vpack.c.b16 %v1590, %v1582
    %v2031 = vpack.c.b16 %v1591, %v1583
    %v2032 = vpack.c.b16 %v1592, %v1584
    %v2033 = vpack.c.b16 %v1593, %v1585
    %v2034 = vpack.c.b16 %v1594, %v1586
    %v2035 = vpack.c.b16 %v1595, %v1587
    %v2036 = vpack.c.b16 %v1596, %v1588
    %v2037 = vpack.c.b16 %v1597, %v1589
    %v2038 = vpack.c.b16 %v1606, %v1598
    %v2039 = vpack.c.b16 %v1607, %v1599
    %v2040 = vpack.c.b16 %v1608, %v1600
    %v2041 = vpack.c.b16 %v1609, %v1601
    %v2042 = vpack.c.b16 %v1610, %v1602
    %v2043 = vpack.c.b16 %v1611, %v1603
    %v2044 = vpack.c.b16 %v1612, %v1604
    %v2045 = vpack.c.b16 %v1613, %v1605
    %v2046 = vpack.c.b16 %v1622, %v1614
    %v2047 = vpack.c.b16 %v1623, %v1615
    %v2048 = vpack.c.b16 %v1624, %v1616
    %v2049 = vpack.c.b16 %v1625, %v1617
    %v2050 = vpack.c.b16 %v1626, %v1618
    %v2051 = vpack.c.b16 %v1627, %v1619
    %v2052 = vpack.c.b16 %v1628, %v1620
    %v2053 = vpack.c.b16 %v1629, %v1621
    %v2054 = vpack.c.b16 %v1638, %v1630
    %v2055 = vpack.c.b16 %v1639, %v1631
    %v2056 = vpack.c.b16 %v1640, %v1632
    %v2057 = vpack.c.b16 %v1641, %v1633
    %v2058 = vpack.c.b16 %v1642, %v1634
    %v2059 = vpack.c.b16 %v1643, %v1635
    %v2060 = vpack.c.b16 %v1644, %v1636
    %v2061 = vpack.c.b16 %v1645, %v1637
    %v2062 = vpack.c.b16 %v1654, %v1646
    %v2063 = vpack.c.b16 %v1655, %v1647
    %v2064 = vpack.c.b16 %v1656, %v1648
    %v2065 = vpack.c.b16 %v1657, %v1649
    %v2066 = vpack.c.b16 %v1658, %v1650
    %v2067 = vpack.c.b16 %v1659, %v1651
    %v2068 = vpack.c.b16 %v1660, %v1652
    %v2069 = vpack.c.b16 %v1661, %v1653
    %v2070 = vpack.c.b16 %v1670, %v1662
    %v2071 = vpack.c.b16 %v1671, %v1663
    %v2072 = vpack.c.b16 %v1672, %v1664
    %v2073 = vpack.c.b16 %v1673, %v1665
    %v2074 = vpack.c.b16 %v1674, %v1666
    %v2075 = vpack.c.b16 %v1675, %v1667
    %v2076 = vpack.c.b16 %v1676, %v1668
    %v2077 = vpack.c.b16 %v1677, %v1669
    %v2078 = vpack.c.b16 %v1686, %v1678
    %v2079 = vpack.c.b16 %v1687, %v1679
    %v2080 = vpack.c.b16 %v1688, %v1680
    %v2081 = vpack.c.b16 %v1689, %v1681
    %v2082 = vpack.c.b16 %v1690, %v1682
    %v2083 = vpack.c.b16 %v1691, %v1683
    %v2084 = vpack.c.b16 %v1692, %v1684
    %v2085 = vpack.c.b16 %v1693, %v1685
    %vm2478 = vcmask 130048
    %v2480 = vsel %vm2478, %v107, 0
    %2482 = vmatpush.bf16.msra.mxu0 %v1750
    %2483 = vmatpush.bf16.msra.mxu0 %v1742
    %2484 = vmatpush.bf16.msra.mxu0 %v1734
    %2485 = vmatpush.bf16.msra.mxu0 %v1726
    %2486 = vmatpush.bf16.msra.mxu0 %v1718
    %2487 = vmatpush.bf16.msra.mxu0 %v1710
    %2488 = vmatpush.bf16.msra.mxu0 %v1702
    %2489 = vmatpush.bf16.msra.mxu0 %v1694
    %2490 = vmatmul.bf16.gmra.mxu0 %v101
    %v2491 = vpop.f32.mrf.mxu0
    %v2492 = vadd.f32 %v502, %v2491
    %v2493 = vpop.f32.mrf.mxu0
    %2494 = vdwg.mxu0
    %2495 = vmatpush.bf16.msra.mxu0 %v1814
    %2496 = vmatpush.bf16.msra.mxu0 %v1806
    %2497 = vmatpush.bf16.msra.mxu0 %v1798
    %2498 = vmatpush.bf16.msra.mxu0 %v1790
    %2499 = vmatpush.bf16.msra.mxu0 %v1782
    %2500 = vmatpush.bf16.msra.mxu0 %v1774
    %2501 = vmatpush.bf16.msra.mxu0 %v1766
    %2502 = vmatpush.bf16.msra.mxu0 %v1758
    %2503 = vmatmul.bf16.gmra.mxu0 %v102
    %v2504 = vpop.f32.mrf.mxu0
    %v2505 = vadd.f32 %v2492, %v2504
    %v2506 = vpop.f32.mrf.mxu0
    %2507 = vdwg.mxu0
    %2508 = vmatpush.bf16.msra.mxu0 %v1878
    %2509 = vmatpush.bf16.msra.mxu0 %v1870
    %2510 = vmatpush.bf16.msra.mxu0 %v1862
    %2511 = vmatpush.bf16.msra.mxu0 %v1854
    %2512 = vmatpush.bf16.msra.mxu0 %v1846
    %2513 = vmatpush.bf16.msra.mxu0 %v1838
    %2514 = vmatpush.bf16.msra.mxu0 %v1830
    %2515 = vmatpush.bf16.msra.mxu0 %v1822
    %2516 = vmatmul.bf16.gmra.mxu0 %v103
    %v2517 = vpop.f32.mrf.mxu0
    %v2518 = vadd.f32 %v2505, %v2517
    %v2519 = vpop.f32.mrf.mxu0
    %2520 = vdwg.mxu0
    %2521 = vmatpush.bf16.msra.mxu0 %v1942
    %2522 = vmatpush.bf16.msra.mxu0 %v1934
    %2523 = vmatpush.bf16.msra.mxu0 %v1926
    %2524 = vmatpush.bf16.msra.mxu0 %v1918
    %2525 = vmatpush.bf16.msra.mxu0 %v1910
    %2526 = vmatpush.bf16.msra.mxu0 %v1902
    %2527 = vmatpush.bf16.msra.mxu0 %v1894
    %2528 = vmatpush.bf16.msra.mxu0 %v1886
    %2529 = vmatmul.bf16.gmra.mxu0 %v104
    %v2530 = vpop.f32.mrf.mxu0
    %v2531 = vadd.f32 %v2518, %v2530
    %v2532 = vpop.f32.mrf.mxu0
    %2533 = vdwg.mxu0
    %2534 = vmatpush.bf16.msra.mxu0 %v2006
    %2535 = vmatpush.bf16.msra.mxu0 %v1998
    %2536 = vmatpush.bf16.msra.mxu0 %v1990
    %2537 = vmatpush.bf16.msra.mxu0 %v1982
    %2538 = vmatpush.bf16.msra.mxu0 %v1974
    %2539 = vmatpush.bf16.msra.mxu0 %v1966
    %2540 = vmatpush.bf16.msra.mxu0 %v1958
    %2541 = vmatpush.bf16.msra.mxu0 %v1950
    %2542 = vmatmul.bf16.gmra.mxu0 %v105
    %v2543 = vpop.f32.mrf.mxu0
    %v2544 = vadd.f32 %v2531, %v2543
    %v2545 = vpop.f32.mrf.mxu0
    %2546 = vdwg.mxu0
    %2547 = vmatpush.bf16.msra.mxu0 %v2070
    %2548 = vmatpush.bf16.msra.mxu0 %v2062
    %2549 = vmatpush.bf16.msra.mxu0 %v2054
    %2550 = vmatpush.bf16.msra.mxu0 %v2046
    %2551 = vmatpush.bf16.msra.mxu0 %v2038
    %2552 = vmatpush.bf16.msra.mxu0 %v2030
    %2553 = vmatpush.bf16.msra.mxu0 %v2022
    %2554 = vmatpush.bf16.msra.mxu0 %v2014
    %2555 = vmatmul.bf16.gmra.mxu0 %v106
    %v2556 = vpop.f32.mrf.mxu0
    %v2557 = vadd.f32 %v2544, %v2556
    %v2558 = vpop.f32.mrf.mxu0
    %2559 = vdwg.mxu0
    %2560 = vmatpush.bf16.msra.mxu0 0
    %2561 = vmatpush.bf16.msra.mxu0 0
    %2562 = vmatpush.bf16.msra.mxu0 0
    %2563 = vmatpush.bf16.msra.mxu0 0
    %2564 = vmatpush.bf16.msra.mxu0 0
    %2565 = vmatpush.bf16.msra.mxu0 0
    %2566 = vmatpush.bf16.msra.mxu0 0
    %2567 = vmatpush.bf16.msra.mxu0 %v2078
    %2568 = vmatmul.bf16.gmra.mxu0 %v2480
    %v2569 = vpop.f32.mrf.mxu0
    %v2570 = vadd.f32 %v2557, %v2569
    %v2571 = vpop.f32.mrf.mxu0
    %2572 = vdwg.mxu0
    %2573 = vmatpush.bf16.msra.mxu0 %v1751
    %2574 = vmatpush.bf16.msra.mxu0 %v1743
    %2575 = vmatpush.bf16.msra.mxu0 %v1735
    %2576 = vmatpush.bf16.msra.mxu0 %v1727
    %2577 = vmatpush.bf16.msra.mxu0 %v1719
    %2578 = vmatpush.bf16.msra.mxu0 %v1711
    %2579 = vmatpush.bf16.msra.mxu0 %v1703
    %2580 = vmatpush.bf16.msra.mxu0 %v1695
    %2581 = vmatmul.bf16.gmra.mxu0 %v101
    %v2582 = vpop.f32.mrf.mxu0
    %v2583 = vadd.f32 %v503, %v2582
    %v2584 = vpop.f32.mrf.mxu0
    %2585 = vdwg.mxu0
    %2586 = vmatpush.bf16.msra.mxu0 %v1815
    %2587 = vmatpush.bf16.msra.mxu0 %v1807
    %2588 = vmatpush.bf16.msra.mxu0 %v1799
    %2589 = vmatpush.bf16.msra.mxu0 %v1791
    %2590 = vmatpush.bf16.msra.mxu0 %v1783
    %2591 = vmatpush.bf16.msra.mxu0 %v1775
    %2592 = vmatpush.bf16.msra.mxu0 %v1767
    %2593 = vmatpush.bf16.msra.mxu0 %v1759
    %2594 = vmatmul.bf16.gmra.mxu0 %v102
    %v2595 = vpop.f32.mrf.mxu0
    %v2596 = vadd.f32 %v2583, %v2595
    %v2597 = vpop.f32.mrf.mxu0
    %2598 = vdwg.mxu0
    %2599 = vmatpush.bf16.msra.mxu0 %v1879
    %2600 = vmatpush.bf16.msra.mxu0 %v1871
    %2601 = vmatpush.bf16.msra.mxu0 %v1863
    %2602 = vmatpush.bf16.msra.mxu0 %v1855
    %2603 = vmatpush.bf16.msra.mxu0 %v1847
    %2604 = vmatpush.bf16.msra.mxu0 %v1839
    %2605 = vmatpush.bf16.msra.mxu0 %v1831
    %2606 = vmatpush.bf16.msra.mxu0 %v1823
    %2607 = vmatmul.bf16.gmra.mxu0 %v103
    %v2608 = vpop.f32.mrf.mxu0
    %v2609 = vadd.f32 %v2596, %v2608
    %v2610 = vpop.f32.mrf.mxu0
    %2611 = vdwg.mxu0
    %2612 = vmatpush.bf16.msra.mxu0 %v1943
    %2613 = vmatpush.bf16.msra.mxu0 %v1935
    %2614 = vmatpush.bf16.msra.mxu0 %v1927
    %2615 = vmatpush.bf16.msra.mxu0 %v1919
    %2616 = vmatpush.bf16.msra.mxu0 %v1911
    %2617 = vmatpush.bf16.msra.mxu0 %v1903
    %2618 = vmatpush.bf16.msra.mxu0 %v1895
    %2619 = vmatpush.bf16.msra.mxu0 %v1887
    %2620 = vmatmul.bf16.gmra.mxu0 %v104
    %v2621 = vpop.f32.mrf.mxu0
    %v2622 = vadd.f32 %v2609, %v2621
    %v2623 = vpop.f32.mrf.mxu0
    %2624 = vdwg.mxu0
    %2625 = vmatpush.bf16.msra.mxu0 %v2007
    %2626 = vmatpush.bf16.msra.mxu0 %v1999
    %2627 = vmatpush.bf16.msra.mxu0 %v1991
    %2628 = vmatpush.bf16.msra.mxu0 %v1983
    %2629 = vmatpush.bf16.msra.mxu0 %v1975
    %2630 = vmatpush.bf16.msra.mxu0 %v1967
    %2631 = vmatpush.bf16.msra.mxu0 %v1959
    %2632 = vmatpush.bf16.msra.mxu0 %v1951
    %2633 = vmatmul.bf16.gmra.mxu0 %v105
    %v2634 = vpop.f32.mrf.mxu0
    %v2635 = vadd.f32 %v2622, %v2634
    %v2636 = vpop.f32.mrf.mxu0
    %2637 = vdwg.mxu0
    %2638 = vmatpush.bf16.msra.mxu0 %v2071
    %2639 = vmatpush.bf16.msra.mxu0 %v2063
    %2640 = vmatpush.bf16.msra.mxu0 %v2055
    %2641 = vmatpush.bf16.msra.mxu0 %v2047
    %2642 = vmatpush.bf16.msra.mxu0 %v2039
    %2643 = vmatpush.bf16.msra.mxu0 %v2031
    %2644 = vmatpush.bf16.msra.mxu0 %v2023
    %2645 = vmatpush.bf16.msra.mxu0 %v2015
    %2646 = vmatmul.bf16.gmra.mxu0 %v106
    %v2647 = vpop.f32.mrf.mxu0
    %v2648 = vadd.f32 %v2635, %v2647
    %v2649 = vpop.f32.mrf.mxu0
    %2650 = vdwg.mxu0
    %2651 = vmatpush.bf16.msra.mxu0 0
    %2652 = vmatpush.bf16.msra.mxu0 0
    %2653 = vmatpush.bf16.msra.mxu0 0
    %2654 = vmatpush.bf16.msra.mxu0 0
    %2655 = vmatpush.bf16.msra.mxu0 0
    %2656 = vmatpush.bf16.msra.mxu0 0
    %2657 = vmatpush.bf16.msra.mxu0 0
    %2658 = vmatpush.bf16.msra.mxu0 %v2079
    %2659 = vmatmul.bf16.gmra.mxu0 %v2480
    %v2660 = vpop.f32.mrf.mxu0
    %v2661 = vadd.f32 %v2648, %v2660
    %v2662 = vpop.f32.mrf.mxu0
    %2663 = vdwg.mxu0
    %2664 = vmatpush.bf16.msra.mxu0 %v1752
    %2665 = vmatpush.bf16.msra.mxu0 %v1744
    %2666 = vmatpush.bf16.msra.mxu0 %v1736
    %2667 = vmatpush.bf16.msra.mxu0 %v1728
    %2668 = vmatpush.bf16.msra.mxu0 %v1720
    %2669 = vmatpush.bf16.msra.mxu0 %v1712
    %2670 = vmatpush.bf16.msra.mxu0 %v1704
    %2671 = vmatpush.bf16.msra.mxu0 %v1696
    %2672 = vmatmul.bf16.gmra.mxu0 %v101
    %v2673 = vpop.f32.mrf.mxu0
    %v2674 = vadd.f32 %v504, %v2673
    %v2675 = vpop.f32.mrf.mxu0
    %2676 = vdwg.mxu0
    %2677 = vmatpush.bf16.msra.mxu0 %v1816
    %2678 = vmatpush.bf16.msra.mxu0 %v1808
    %2679 = vmatpush.bf16.msra.mxu0 %v1800
    %2680 = vmatpush.bf16.msra.mxu0 %v1792
    %2681 = vmatpush.bf16.msra.mxu0 %v1784
    %2682 = vmatpush.bf16.msra.mxu0 %v1776
    %2683 = vmatpush.bf16.msra.mxu0 %v1768
    %2684 = vmatpush.bf16.msra.mxu0 %v1760
    %2685 = vmatmul.bf16.gmra.mxu0 %v102
    %v2686 = vpop.f32.mrf.mxu0
    %v2687 = vadd.f32 %v2674, %v2686
    %v2688 = vpop.f32.mrf.mxu0
    %2689 = vdwg.mxu0
    %2690 = vmatpush.bf16.msra.mxu0 %v1880
    %2691 = vmatpush.bf16.msra.mxu0 %v1872
    %2692 = vmatpush.bf16.msra.mxu0 %v1864
    %2693 = vmatpush.bf16.msra.mxu0 %v1856
    %2694 = vmatpush.bf16.msra.mxu0 %v1848
    %2695 = vmatpush.bf16.msra.mxu0 %v1840
    %2696 = vmatpush.bf16.msra.mxu0 %v1832
    %2697 = vmatpush.bf16.msra.mxu0 %v1824
    %2698 = vmatmul.bf16.gmra.mxu0 %v103
    %v2699 = vpop.f32.mrf.mxu0
    %v2700 = vadd.f32 %v2687, %v2699
    %v2701 = vpop.f32.mrf.mxu0
    %2702 = vdwg.mxu0
    %2703 = vmatpush.bf16.msra.mxu0 %v1944
    %2704 = vmatpush.bf16.msra.mxu0 %v1936
    %2705 = vmatpush.bf16.msra.mxu0 %v1928
    %2706 = vmatpush.bf16.msra.mxu0 %v1920
    %2707 = vmatpush.bf16.msra.mxu0 %v1912
    %2708 = vmatpush.bf16.msra.mxu0 %v1904
    %2709 = vmatpush.bf16.msra.mxu0 %v1896
    %2710 = vmatpush.bf16.msra.mxu0 %v1888
    %2711 = vmatmul.bf16.gmra.mxu0 %v104
    %v2712 = vpop.f32.mrf.mxu0
    %v2713 = vadd.f32 %v2700, %v2712
    %v2714 = vpop.f32.mrf.mxu0
    %2715 = vdwg.mxu0
    %2716 = vmatpush.bf16.msra.mxu0 %v2008
    %2717 = vmatpush.bf16.msra.mxu0 %v2000
    %2718 = vmatpush.bf16.msra.mxu0 %v1992
    %2719 = vmatpush.bf16.msra.mxu0 %v1984
    %2720 = vmatpush.bf16.msra.mxu0 %v1976
    %2721 = vmatpush.bf16.msra.mxu0 %v1968
    %2722 = vmatpush.bf16.msra.mxu0 %v1960
    %2723 = vmatpush.bf16.msra.mxu0 %v1952
    %2724 = vmatmul.bf16.gmra.mxu0 %v105
    %v2725 = vpop.f32.mrf.mxu0
    %v2726 = vadd.f32 %v2713, %v2725
    %v2727 = vpop.f32.mrf.mxu0
    %2728 = vdwg.mxu0
    %2729 = vmatpush.bf16.msra.mxu0 %v2072
    %2730 = vmatpush.bf16.msra.mxu0 %v2064
    %2731 = vmatpush.bf16.msra.mxu0 %v2056
    %2732 = vmatpush.bf16.msra.mxu0 %v2048
    %2733 = vmatpush.bf16.msra.mxu0 %v2040
    %2734 = vmatpush.bf16.msra.mxu0 %v2032
    %2735 = vmatpush.bf16.msra.mxu0 %v2024
    %2736 = vmatpush.bf16.msra.mxu0 %v2016
    %2737 = vmatmul.bf16.gmra.mxu0 %v106
    %v2738 = vpop.f32.mrf.mxu0
    %v2739 = vadd.f32 %v2726, %v2738
    %v2740 = vpop.f32.mrf.mxu0
    %2741 = vdwg.mxu0
    %2742 = vmatpush.bf16.msra.mxu0 0
    %2743 = vmatpush.bf16.msra.mxu0 0
    %2744 = vmatpush.bf16.msra.mxu0 0
    %2745 = vmatpush.bf16.msra.mxu0 0
    %2746 = vmatpush.bf16.msra.mxu0 0
    %2747 = vmatpush.bf16.msra.mxu0 0
    %2748 = vmatpush.bf16.msra.mxu0 0
    %2749 = vmatpush.bf16.msra.mxu0 %v2080
    %2750 = vmatmul.bf16.gmra.mxu0 %v2480
    %v2751 = vpop.f32.mrf.mxu0
    %v2752 = vadd.f32 %v2739, %v2751
    %v2753 = vpop.f32.mrf.mxu0
    %2754 = vdwg.mxu0
    %2755 = vmatpush.bf16.msra.mxu0 %v1753
    %2756 = vmatpush.bf16.msra.mxu0 %v1745
    %2757 = vmatpush.bf16.msra.mxu0 %v1737
    %2758 = vmatpush.bf16.msra.mxu0 %v1729
    %2759 = vmatpush.bf16.msra.mxu0 %v1721
    %2760 = vmatpush.bf16.msra.mxu0 %v1713
    %2761 = vmatpush.bf16.msra.mxu0 %v1705
    %2762 = vmatpush.bf16.msra.mxu0 %v1697
    %2763 = vmatmul.bf16.gmra.mxu0 %v101
    %v2764 = vpop.f32.mrf.mxu0
    %v2765 = vadd.f32 %v505, %v2764
    %v2766 = vpop.f32.mrf.mxu0
    %2767 = vdwg.mxu0
    %2768 = vmatpush.bf16.msra.mxu0 %v1817
    %2769 = vmatpush.bf16.msra.mxu0 %v1809
    %2770 = vmatpush.bf16.msra.mxu0 %v1801
    %2771 = vmatpush.bf16.msra.mxu0 %v1793
    %2772 = vmatpush.bf16.msra.mxu0 %v1785
    %2773 = vmatpush.bf16.msra.mxu0 %v1777
    %2774 = vmatpush.bf16.msra.mxu0 %v1769
    %2775 = vmatpush.bf16.msra.mxu0 %v1761
    %2776 = vmatmul.bf16.gmra.mxu0 %v102
    %v2777 = vpop.f32.mrf.mxu0
    %v2778 = vadd.f32 %v2765, %v2777
    %v2779 = vpop.f32.mrf.mxu0
    %2780 = vdwg.mxu0
    %2781 = vmatpush.bf16.msra.mxu0 %v1881
    %2782 = vmatpush.bf16.msra.mxu0 %v1873
    %2783 = vmatpush.bf16.msra.mxu0 %v1865
    %2784 = vmatpush.bf16.msra.mxu0 %v1857
    %2785 = vmatpush.bf16.msra.mxu0 %v1849
    %2786 = vmatpush.bf16.msra.mxu0 %v1841
    %2787 = vmatpush.bf16.msra.mxu0 %v1833
    %2788 = vmatpush.bf16.msra.mxu0 %v1825
    %2789 = vmatmul.bf16.gmra.mxu0 %v103
    %v2790 = vpop.f32.mrf.mxu0
    %v2791 = vadd.f32 %v2778, %v2790
    %v2792 = vpop.f32.mrf.mxu0
    %2793 = vdwg.mxu0
    %2794 = vmatpush.bf16.msra.mxu0 %v1945
    %2795 = vmatpush.bf16.msra.mxu0 %v1937
    %2796 = vmatpush.bf16.msra.mxu0 %v1929
    %2797 = vmatpush.bf16.msra.mxu0 %v1921
    %2798 = vmatpush.bf16.msra.mxu0 %v1913
    %2799 = vmatpush.bf16.msra.mxu0 %v1905
    %2800 = vmatpush.bf16.msra.mxu0 %v1897
    %2801 = vmatpush.bf16.msra.mxu0 %v1889
    %2802 = vmatmul.bf16.gmra.mxu0 %v104
    %v2803 = vpop.f32.mrf.mxu0
    %v2804 = vadd.f32 %v2791, %v2803
    %v2805 = vpop.f32.mrf.mxu0
    %2806 = vdwg.mxu0
    %2807 = vmatpush.bf16.msra.mxu0 %v2009
    %2808 = vmatpush.bf16.msra.mxu0 %v2001
    %2809 = vmatpush.bf16.msra.mxu0 %v1993
    %2810 = vmatpush.bf16.msra.mxu0 %v1985
    %2811 = vmatpush.bf16.msra.mxu0 %v1977
    %2812 = vmatpush.bf16.msra.mxu0 %v1969
    %2813 = vmatpush.bf16.msra.mxu0 %v1961
    %2814 = vmatpush.bf16.msra.mxu0 %v1953
    %2815 = vmatmul.bf16.gmra.mxu0 %v105
    %v2816 = vpop.f32.mrf.mxu0
    %v2817 = vadd.f32 %v2804, %v2816
    %v2818 = vpop.f32.mrf.mxu0
    %2819 = vdwg.mxu0
    %2820 = vmatpush.bf16.msra.mxu0 %v2073
    %2821 = vmatpush.bf16.msra.mxu0 %v2065
    %2822 = vmatpush.bf16.msra.mxu0 %v2057
    %2823 = vmatpush.bf16.msra.mxu0 %v2049
    %2824 = vmatpush.bf16.msra.mxu0 %v2041
    %2825 = vmatpush.bf16.msra.mxu0 %v2033
    %2826 = vmatpush.bf16.msra.mxu0 %v2025
    %2827 = vmatpush.bf16.msra.mxu0 %v2017
    %2828 = vmatmul.bf16.gmra.mxu0 %v106
    %v2829 = vpop.f32.mrf.mxu0
    %v2830 = vadd.f32 %v2817, %v2829
    %v2831 = vpop.f32.mrf.mxu0
    %2832 = vdwg.mxu0
    %2833 = vmatpush.bf16.msra.mxu0 0
    %2834 = vmatpush.bf16.msra.mxu0 0
    %2835 = vmatpush.bf16.msra.mxu0 0
    %2836 = vmatpush.bf16.msra.mxu0 0
    %2837 = vmatpush.bf16.msra.mxu0 0
    %2838 = vmatpush.bf16.msra.mxu0 0
    %2839 = vmatpush.bf16.msra.mxu0 0
    %2840 = vmatpush.bf16.msra.mxu0 %v2081
    %2841 = vmatmul.bf16.gmra.mxu0 %v2480
    %v2842 = vpop.f32.mrf.mxu0
    %v2843 = vadd.f32 %v2830, %v2842
    %v2844 = vpop.f32.mrf.mxu0
    %2845 = vdwg.mxu0
    %2846 = vmatpush.bf16.msra.mxu0 %v1754
    %2847 = vmatpush.bf16.msra.mxu0 %v1746
    %2848 = vmatpush.bf16.msra.mxu0 %v1738
    %2849 = vmatpush.bf16.msra.mxu0 %v1730
    %2850 = vmatpush.bf16.msra.mxu0 %v1722
    %2851 = vmatpush.bf16.msra.mxu0 %v1714
    %2852 = vmatpush.bf16.msra.mxu0 %v1706
    %2853 = vmatpush.bf16.msra.mxu0 %v1698
    %2854 = vmatmul.bf16.gmra.mxu0 %v101
    %v2855 = vpop.f32.mrf.mxu0
    %v2856 = vadd.f32 %v506, %v2855
    %v2857 = vpop.f32.mrf.mxu0
    %2858 = vdwg.mxu0
    %2859 = vmatpush.bf16.msra.mxu0 %v1818
    %2860 = vmatpush.bf16.msra.mxu0 %v1810
    %2861 = vmatpush.bf16.msra.mxu0 %v1802
    %2862 = vmatpush.bf16.msra.mxu0 %v1794
    %2863 = vmatpush.bf16.msra.mxu0 %v1786
    %2864 = vmatpush.bf16.msra.mxu0 %v1778
    %2865 = vmatpush.bf16.msra.mxu0 %v1770
    %2866 = vmatpush.bf16.msra.mxu0 %v1762
    %2867 = vmatmul.bf16.gmra.mxu0 %v102
    %v2868 = vpop.f32.mrf.mxu0
    %v2869 = vadd.f32 %v2856, %v2868
    %v2870 = vpop.f32.mrf.mxu0
    %2871 = vdwg.mxu0
    %2872 = vmatpush.bf16.msra.mxu0 %v1882
    %2873 = vmatpush.bf16.msra.mxu0 %v1874
    %2874 = vmatpush.bf16.msra.mxu0 %v1866
    %2875 = vmatpush.bf16.msra.mxu0 %v1858
    %2876 = vmatpush.bf16.msra.mxu0 %v1850
    %2877 = vmatpush.bf16.msra.mxu0 %v1842
    %2878 = vmatpush.bf16.msra.mxu0 %v1834
    %2879 = vmatpush.bf16.msra.mxu0 %v1826
    %2880 = vmatmul.bf16.gmra.mxu0 %v103
    %v2881 = vpop.f32.mrf.mxu0
    %v2882 = vadd.f32 %v2869, %v2881
    %v2883 = vpop.f32.mrf.mxu0
    %2884 = vdwg.mxu0
    %2885 = vmatpush.bf16.msra.mxu0 %v1946
    %2886 = vmatpush.bf16.msra.mxu0 %v1938
    %2887 = vmatpush.bf16.msra.mxu0 %v1930
    %2888 = vmatpush.bf16.msra.mxu0 %v1922
    %2889 = vmatpush.bf16.msra.mxu0 %v1914
    %2890 = vmatpush.bf16.msra.mxu0 %v1906
    %2891 = vmatpush.bf16.msra.mxu0 %v1898
    %2892 = vmatpush.bf16.msra.mxu0 %v1890
    %2893 = vmatmul.bf16.gmra.mxu0 %v104
    %v2894 = vpop.f32.mrf.mxu0
    %v2895 = vadd.f32 %v2882, %v2894
    %v2896 = vpop.f32.mrf.mxu0
    %2897 = vdwg.mxu0
    %2898 = vmatpush.bf16.msra.mxu0 %v2010
    %2899 = vmatpush.bf16.msra.mxu0 %v2002
    %2900 = vmatpush.bf16.msra.mxu0 %v1994
    %2901 = vmatpush.bf16.msra.mxu0 %v1986
    %2902 = vmatpush.bf16.msra.mxu0 %v1978
    %2903 = vmatpush.bf16.msra.mxu0 %v1970
    %2904 = vmatpush.bf16.msra.mxu0 %v1962
    %2905 = vmatpush.bf16.msra.mxu0 %v1954
    %2906 = vmatmul.bf16.gmra.mxu0 %v105
    %v2907 = vpop.f32.mrf.mxu0
    %v2908 = vadd.f32 %v2895, %v2907
    %v2909 = vpop.f32.mrf.mxu0
    %2910 = vdwg.mxu0
    %2911 = vmatpush.bf16.msra.mxu0 %v2074
    %2912 = vmatpush.bf16.msra.mxu0 %v2066
    %2913 = vmatpush.bf16.msra.mxu0 %v2058
    %2914 = vmatpush.bf16.msra.mxu0 %v2050
    %2915 = vmatpush.bf16.msra.mxu0 %v2042
    %2916 = vmatpush.bf16.msra.mxu0 %v2034
    %2917 = vmatpush.bf16.msra.mxu0 %v2026
    %2918 = vmatpush.bf16.msra.mxu0 %v2018
    %2919 = vmatmul.bf16.gmra.mxu0 %v106
    %v2920 = vpop.f32.mrf.mxu0
    %v2921 = vadd.f32 %v2908, %v2920
    %v2922 = vpop.f32.mrf.mxu0
    %2923 = vdwg.mxu0
    %2924 = vmatpush.bf16.msra.mxu0 0
    %2925 = vmatpush.bf16.msra.mxu0 0
    %2926 = vmatpush.bf16.msra.mxu0 0
    %2927 = vmatpush.bf16.msra.mxu0 0
    %2928 = vmatpush.bf16.msra.mxu0 0
    %2929 = vmatpush.bf16.msra.mxu0 0
    %2930 = vmatpush.bf16.msra.mxu0 0
    %2931 = vmatpush.bf16.msra.mxu0 %v2082
    %2932 = vmatmul.bf16.gmra.mxu0 %v2480
    %v2933 = vpop.f32.mrf.mxu0
    %v2934 = vadd.f32 %v2921, %v2933
    %v2935 = vpop.f32.mrf.mxu0
    %2936 = vdwg.mxu0
    %2937 = vmatpush.bf16.msra.mxu0 %v1755
    %2938 = vmatpush.bf16.msra.mxu0 %v1747
    %2939 = vmatpush.bf16.msra.mxu0 %v1739
    %2940 = vmatpush.bf16.msra.mxu0 %v1731
    %2941 = vmatpush.bf16.msra.mxu0 %v1723
    %2942 = vmatpush.bf16.msra.mxu0 %v1715
    %2943 = vmatpush.bf16.msra.mxu0 %v1707
    %2944 = vmatpush.bf16.msra.mxu0 %v1699
    %2945 = vmatmul.bf16.gmra.mxu0 %v101
    %v2946 = vpop.f32.mrf.mxu0
    %v2947 = vadd.f32 %v507, %v2946
    %v2948 = vpop.f32.mrf.mxu0
    %2949 = vdwg.mxu0
    %2950 = vmatpush.bf16.msra.mxu0 %v1819
    %2951 = vmatpush.bf16.msra.mxu0 %v1811
    %2952 = vmatpush.bf16.msra.mxu0 %v1803
    %2953 = vmatpush.bf16.msra.mxu0 %v1795
    %2954 = vmatpush.bf16.msra.mxu0 %v1787
    %2955 = vmatpush.bf16.msra.mxu0 %v1779
    %2956 = vmatpush.bf16.msra.mxu0 %v1771
    %2957 = vmatpush.bf16.msra.mxu0 %v1763
    %2958 = vmatmul.bf16.gmra.mxu0 %v102
    %v2959 = vpop.f32.mrf.mxu0
    %v2960 = vadd.f32 %v2947, %v2959
    %v2961 = vpop.f32.mrf.mxu0
    %2962 = vdwg.mxu0
    %2963 = vmatpush.bf16.msra.mxu0 %v1883
    %2964 = vmatpush.bf16.msra.mxu0 %v1875
    %2965 = vmatpush.bf16.msra.mxu0 %v1867
    %2966 = vmatpush.bf16.msra.mxu0 %v1859
    %2967 = vmatpush.bf16.msra.mxu0 %v1851
    %2968 = vmatpush.bf16.msra.mxu0 %v1843
    %2969 = vmatpush.bf16.msra.mxu0 %v1835
    %2970 = vmatpush.bf16.msra.mxu0 %v1827
    %2971 = vmatmul.bf16.gmra.mxu0 %v103
    %v2972 = vpop.f32.mrf.mxu0
    %v2973 = vadd.f32 %v2960, %v2972
    %v2974 = vpop.f32.mrf.mxu0
    %2975 = vdwg.mxu0
    %2976 = vmatpush.bf16.msra.mxu0 %v1947
    %2977 = vmatpush.bf16.msra.mxu0 %v1939
    %2978 = vmatpush.bf16.msra.mxu0 %v1931
    %2979 = vmatpush.bf16.msra.mxu0 %v1923
    %2980 = vmatpush.bf16.msra.mxu0 %v1915
    %2981 = vmatpush.bf16.msra.mxu0 %v1907
    %2982 = vmatpush.bf16.msra.mxu0 %v1899
    %2983 = vmatpush.bf16.msra.mxu0 %v1891
    %2984 = vmatmul.bf16.gmra.mxu0 %v104
    %v2985 = vpop.f32.mrf.mxu0
    %v2986 = vadd.f32 %v2973, %v2985
    %v2987 = vpop.f32.mrf.mxu0
    %2988 = vdwg.mxu0
    %2989 = vmatpush.bf16.msra.mxu0 %v2011
    %2990 = vmatpush.bf16.msra.mxu0 %v2003
    %2991 = vmatpush.bf16.msra.mxu0 %v1995
    %2992 = vmatpush.bf16.msra.mxu0 %v1987
    %2993 = vmatpush.bf16.msra.mxu0 %v1979
    %2994 = vmatpush.bf16.msra.mxu0 %v1971
    %2995 = vmatpush.bf16.msra.mxu0 %v1963
    %2996 = vmatpush.bf16.msra.mxu0 %v1955
    %2997 = vmatmul.bf16.gmra.mxu0 %v105
    %v2998 = vpop.f32.mrf.mxu0
    %v2999 = vadd.f32 %v2986, %v2998
    %v3000 = vpop.f32.mrf.mxu0
    %3001 = vdwg.mxu0
    %3002 = vmatpush.bf16.msra.mxu0 %v2075
    %3003 = vmatpush.bf16.msra.mxu0 %v2067
    %3004 = vmatpush.bf16.msra.mxu0 %v2059
    %3005 = vmatpush.bf16.msra.mxu0 %v2051
    %3006 = vmatpush.bf16.msra.mxu0 %v2043
    %3007 = vmatpush.bf16.msra.mxu0 %v2035
    %3008 = vmatpush.bf16.msra.mxu0 %v2027
    %3009 = vmatpush.bf16.msra.mxu0 %v2019
    %3010 = vmatmul.bf16.gmra.mxu0 %v106
    %v3011 = vpop.f32.mrf.mxu0
    %v3012 = vadd.f32 %v2999, %v3011
    %v3013 = vpop.f32.mrf.mxu0
    %3014 = vdwg.mxu0
    %3015 = vmatpush.bf16.msra.mxu0 0
    %3016 = vmatpush.bf16.msra.mxu0 0
    %3017 = vmatpush.bf16.msra.mxu0 0
    %3018 = vmatpush.bf16.msra.mxu0 0
    %3019 = vmatpush.bf16.msra.mxu0 0
    %3020 = vmatpush.bf16.msra.mxu0 0
    %3021 = vmatpush.bf16.msra.mxu0 0
    %3022 = vmatpush.bf16.msra.mxu0 %v2083
    %3023 = vmatmul.bf16.gmra.mxu0 %v2480
    %v3024 = vpop.f32.mrf.mxu0
    %v3025 = vadd.f32 %v3012, %v3024
    %v3026 = vpop.f32.mrf.mxu0
    %3027 = vdwg.mxu0
    %3028 = vmatpush.bf16.msra.mxu0 %v1756
    %3029 = vmatpush.bf16.msra.mxu0 %v1748
    %3030 = vmatpush.bf16.msra.mxu0 %v1740
    %3031 = vmatpush.bf16.msra.mxu0 %v1732
    %3032 = vmatpush.bf16.msra.mxu0 %v1724
    %3033 = vmatpush.bf16.msra.mxu0 %v1716
    %3034 = vmatpush.bf16.msra.mxu0 %v1708
    %3035 = vmatpush.bf16.msra.mxu0 %v1700
    %3036 = vmatmul.bf16.gmra.mxu0 %v101
    %v3037 = vpop.f32.mrf.mxu0
    %v3038 = vadd.f32 %v508, %v3037
    %v3039 = vpop.f32.mrf.mxu0
    %3040 = vdwg.mxu0
    %3041 = vmatpush.bf16.msra.mxu0 %v1820
    %3042 = vmatpush.bf16.msra.mxu0 %v1812
    %3043 = vmatpush.bf16.msra.mxu0 %v1804
    %3044 = vmatpush.bf16.msra.mxu0 %v1796
    %3045 = vmatpush.bf16.msra.mxu0 %v1788
    %3046 = vmatpush.bf16.msra.mxu0 %v1780
    %3047 = vmatpush.bf16.msra.mxu0 %v1772
    %3048 = vmatpush.bf16.msra.mxu0 %v1764
    %3049 = vmatmul.bf16.gmra.mxu0 %v102
    %v3050 = vpop.f32.mrf.mxu0
    %v3051 = vadd.f32 %v3038, %v3050
    %v3052 = vpop.f32.mrf.mxu0
    %3053 = vdwg.mxu0
    %3054 = vmatpush.bf16.msra.mxu0 %v1884
    %3055 = vmatpush.bf16.msra.mxu0 %v1876
    %3056 = vmatpush.bf16.msra.mxu0 %v1868
    %3057 = vmatpush.bf16.msra.mxu0 %v1860
    %3058 = vmatpush.bf16.msra.mxu0 %v1852
    %3059 = vmatpush.bf16.msra.mxu0 %v1844
    %3060 = vmatpush.bf16.msra.mxu0 %v1836
    %3061 = vmatpush.bf16.msra.mxu0 %v1828
    %3062 = vmatmul.bf16.gmra.mxu0 %v103
    %v3063 = vpop.f32.mrf.mxu0
    %v3064 = vadd.f32 %v3051, %v3063
    %v3065 = vpop.f32.mrf.mxu0
    %3066 = vdwg.mxu0
    %3067 = vmatpush.bf16.msra.mxu0 %v1948
    %3068 = vmatpush.bf16.msra.mxu0 %v1940
    %3069 = vmatpush.bf16.msra.mxu0 %v1932
    %3070 = vmatpush.bf16.msra.mxu0 %v1924
    %3071 = vmatpush.bf16.msra.mxu0 %v1916
    %3072 = vmatpush.bf16.msra.mxu0 %v1908
    %3073 = vmatpush.bf16.msra.mxu0 %v1900
    %3074 = vmatpush.bf16.msra.mxu0 %v1892
    %3075 = vmatmul.bf16.gmra.mxu0 %v104
    %v3076 = vpop.f32.mrf.mxu0
    %v3077 = vadd.f32 %v3064, %v3076
    %v3078 = vpop.f32.mrf.mxu0
    %3079 = vdwg.mxu0
    %3080 = vmatpush.bf16.msra.mxu0 %v2012
    %3081 = vmatpush.bf16.msra.mxu0 %v2004
    %3082 = vmatpush.bf16.msra.mxu0 %v1996
    %3083 = vmatpush.bf16.msra.mxu0 %v1988
    %3084 = vmatpush.bf16.msra.mxu0 %v1980
    %3085 = vmatpush.bf16.msra.mxu0 %v1972
    %3086 = vmatpush.bf16.msra.mxu0 %v1964
    %3087 = vmatpush.bf16.msra.mxu0 %v1956
    %3088 = vmatmul.bf16.gmra.mxu0 %v105
    %v3089 = vpop.f32.mrf.mxu0
    %v3090 = vadd.f32 %v3077, %v3089
    %v3091 = vpop.f32.mrf.mxu0
    %3092 = vdwg.mxu0
    %3093 = vmatpush.bf16.msra.mxu0 %v2076
    %3094 = vmatpush.bf16.msra.mxu0 %v2068
    %3095 = vmatpush.bf16.msra.mxu0 %v2060
    %3096 = vmatpush.bf16.msra.mxu0 %v2052
    %3097 = vmatpush.bf16.msra.mxu0 %v2044
    %3098 = vmatpush.bf16.msra.mxu0 %v2036
    %3099 = vmatpush.bf16.msra.mxu0 %v2028
    %3100 = vmatpush.bf16.msra.mxu0 %v2020
    %3101 = vmatmul.bf16.gmra.mxu0 %v106
    %v3102 = vpop.f32.mrf.mxu0
    %v3103 = vadd.f32 %v3090, %v3102
    %v3104 = vpop.f32.mrf.mxu0
    %3105 = vdwg.mxu0
    %3106 = vmatpush.bf16.msra.mxu0 0
    %3107 = vmatpush.bf16.msra.mxu0 0
    %3108 = vmatpush.bf16.msra.mxu0 0
    %3109 = vmatpush.bf16.msra.mxu0 0
    %3110 = vmatpush.bf16.msra.mxu0 0
    %3111 = vmatpush.bf16.msra.mxu0 0
    %3112 = vmatpush.bf16.msra.mxu0 0
    %3113 = vmatpush.bf16.msra.mxu0 %v2084
    %3114 = vmatmul.bf16.gmra.mxu0 %v2480
    %v3115 = vpop.f32.mrf.mxu0
    %v3116 = vadd.f32 %v3103, %v3115
    %v3117 = vpop.f32.mrf.mxu0
    %3118 = vdwg.mxu0
    %3119 = vmatpush.bf16.msra.mxu0 %v1757
    %3120 = vmatpush.bf16.msra.mxu0 %v1749
    %3121 = vmatpush.bf16.msra.mxu0 %v1741
    %3122 = vmatpush.bf16.msra.mxu0 %v1733
    %3123 = vmatpush.bf16.msra.mxu0 %v1725
    %3124 = vmatpush.bf16.msra.mxu0 %v1717
    %3125 = vmatpush.bf16.msra.mxu0 %v1709
    %3126 = vmatpush.bf16.msra.mxu0 %v1701
    %3127 = vmatmul.bf16.gmra.mxu0 %v101
    %v3128 = vpop.f32.mrf.mxu0
    %v3129 = vadd.f32 %v509, %v3128
    %v3130 = vpop.f32.mrf.mxu0
    %3131 = vdwg.mxu0
    %3132 = vmatpush.bf16.msra.mxu0 %v1821
    %3133 = vmatpush.bf16.msra.mxu0 %v1813
    %3134 = vmatpush.bf16.msra.mxu0 %v1805
    %3135 = vmatpush.bf16.msra.mxu0 %v1797
    %3136 = vmatpush.bf16.msra.mxu0 %v1789
    %3137 = vmatpush.bf16.msra.mxu0 %v1781
    %3138 = vmatpush.bf16.msra.mxu0 %v1773
    %3139 = vmatpush.bf16.msra.mxu0 %v1765
    %3140 = vmatmul.bf16.gmra.mxu0 %v102
    %v3141 = vpop.f32.mrf.mxu0
    %v3142 = vadd.f32 %v3129, %v3141
    %v3143 = vpop.f32.mrf.mxu0
    %3144 = vdwg.mxu0
    %3145 = vmatpush.bf16.msra.mxu0 %v1885
    %3146 = vmatpush.bf16.msra.mxu0 %v1877
    %3147 = vmatpush.bf16.msra.mxu0 %v1869
    %3148 = vmatpush.bf16.msra.mxu0 %v1861
    %3149 = vmatpush.bf16.msra.mxu0 %v1853
    %3150 = vmatpush.bf16.msra.mxu0 %v1845
    %3151 = vmatpush.bf16.msra.mxu0 %v1837
    %3152 = vmatpush.bf16.msra.mxu0 %v1829
    %3153 = vmatmul.bf16.gmra.mxu0 %v103
    %v3154 = vpop.f32.mrf.mxu0
    %v3155 = vadd.f32 %v3142, %v3154
    %v3156 = vpop.f32.mrf.mxu0
    %3157 = vdwg.mxu0
    %3158 = vmatpush.bf16.msra.mxu0 %v1949
    %3159 = vmatpush.bf16.msra.mxu0 %v1941
    %3160 = vmatpush.bf16.msra.mxu0 %v1933
    %3161 = vmatpush.bf16.msra.mxu0 %v1925
    %3162 = vmatpush.bf16.msra.mxu0 %v1917
    %3163 = vmatpush.bf16.msra.mxu0 %v1909
    %3164 = vmatpush.bf16.msra.mxu0 %v1901
    %3165 = vmatpush.bf16.msra.mxu0 %v1893
    %3166 = vmatmul.bf16.gmra.mxu0 %v104
    %v3167 = vpop.f32.mrf.mxu0
    %v3168 = vadd.f32 %v3155, %v3167
    %v3169 = vpop.f32.mrf.mxu0
    %3170 = vdwg.mxu0
    %3171 = vmatpush.bf16.msra.mxu0 %v2013
    %3172 = vmatpush.bf16.msra.mxu0 %v2005
    %3173 = vmatpush.bf16.msra.mxu0 %v1997
    %3174 = vmatpush.bf16.msra.mxu0 %v1989
    %3175 = vmatpush.bf16.msra.mxu0 %v1981
    %3176 = vmatpush.bf16.msra.mxu0 %v1973
    %3177 = vmatpush.bf16.msra.mxu0 %v1965
    %3178 = vmatpush.bf16.msra.mxu0 %v1957
    %3179 = vmatmul.bf16.gmra.mxu0 %v105
    %v3180 = vpop.f32.mrf.mxu0
    %v3181 = vadd.f32 %v3168, %v3180
    %v3182 = vpop.f32.mrf.mxu0
    %3183 = vdwg.mxu0
    %3184 = vmatpush.bf16.msra.mxu0 %v2077
    %3185 = vmatpush.bf16.msra.mxu0 %v2069
    %3186 = vmatpush.bf16.msra.mxu0 %v2061
    %3187 = vmatpush.bf16.msra.mxu0 %v2053
    %3188 = vmatpush.bf16.msra.mxu0 %v2045
    %3189 = vmatpush.bf16.msra.mxu0 %v2037
    %3190 = vmatpush.bf16.msra.mxu0 %v2029
    %3191 = vmatpush.bf16.msra.mxu0 %v2021
    %3192 = vmatmul.bf16.gmra.mxu0 %v106
    %v3193 = vpop.f32.mrf.mxu0
    %v3194 = vadd.f32 %v3181, %v3193
    %v3195 = vpop.f32.mrf.mxu0
    %3196 = vdwg.mxu0
    %3197 = vmatpush.bf16.msra.mxu0 0
    %3198 = vmatpush.bf16.msra.mxu0 0
    %3199 = vmatpush.bf16.msra.mxu0 0
    %3200 = vmatpush.bf16.msra.mxu0 0
    %3201 = vmatpush.bf16.msra.mxu0 0
    %3202 = vmatpush.bf16.msra.mxu0 0
    %3203 = vmatpush.bf16.msra.mxu0 0
    %3204 = vmatpush.bf16.msra.mxu0 %v2085
    %3205 = vmatmul.bf16.gmra.mxu0 %v2480
    %v3206 = vpop.f32.mrf.mxu0
    %v3207 = vadd.f32 %v3194, %v3206
    %v3208 = vpop.f32.mrf.mxu0
    %3209 = vdwg.mxu0
    %v3210 = vmax.f32 %v2570, 0.0
    %v3211 = vmax.f32 %v2661, 0.0
    %v3212 = vmax.f32 %v2752, 0.0
    %v3213 = vmax.f32 %v2843, 0.0
    %v3214 = vmax.f32 %v2934, 0.0
    %v3215 = vmax.f32 %v3025, 0.0
    %v3216 = vmax.f32 %v3116, 0.0
    %v3217 = vmax.f32 %v3207, 0.0
    %v3218 = vpack.c.bf16 %v3210, %v3210
    %v3219 = vpack.c.bf16 %v3211, %v3211
    %v3220 = vpack.c.bf16 %v3212, %v3212
    %v3221 = vpack.c.bf16 %v3213, %v3213
    %v3222 = vpack.c.bf16 %v3214, %v3214
    %v3223 = vpack.c.bf16 %v3215, %v3215
    %v3224 = vpack.c.bf16 %v3216, %v3216
    %v3225 = vpack.c.bf16 %v3217, %v3217
    %v3226 = vld [vmem:[#allocation8] sm:$0xf]
    %v3227 = vld [vmem:[#allocation8 + $0x4] sm:$0xf]
    %v3228 = vld [vmem:[#allocation8 + $0x8] sm:$0xf]
    %v3229 = vld [vmem:[#allocation8 + $0xc] sm:$0xf]
    %v3230 = vld [vmem:[#allocation8 + $0x10] sm:$0xf]
    %v3231 = vld [vmem:[#allocation8 + $0x14] sm:$0xf]
    %v3232 = vld [vmem:[#allocation8 + $0x18] sm:$0xf]
    %v3233 = vld [vmem:[#allocation8 + $0x1c] sm:$0xf]
    %v3234 = vld [vmem:[#allocation8 + $0x20] sm:$0xf]
    %v3235 = vld [vmem:[#allocation8 + $0x24] sm:$0xf]
    %v3236 = vld [vmem:[#allocation8 + $0x28] sm:$0xf]
    %v3237 = vld [vmem:[#allocation8 + $0x2c] sm:$0xf]
    %v3238 = vld [vmem:[#allocation8 + $0x30] sm:$0xf]
    %v3239 = vld [vmem:[#allocation8 + $0x34] sm:$0xf]
    %v3240 = vld [vmem:[#allocation8 + $0x38] sm:$0xf]
    %v3241 = vld [vmem:[#allocation8 + $0x3c] sm:$0xf]
    %v3242 = vld [vmem:[#allocation8 + $0x40] sm:$0xf]
    %v3243 = vld [vmem:[#allocation8 + $0x44] sm:$0xf]
    %v3244 = vld [vmem:[#allocation8 + $0x48] sm:$0xf]
    %v3245 = vld [vmem:[#allocation8 + $0x4c] sm:$0xf]
    %v3246 = vld [vmem:[#allocation8 + $0x50] sm:$0xf]
    %v3247 = vld [vmem:[#allocation8 + $0x54] sm:$0xf]
    %v3248 = vld [vmem:[#allocation8 + $0x58] sm:$0xf]
    %v3249 = vld [vmem:[#allocation8 + $0x5c] sm:$0xf]
    %v3250 = vld [vmem:[#allocation8 + $0x60] sm:$0xf]
    %v3251 = vld [vmem:[#allocation8 + $0x64] sm:$0xf]
    %v3252 = vld [vmem:[#allocation8 + $0x68] sm:$0xf]
    %v3253 = vld [vmem:[#allocation8 + $0x6c] sm:$0xf]
    %v3254 = vld [vmem:[#allocation8 + $0x70] sm:$0xf]
    %v3255 = vld [vmem:[#allocation8 + $0x74] sm:$0xf]
    %v3256 = vld [vmem:[#allocation8 + $0x78] sm:$0xf]
    %v3257 = vld [vmem:[#allocation8 + $0x7c] sm:$0xf]
    %v3258 = vld [vmem:[#allocation8 + $0x80] sm:$0xf]
    %v3259 = vld [vmem:[#allocation8 + $0x84] sm:$0xf]
    %v3260 = vld [vmem:[#allocation8 + $0x88] sm:$0xf]
    %v3261 = vld [vmem:[#allocation8 + $0x8c] sm:$0xf]
    %v3262 = vld [vmem:[#allocation8 + $0x90] sm:$0xf]
    %v3263 = vld [vmem:[#allocation8 + $0x94] sm:$0xf]
    %v3264 = vld [vmem:[#allocation8 + $0x98] sm:$0xf]
    %v3265 = vld [vmem:[#allocation8 + $0x9c] sm:$0xf]
    %v3266 = vld [vmem:[#allocation8 + $0xa0] sm:$0xf]
    %v3267 = vld [vmem:[#allocation8 + $0xa4] sm:$0xf]
    %v3268 = vld [vmem:[#allocation8 + $0xa8] sm:$0xf]
    %v3269 = vld [vmem:[#allocation8 + $0xac] sm:$0xf]
    %v3270 = vld [vmem:[#allocation8 + $0xb0] sm:$0xf]
    %v3271 = vld [vmem:[#allocation8 + $0xb4] sm:$0xf]
    %v3272 = vld [vmem:[#allocation8 + $0xb8] sm:$0xf]
    %v3273 = vld [vmem:[#allocation8 + $0xbc] sm:$0xf]
    %v3274 = vld [vmem:[#allocation8 + $0xc0] sm:$0xf]
    %v3275 = vld [vmem:[#allocation8 + $0xc4] sm:$0xf]
    %v3276 = vld [vmem:[#allocation8 + $0xc8] sm:$0xf]
    %v3277 = vld [vmem:[#allocation8 + $0xcc] sm:$0xf]
    %v3278 = vld [vmem:[#allocation8 + $0xd0] sm:$0xf]
    %v3279 = vld [vmem:[#allocation8 + $0xd4] sm:$0xf]
    %v3280 = vld [vmem:[#allocation8 + $0xd8] sm:$0xf]
    %v3281 = vld [vmem:[#allocation8 + $0xdc] sm:$0xf]
    %v3282 = vld [vmem:[#allocation8 + $0xe0] sm:$0xf]
    %v3283 = vld [vmem:[#allocation8 + $0xe4] sm:$0xf]
    %v3284 = vld [vmem:[#allocation8 + $0xe8] sm:$0xf]
    %v3285 = vld [vmem:[#allocation8 + $0xec] sm:$0xf]
    %v3286 = vld [vmem:[#allocation8 + $0xf0] sm:$0xf]
    %v3287 = vld [vmem:[#allocation8 + $0xf4] sm:$0xf]
    %v3288 = vld [vmem:[#allocation8 + $0xf8] sm:$0xf]
    %v3289 = vld [vmem:[#allocation8 + $0xfc] sm:$0xf]
    %v3290 = vld [vmem:[#allocation8 + $0x100] sm:$0xf]
    %v3291 = vld [vmem:[#allocation8 + $0x104] sm:$0xf]
    %v3292 = vld [vmem:[#allocation8 + $0x108] sm:$0xf]
    %v3293 = vld [vmem:[#allocation8 + $0x10c] sm:$0xf]
    %v3294 = vld [vmem:[#allocation8 + $0x110] sm:$0xf]
    %v3295 = vld [vmem:[#allocation8 + $0x114] sm:$0xf]
    %v3296 = vld [vmem:[#allocation8 + $0x118] sm:$0xf]
    %v3297 = vld [vmem:[#allocation8 + $0x11c] sm:$0xf]
    %v3298 = vld [vmem:[#allocation8 + $0x120] sm:$0xf]
    %v3299 = vld [vmem:[#allocation8 + $0x124] sm:$0xf]
    %v3300 = vld [vmem:[#allocation8 + $0x128] sm:$0xf]
    %v3301 = vld [vmem:[#allocation8 + $0x12c] sm:$0xf]
    %v3302 = vld [vmem:[#allocation8 + $0x130] sm:$0xf]
    %v3303 = vld [vmem:[#allocation8 + $0x134] sm:$0xf]
    %v3304 = vld [vmem:[#allocation8 + $0x138] sm:$0xf]
    %v3305 = vld [vmem:[#allocation8 + $0x13c] sm:$0xf]
    %v3306 = vld [vmem:[#allocation8 + $0x140] sm:$0xf]
    %v3307 = vld [vmem:[#allocation8 + $0x144] sm:$0xf]
    %v3308 = vld [vmem:[#allocation8 + $0x148] sm:$0xf]
    %v3309 = vld [vmem:[#allocation8 + $0x14c] sm:$0xf]
    %v3310 = vld [vmem:[#allocation8 + $0x150] sm:$0xf]
    %v3311 = vld [vmem:[#allocation8 + $0x154] sm:$0xf]
    %v3312 = vld [vmem:[#allocation8 + $0x158] sm:$0xf]
    %v3313 = vld [vmem:[#allocation8 + $0x15c] sm:$0xf]
    %v3314 = vld [vmem:[#allocation8 + $0x160] sm:$0xf]
    %v3315 = vld [vmem:[#allocation8 + $0x164] sm:$0xf]
    %v3316 = vld [vmem:[#allocation8 + $0x168] sm:$0xf]
    %v3317 = vld [vmem:[#allocation8 + $0x16c] sm:$0xf]
    %v3318 = vld [vmem:[#allocation8 + $0x170] sm:$0xf]
    %v3319 = vld [vmem:[#allocation8 + $0x174] sm:$0xf]
    %v3320 = vld [vmem:[#allocation8 + $0x178] sm:$0xf]
    %v3321 = vld [vmem:[#allocation8 + $0x17c] sm:$0xf]
    %v3322 = vld [vmem:[#allocation8 + $0x180] sm:$0xf]
    %v3323 = vld [vmem:[#allocation8 + $0x184] sm:$0xf]
    %v3324 = vld [vmem:[#allocation8 + $0x188] sm:$0xf]
    %v3325 = vld [vmem:[#allocation8 + $0x18c] sm:$0xf]
    %v3326 = vld [vmem:[#allocation8 + $0x190] sm:$0xf]
    %v3327 = vld [vmem:[#allocation8 + $0x194] sm:$0xf]
    %v3328 = vld [vmem:[#allocation8 + $0x198] sm:$0xf]
    %v3329 = vld [vmem:[#allocation8 + $0x19c] sm:$0xf]
    %v3330 = vld [vmem:[#allocation8 + $0x1a0] sm:$0xf]
    %v3331 = vld [vmem:[#allocation8 + $0x1a4] sm:$0xf]
    %v3332 = vld [vmem:[#allocation8 + $0x1a8] sm:$0xf]
    %v3333 = vld [vmem:[#allocation8 + $0x1ac] sm:$0xf]
    %v3334 = vld [vmem:[#allocation8 + $0x1b0] sm:$0xf]
    %v3335 = vld [vmem:[#allocation8 + $0x1b4] sm:$0xf]
    %v3336 = vld [vmem:[#allocation8 + $0x1b8] sm:$0xf]
    %v3337 = vld [vmem:[#allocation8 + $0x1bc] sm:$0xf]
    %v3338 = vld [vmem:[#allocation8 + $0x1c0] sm:$0xf]
    %v3339 = vld [vmem:[#allocation8 + $0x1c4] sm:$0xf]
    %v3340 = vld [vmem:[#allocation8 + $0x1c8] sm:$0xf]
    %v3341 = vld [vmem:[#allocation8 + $0x1cc] sm:$0xf]
    %v3342 = vld [vmem:[#allocation8 + $0x1d0] sm:$0xf]
    %v3343 = vld [vmem:[#allocation8 + $0x1d4] sm:$0xf]
    %v3344 = vld [vmem:[#allocation8 + $0x1d8] sm:$0xf]
    %v3345 = vld [vmem:[#allocation8 + $0x1dc] sm:$0xf]
    %v3346 = vld [vmem:[#allocation8 + $0x1e0] sm:$0xf]
    %v3347 = vld [vmem:[#allocation8 + $0x1e4] sm:$0xf]
    %v3348 = vld [vmem:[#allocation8 + $0x1e8] sm:$0xf]
    %v3349 = vld [vmem:[#allocation8 + $0x1ec] sm:$0xf]
    %v3350 = vld [vmem:[#allocation8 + $0x1f0] sm:$0xf]
    %v3351 = vld [vmem:[#allocation8 + $0x1f4] sm:$0xf]
    %v3352 = vld [vmem:[#allocation8 + $0x1f8] sm:$0xf]
    %v3353 = vld [vmem:[#allocation8 + $0x1fc] sm:$0xf]
    %v3354 = vld [vmem:[#allocation10] sm:$0x1]
    %v3356 = vperm.slane %v3354, 0
    %v3486 = vunpack.c.l.b16 %v3226
    %v3487 = vunpack.c.l.b16 %v3227
    %v3488 = vunpack.c.l.b16 %v3228
    %v3489 = vunpack.c.l.b16 %v3229
    %v3490 = vunpack.c.l.b16 %v3230
    %v3491 = vunpack.c.l.b16 %v3231
    %v3492 = vunpack.c.l.b16 %v3232
    %v3493 = vunpack.c.l.b16 %v3233
    %v3494 = vunpack.c.l.b16 %v3234
    %v3495 = vunpack.c.l.b16 %v3235
    %v3496 = vunpack.c.l.b16 %v3236
    %v3497 = vunpack.c.l.b16 %v3237
    %v3498 = vunpack.c.l.b16 %v3238
    %v3499 = vunpack.c.l.b16 %v3239
    %v3500 = vunpack.c.l.b16 %v3240
    %v3501 = vunpack.c.l.b16 %v3241
    %v3502 = vunpack.c.l.b16 %v3242
    %v3503 = vunpack.c.l.b16 %v3243
    %v3504 = vunpack.c.l.b16 %v3244
    %v3505 = vunpack.c.l.b16 %v3245
    %v3506 = vunpack.c.l.b16 %v3246
    %v3507 = vunpack.c.l.b16 %v3247
    %v3508 = vunpack.c.l.b16 %v3248
    %v3509 = vunpack.c.l.b16 %v3249
    %v3510 = vunpack.c.l.b16 %v3250
    %v3511 = vunpack.c.l.b16 %v3251
    %v3512 = vunpack.c.l.b16 %v3252
    %v3513 = vunpack.c.l.b16 %v3253
    %v3514 = vunpack.c.l.b16 %v3254
    %v3515 = vunpack.c.l.b16 %v3255
    %v3516 = vunpack.c.l.b16 %v3256
    %v3517 = vunpack.c.l.b16 %v3257
    %v3518 = vunpack.c.l.b16 %v3258
    %v3519 = vunpack.c.l.b16 %v3259
    %v3520 = vunpack.c.l.b16 %v3260
    %v3521 = vunpack.c.l.b16 %v3261
    %v3522 = vunpack.c.l.b16 %v3262
    %v3523 = vunpack.c.l.b16 %v3263
    %v3524 = vunpack.c.l.b16 %v3264
    %v3525 = vunpack.c.l.b16 %v3265
    %v3526 = vunpack.c.l.b16 %v3266
    %v3527 = vunpack.c.l.b16 %v3267
    %v3528 = vunpack.c.l.b16 %v3268
    %v3529 = vunpack.c.l.b16 %v3269
    %v3530 = vunpack.c.l.b16 %v3270
    %v3531 = vunpack.c.l.b16 %v3271
    %v3532 = vunpack.c.l.b16 %v3272
    %v3533 = vunpack.c.l.b16 %v3273
    %v3534 = vunpack.c.l.b16 %v3274
    %v3535 = vunpack.c.l.b16 %v3275
    %v3536 = vunpack.c.l.b16 %v3276
    %v3537 = vunpack.c.l.b16 %v3277
    %v3538 = vunpack.c.l.b16 %v3278
    %v3539 = vunpack.c.l.b16 %v3279
    %v3540 = vunpack.c.l.b16 %v3280
    %v3541 = vunpack.c.l.b16 %v3281
    %v3542 = vunpack.c.l.b16 %v3282
    %v3543 = vunpack.c.l.b16 %v3283
    %v3544 = vunpack.c.l.b16 %v3284
    %v3545 = vunpack.c.l.b16 %v3285
    %v3546 = vunpack.c.l.b16 %v3286
    %v3547 = vunpack.c.l.b16 %v3287
    %v3548 = vunpack.c.l.b16 %v3288
    %v3549 = vunpack.c.l.b16 %v3289
    %v3550 = vunpack.c.l.b16 %v3290
    %v3551 = vunpack.c.l.b16 %v3291
    %v3552 = vunpack.c.l.b16 %v3292
    %v3553 = vunpack.c.l.b16 %v3293
    %v3554 = vunpack.c.l.b16 %v3294
    %v3555 = vunpack.c.l.b16 %v3295
    %v3556 = vunpack.c.l.b16 %v3296
    %v3557 = vunpack.c.l.b16 %v3297
    %v3558 = vunpack.c.l.b16 %v3298
    %v3559 = vunpack.c.l.b16 %v3299
    %v3560 = vunpack.c.l.b16 %v3300
    %v3561 = vunpack.c.l.b16 %v3301
    %v3562 = vunpack.c.l.b16 %v3302
    %v3563 = vunpack.c.l.b16 %v3303
    %v3564 = vunpack.c.l.b16 %v3304
    %v3565 = vunpack.c.l.b16 %v3305
    %v3566 = vunpack.c.l.b16 %v3306
    %v3567 = vunpack.c.l.b16 %v3307
    %v3568 = vunpack.c.l.b16 %v3308
    %v3569 = vunpack.c.l.b16 %v3309
    %v3570 = vunpack.c.l.b16 %v3310
    %v3571 = vunpack.c.l.b16 %v3311
    %v3572 = vunpack.c.l.b16 %v3312
    %v3573 = vunpack.c.l.b16 %v3313
    %v3574 = vunpack.c.l.b16 %v3314
    %v3575 = vunpack.c.l.b16 %v3315
    %v3576 = vunpack.c.l.b16 %v3316
    %v3577 = vunpack.c.l.b16 %v3317
    %v3578 = vunpack.c.l.b16 %v3318
    %v3579 = vunpack.c.l.b16 %v3319
    %v3580 = vunpack.c.l.b16 %v3320
    %v3581 = vunpack.c.l.b16 %v3321
    %v3582 = vunpack.c.l.b16 %v3322
    %v3583 = vunpack.c.l.b16 %v3323
    %v3584 = vunpack.c.l.b16 %v3324
    %v3585 = vunpack.c.l.b16 %v3325
    %v3586 = vunpack.c.l.b16 %v3326
    %v3587 = vunpack.c.l.b16 %v3327
    %v3588 = vunpack.c.l.b16 %v3328
    %v3589 = vunpack.c.l.b16 %v3329
    %v3590 = vunpack.c.l.b16 %v3330
    %v3591 = vunpack.c.l.b16 %v3331
    %v3592 = vunpack.c.l.b16 %v3332
    %v3593 = vunpack.c.l.b16 %v3333
    %v3594 = vunpack.c.l.b16 %v3334
    %v3595 = vunpack.c.l.b16 %v3335
    %v3596 = vunpack.c.l.b16 %v3336
    %v3597 = vunpack.c.l.b16 %v3337
    %v3598 = vunpack.c.l.b16 %v3338
    %v3599 = vunpack.c.l.b16 %v3339
    %v3600 = vunpack.c.l.b16 %v3340
    %v3601 = vunpack.c.l.b16 %v3341
    %v3602 = vunpack.c.l.b16 %v3342
    %v3603 = vunpack.c.l.b16 %v3343
    %v3604 = vunpack.c.l.b16 %v3344
    %v3605 = vunpack.c.l.b16 %v3345
    %v3606 = vunpack.c.l.b16 %v3346
    %v3607 = vunpack.c.l.b16 %v3347
    %v3608 = vunpack.c.l.b16 %v3348
    %v3609 = vunpack.c.l.b16 %v3349
    %v3610 = vunpack.c.l.b16 %v3350
    %v3611 = vunpack.c.l.b16 %v3351
    %v3612 = vunpack.c.l.b16 %v3352
    %v3613 = vunpack.c.l.b16 %v3353
    %v3614 = vpack.c.b16 %v3487, %v3486
    %v3615 = vpack.c.b16 %v3489, %v3488
    %v3616 = vpack.c.b16 %v3491, %v3490
    %v3617 = vpack.c.b16 %v3493, %v3492
    %v3618 = vpack.c.b16 %v3495, %v3494
    %v3619 = vpack.c.b16 %v3497, %v3496
    %v3620 = vpack.c.b16 %v3499, %v3498
    %v3621 = vpack.c.b16 %v3501, %v3500
    %v3622 = vpack.c.b16 %v3503, %v3502
    %v3623 = vpack.c.b16 %v3505, %v3504
    %v3624 = vpack.c.b16 %v3507, %v3506
    %v3625 = vpack.c.b16 %v3509, %v3508
    %v3626 = vpack.c.b16 %v3511, %v3510
    %v3627 = vpack.c.b16 %v3513, %v3512
    %v3628 = vpack.c.b16 %v3515, %v3514
    %v3629 = vpack.c.b16 %v3517, %v3516
    %v3630 = vpack.c.b16 %v3519, %v3518
    %v3631 = vpack.c.b16 %v3521, %v3520
    %v3632 = vpack.c.b16 %v3523, %v3522
    %v3633 = vpack.c.b16 %v3525, %v3524
    %v3634 = vpack.c.b16 %v3527, %v3526
    %v3635 = vpack.c.b16 %v3529, %v3528
    %v3636 = vpack.c.b16 %v3531, %v3530
    %v3637 = vpack.c.b16 %v3533, %v3532
    %v3638 = vpack.c.b16 %v3535, %v3534
    %v3639 = vpack.c.b16 %v3537, %v3536
    %v3640 = vpack.c.b16 %v3539, %v3538
    %v3641 = vpack.c.b16 %v3541, %v3540
    %v3642 = vpack.c.b16 %v3543, %v3542
    %v3643 = vpack.c.b16 %v3545, %v3544
    %v3644 = vpack.c.b16 %v3547, %v3546
    %v3645 = vpack.c.b16 %v3549, %v3548
    %v3646 = vpack.c.b16 %v3551, %v3550
    %v3647 = vpack.c.b16 %v3553, %v3552
    %v3648 = vpack.c.b16 %v3555, %v3554
    %v3649 = vpack.c.b16 %v3557, %v3556
    %v3650 = vpack.c.b16 %v3559, %v3558
    %v3651 = vpack.c.b16 %v3561, %v3560
    %v3652 = vpack.c.b16 %v3563, %v3562
    %v3653 = vpack.c.b16 %v3565, %v3564
    %v3654 = vpack.c.b16 %v3567, %v3566
    %v3655 = vpack.c.b16 %v3569, %v3568
    %v3656 = vpack.c.b16 %v3571, %v3570
    %v3657 = vpack.c.b16 %v3573, %v3572
    %v3658 = vpack.c.b16 %v3575, %v3574
    %v3659 = vpack.c.b16 %v3577, %v3576
    %v3660 = vpack.c.b16 %v3579, %v3578
    %v3661 = vpack.c.b16 %v3581, %v3580
    %v3662 = vpack.c.b16 %v3583, %v3582
    %v3663 = vpack.c.b16 %v3585, %v3584
    %v3664 = vpack.c.b16 %v3587, %v3586
    %v3665 = vpack.c.b16 %v3589, %v3588
    %v3666 = vpack.c.b16 %v3591, %v3590
    %v3667 = vpack.c.b16 %v3593, %v3592
    %v3668 = vpack.c.b16 %v3595, %v3594
    %v3669 = vpack.c.b16 %v3597, %v3596
    %v3670 = vpack.c.b16 %v3599, %v3598
    %v3671 = vpack.c.b16 %v3601, %v3600
    %v3672 = vpack.c.b16 %v3603, %v3602
    %v3673 = vpack.c.b16 %v3605, %v3604
    %v3674 = vpack.c.b16 %v3607, %v3606
    %v3675 = vpack.c.b16 %v3609, %v3608
    %v3676 = vpack.c.b16 %v3611, %v3610
    %v3677 = vpack.c.b16 %v3613, %v3612
    %3742 = vmatpush.bf16.msra.mxu0 %v3621
    %3743 = vmatpush.bf16.msra.mxu0 %v3620
    %3744 = vmatpush.bf16.msra.mxu0 %v3619
    %3745 = vmatpush.bf16.msra.mxu0 %v3618
    %3746 = vmatpush.bf16.msra.mxu0 %v3617
    %3747 = vmatpush.bf16.msra.mxu0 %v3616
    %3748 = vmatpush.bf16.msra.mxu0 %v3615
    %3749 = vmatpush.bf16.msra.mxu0 %v3614
    %3750 = vmatmul.bf16.gmra.mxu0 %v3218
    %v3751 = vpop.f32.mrf.mxu0
    %v3752 = vadd.f32 %v3356, %v3751
    %v3753 = vpop.f32.mrf.mxu0
    %3754 = vdwg.mxu0
    %3755 = vmatpush.bf16.msra.mxu0 %v3629
    %3756 = vmatpush.bf16.msra.mxu0 %v3628
    %3757 = vmatpush.bf16.msra.mxu0 %v3627
    %3758 = vmatpush.bf16.msra.mxu0 %v3626
    %3759 = vmatpush.bf16.msra.mxu0 %v3625
    %3760 = vmatpush.bf16.msra.mxu0 %v3624
    %3761 = vmatpush.bf16.msra.mxu0 %v3623
    %3762 = vmatpush.bf16.msra.mxu0 %v3622
    %3763 = vmatmul.bf16.gmra.mxu0 %v3219
    %v3764 = vpop.f32.mrf.mxu0
    %v3765 = vadd.f32 %v3752, %v3764
    %v3766 = vpop.f32.mrf.mxu0
    %3767 = vdwg.mxu0
    %3768 = vmatpush.bf16.msra.mxu0 %v3637
    %3769 = vmatpush.bf16.msra.mxu0 %v3636
    %3770 = vmatpush.bf16.msra.mxu0 %v3635
    %3771 = vmatpush.bf16.msra.mxu0 %v3634
    %3772 = vmatpush.bf16.msra.mxu0 %v3633
    %3773 = vmatpush.bf16.msra.mxu0 %v3632
    %3774 = vmatpush.bf16.msra.mxu0 %v3631
    %3775 = vmatpush.bf16.msra.mxu0 %v3630
    %3776 = vmatmul.bf16.gmra.mxu0 %v3220
    %v3777 = vpop.f32.mrf.mxu0
    %v3778 = vadd.f32 %v3765, %v3777
    %v3779 = vpop.f32.mrf.mxu0
    %3780 = vdwg.mxu0
    %3781 = vmatpush.bf16.msra.mxu0 %v3645
    %3782 = vmatpush.bf16.msra.mxu0 %v3644
    %3783 = vmatpush.bf16.msra.mxu0 %v3643
    %3784 = vmatpush.bf16.msra.mxu0 %v3642
    %3785 = vmatpush.bf16.msra.mxu0 %v3641
    %3786 = vmatpush.bf16.msra.mxu0 %v3640
    %3787 = vmatpush.bf16.msra.mxu0 %v3639
    %3788 = vmatpush.bf16.msra.mxu0 %v3638
    %3789 = vmatmul.bf16.gmra.mxu0 %v3221
    %v3790 = vpop.f32.mrf.mxu0
    %v3791 = vadd.f32 %v3778, %v3790
    %v3792 = vpop.f32.mrf.mxu0
    %3793 = vdwg.mxu0
    %3794 = vmatpush.bf16.msra.mxu0 %v3653
    %3795 = vmatpush.bf16.msra.mxu0 %v3652
    %3796 = vmatpush.bf16.msra.mxu0 %v3651
    %3797 = vmatpush.bf16.msra.mxu0 %v3650
    %3798 = vmatpush.bf16.msra.mxu0 %v3649
    %3799 = vmatpush.bf16.msra.mxu0 %v3648
    %3800 = vmatpush.bf16.msra.mxu0 %v3647
    %3801 = vmatpush.bf16.msra.mxu0 %v3646
    %3802 = vmatmul.bf16.gmra.mxu0 %v3222
    %v3803 = vpop.f32.mrf.mxu0
    %v3804 = vadd.f32 %v3791, %v3803
    %v3805 = vpop.f32.mrf.mxu0
    %3806 = vdwg.mxu0
    %3807 = vmatpush.bf16.msra.mxu0 %v3661
    %3808 = vmatpush.bf16.msra.mxu0 %v3660
    %3809 = vmatpush.bf16.msra.mxu0 %v3659
    %3810 = vmatpush.bf16.msra.mxu0 %v3658
    %3811 = vmatpush.bf16.msra.mxu0 %v3657
    %3812 = vmatpush.bf16.msra.mxu0 %v3656
    %3813 = vmatpush.bf16.msra.mxu0 %v3655
    %3814 = vmatpush.bf16.msra.mxu0 %v3654
    %3815 = vmatmul.bf16.gmra.mxu0 %v3223
    %v3816 = vpop.f32.mrf.mxu0
    %v3817 = vadd.f32 %v3804, %v3816
    %v3818 = vpop.f32.mrf.mxu0
    %3819 = vdwg.mxu0
    %3820 = vmatpush.bf16.msra.mxu0 %v3669
    %3821 = vmatpush.bf16.msra.mxu0 %v3668
    %3822 = vmatpush.bf16.msra.mxu0 %v3667
    %3823 = vmatpush.bf16.msra.mxu0 %v3666
    %3824 = vmatpush.bf16.msra.mxu0 %v3665
    %3825 = vmatpush.bf16.msra.mxu0 %v3664
    %3826 = vmatpush.bf16.msra.mxu0 %v3663
    %3827 = vmatpush.bf16.msra.mxu0 %v3662
    %3828 = vmatmul.bf16.gmra.mxu0 %v3224
    %v3829 = vpop.f32.mrf.mxu0
    %v3830 = vadd.f32 %v3817, %v3829
    %v3831 = vpop.f32.mrf.mxu0
    %3832 = vdwg.mxu0
    %3833 = vmatpush.bf16.msra.mxu0 %v3677
    %3834 = vmatpush.bf16.msra.mxu0 %v3676
    %3835 = vmatpush.bf16.msra.mxu0 %v3675
    %3836 = vmatpush.bf16.msra.mxu0 %v3674
    %3837 = vmatpush.bf16.msra.mxu0 %v3673
    %3838 = vmatpush.bf16.msra.mxu0 %v3672
    %3839 = vmatpush.bf16.msra.mxu0 %v3671
    %3840 = vmatpush.bf16.msra.mxu0 %v3670
    %3841 = vmatmul.bf16.gmra.mxu0 %v3225
    %v3842 = vpop.f32.mrf.mxu0
    %v3843 = vadd.f32 %v3830, %v3842
    %v3844 = vpop.f32.mrf.mxu0
    %3845 = vdwg.mxu0
    %v3846 = vlaneseq
    %v3847 = vand.u32 %v3846, 127
    %vm3848 = vcmp.lt.s32.totalorder %v3847, 10
    %v3849 = vsel %vm3848, %v3843, -inf
    %3850 = vmax.xlane.f32.xlu0 %v3849
    %v3851 = vpop.xlane.xlu0 %3850
    %v3852 = vsub.f32 %v3849, %v3851
    %v3853 = vmul.f32 %v3852, 1.442695
    %v3854 = vpow.pop %v3853
    %3855 = vadd.xlane.f32.xlu0 %v3854
    %v3856 = vpop.xlane.xlu0 %3855
    %v3857 = vrcp.pop %v3856
    %v3858 = vmul.f32 %v3854, %v3857
    %3859 = vst [vmem:[#allocation11] sm:$0xff] %v3858
    // Predicated region
    $region42: #{_forward.1} parent=1 // pred_check
      _
    $region43: #{_forward.1} parent=1 // pred_check_branch
      %3861 = sbr.rel (0) target = $region45
    $region44: #{_forward.1} parent=1 // pred_region
      %3863 = vsyncadd [#allocation4], 0
      %s3865 = sshll.u32 [#allocation11], 4
      %s3866 = int_to_ptr.vmem [resolvable:$true] %s3865
      %s3867 = sshll.u32 %s5, 4
      %s3868 = int_to_ptr.hbm [resolvable:$true] %s3867
      %3870 = dma.vmem_to_hbm [thread:$0]  %s3866, 128, %s3868, [#allocation4]
    $region45: #{_forward.1} parent=1 // pred_fallthru
      _
    // Predicated region
    $region46: #{_forward.1} parent=1 // pred_check
      _
    $region47: #{_forward.1} parent=1 // pred_check_branch
      %3872 = sbr.rel (0) target = $region49
    $region48: #{_forward.1} parent=1 // pred_region
      %3874 = dma.done [#allocation4], 128
    $region49: #{_forward.1} parent=1 // pred_fallthru
      _
    %3875 = vsyncpa [#allocation3], 1
    %3876 = vsyncpa [#allocation6], 1
    %3877 = vsyncpa [#allocation9], 1
    %3878 = vsyncpa [#allocation4], 1

// kernel: _forward.1
$region0: #{_forward.1}
  #allocation0 [shape = 'u32[]', space=smem, size = 0x4, offset = 0x4, fixed_abs, tag = 'smem constant byte address 0x4 - core index']
  #allocation1 [shape = 'u32[72,128]{1,0:T(1,128)}', space=vmem, size = 0x9000, scoped, tag = 'internal scratch']
  %s0 = inlined_call_operand.hbm [shape: f32[8,784], index: 0, kind: input, shape index: {}]
  %s1 = inlined_call_operand.hbm [shape: bf16[784,1024], index: 1, kind: input, shape index: {}]
  %s2 = inlined_call_operand.hbm [shape: f32[1,1024], index: 2, kind: input, shape index: {}]
  %s3 = inlined_call_operand.hbm [shape: bf16[1024,128], index: 3, kind: input, shape index: {}]
  %s4 = inlined_call_operand.hbm [shape: f32[1,128], index: 4, kind: input, shape index: {}]
  %s5 = inlined_call_operand.hbm [shape: f32[8,128], index: 5, kind: output, shape index: {}]
  %s6 = sld [smem:[#allocation0]]
  $region50: #{_forward.1} parent=0
    _
  %s8 = ssub.s32 1, %s6
  %s9 = scalar_select 0, %s8, %s6
  $region1: #{_forward.1} parent=0
    #allocation2 [shape = 'u8[28672]{0}', space=vmem, size = 0x7000, scoped, tag = 'input window, operand 0, single buffered']
    #allocation3 [shape = 's32[1]{0}', space=sflag, size = 0x4, scoped, tag = 'scoped memory for _forward.1']
    #allocation4 [shape = 's32[1]{0}', space=sflag, size = 0x4, scoped, tag = 'scoped memory for _forward.1']
    #allocation5 [shape = 'u8[1605632]{0}', space=vmem, size = 0x188000, scoped, tag = 'input window, operand 1, single buffered']
    #allocation6 [shape = 's32[1]{0}', space=sflag, size = 0x4, scoped, tag = 'scoped memory for _forward.1']
    #allocation7 [shape = 'u8[4096]{0}', space=vmem, size = 0x1000, scoped, tag = 'input window, operand 2, single buffered']
    #allocation8 [shape = 'u8[262144]{0}', space=vmem, size = 0x40000, scoped, tag = 'input window, operand 3, single buffered']
    #allocation9 [shape = 's32[1]{0}', space=sflag, size = 0x4, scoped, tag = 'scoped memory for _forward.1']
    #allocation10 [shape = 'u8[512]{0}', space=vmem, size = 0x400, scoped, tag = 'input window, operand 4, single buffered']
    #allocation11 [shape = 'u8[4096]{0}', space=vmem, size = 0x1000, scoped, tag = 'output window, operand 0, single buffered']
    %10 = vsyncpa [#allocation3], 0
    %11 = vsyncpa [#allocation6], 0
    %12 = vsyncpa [#allocation9], 0
    %13 = vsyncpa [#allocation4], 0
    // Predicated region
    $region2: #{_forward.1} parent=1 // pred_check
      _
    $region3: #{_forward.1} parent=1 // pred_check_branch
      %15 = sbr.rel (0) target = $region5
    $region4: #{_forward.1} parent=1 // pred_region
      %17 = vsyncadd [#allocation3], 0
      %s19 = sshll.u32 %s0, 4
      %s20 = int_to_ptr.hbm [resolvable:$true] %s19
      %s21 = sshll.u32 [#allocation2], 4
      %s22 = int_to_ptr.vmem [resolvable:$true] %s21
      %24 = dma.hbm_to_vmem [thread:$0]  %s20, 896, %s22, [#allocation3]
    $region5: #{_forward.1} parent=1 // pred_fallthru
      _
    // Predicated region
    $region6: #{_forward.1} parent=1 // pred_check
      _
    $region7: #{_forward.1} parent=1 // pred_check_branch
      %26 = sbr.rel (0) target = $region9
    $region8: #{_forward.1} parent=1 // pred_region
      %28 = vsyncadd [#allocation6], 0
      %s29 = sshll.u32 %s1, 4
      %s30 = int_to_ptr.hbm [resolvable:$true] %s29
      %s31 = sshll.u32 [#allocation5], 4
      %s32 = int_to_ptr.vmem [resolvable:$true] %s31
      %37 = dma.hbm_to_vmem [thread:$0]  %s30, 50176, %s32, [#allocation6], 512, 512, 32
    $region9: #{_forward.1} parent=1 // pred_fallthru
      _
    // Predicated region
    $region10: #{_forward.1} parent=1 // pred_check
      _
    $region11: #{_forward.1} parent=1 // pred_check_branch
      %39 = sbr.rel (0) target = $region13
    $region12: #{_forward.1} parent=1 // pred_region
      %41 = vsyncadd [#allocation6], 0
      %s43 = sshll.u32 %s2, 4
      %s44 = int_to_ptr.hbm [resolvable:$true] %s43
      %s45 = sshll.u32 [#allocation7], 4
      %s46 = int_to_ptr.vmem [resolvable:$true] %s45
      %48 = dma.hbm_to_vmem [thread:$0]  %s44, 128, %s46, [#allocation6]
    $region13: #{_forward.1} parent=1 // pred_fallthru
      _
    // Predicated region
    $region14: #{_forward.1} parent=1 // pred_check
      _
    $region15: #{_forward.1} parent=1 // pred_check_branch
      %50 = sbr.rel (0) target = $region17
    $region16: #{_forward.1} parent=1 // pred_region
      %52 = vsyncadd [#allocation9], 0
      %s53 = sshll.u32 %s3, 4
      %s54 = int_to_ptr.hbm [resolvable:$true] %s53
      %s55 = sshll.u32 [#allocation8], 4
      %s56 = int_to_ptr.vmem [resolvable:$true] %s55
      %61 = dma.hbm_to_vmem [thread:$0]  %s54, 8192, %s56, [#allocation9], 64, 64, 4
    $region17: #{_forward.1} parent=1 // pred_fallthru
      _
    // Predicated region
    $region18: #{_forward.1} parent=1 // pred_check
      _
    $region19: #{_forward.1} parent=1 // pred_check_branch
      %63 = sbr.rel (0) target = $region21
    $region20: #{_forward.1} parent=1 // pred_region
      %65 = vsyncadd [#allocation9], 0
      %s67 = sshll.u32 %s4, 4
      %s68 = int_to_ptr.hbm [resolvable:$true] %s67
      %s69 = sshll.u32 [#allocation10], 4
      %s70 = int_to_ptr.vmem [resolvable:$true] %s69
      %72 = dma.hbm_to_vmem [thread:$0]  %s68, 16, %s70, [#allocation9]
    $region21: #{_forward.1} parent=1 // pred_fallthru
      _
    // Predicated region
    $region22: #{_forward.1} parent=1 // pred_check
      _
    $region23: #{_forward.1} parent=1 // pred_check_branch
      %74 = sbr.rel (0) target = $region25
    $region24: #{_forward.1} parent=1 // pred_region
      %76 = dma.done [#allocation3], 896
    $region25: #{_forward.1} parent=1 // pred_fallthru
      _
    // Predicated region
    $region26: #{_forward.1} parent=1 // pred_check
      _
    $region27: #{_forward.1} parent=1 // pred_check_branch
      %78 = sbr.rel (0) target = $region29
    $region28: #{_forward.1} parent=1 // pred_region
      %80 = dma.done [#allocation6], 50176
    $region29: #{_forward.1} parent=1 // pred_fallthru
      _
    // Predicated region
    $region30: #{_forward.1} parent=1 // pred_check
      _
    $region31: #{_forward.1} parent=1 // pred_check_branch
      %82 = sbr.rel (0) target = $region33
    $region32: #{_forward.1} parent=1 // pred_region
      %84 = dma.done [#allocation6], 128
    $region33: #{_forward.1} parent=1 // pred_fallthru
      _
    // Predicated region
    $region34: #{_forward.1} parent=1 // pred_check
      _
    $region35: #{_forward.1} parent=1 // pred_check_branch
      %86 = sbr.rel (0) target = $region37
    $region36: #{_forward.1} parent=1 // pred_region
      %88 = dma.done [#allocation9], 8192
    $region37: #{_forward.1} parent=1 // pred_fallthru
      _
    // Predicated region
    $region38: #{_forward.1} parent=1 // pred_check
      _
    $region39: #{_forward.1} parent=1 // pred_check_branch
      %90 = sbr.rel (0) target = $region41
    $region40: #{_forward.1} parent=1 // pred_region
      %92 = dma.done [#allocation9], 16
    $region41: #{_forward.1} parent=1 // pred_fallthru
      _
    %v94 = vld [vmem:[#allocation2] sm:$0xff]
    %v95 = vld [vmem:[#allocation2 + $0x8] sm:$0xff]
    %v96 = vld [vmem:[#allocation2 + $0x10] sm:$0xff]
    %v97 = vld [vmem:[#allocation2 + $0x18] sm:$0xff]
    %v98 = vld [vmem:[#allocation2 + $0x20] sm:$0xff]
    %v99 = vld [vmem:[#allocation2 + $0x28] sm:$0xff]
    %v100 = vld [vmem:[#allocation2 + $0x30] sm:$0xff]
    %v101 = vpack.c.bf16 %v94, %v94
    %v102 = vpack.c.bf16 %v95, %v95
    %v103 = vpack.c.bf16 %v96, %v96
    %v104 = vpack.c.bf16 %v97, %v97
    %v105 = vpack.c.bf16 %v98, %v98
    %v106 = vpack.c.bf16 %v99, %v99
    %v107 = vpack.c.bf16 %v100, %v100
    %v108 = vld [vmem:[#allocation5] sm:$0xff]
    %v109 = vld [vmem:[#allocation5 + $0x8] sm:$0xff]
    %v110 = vld [vmem:[#allocation5 + $0x10] sm:$0xff]
    %v111 = vld [vmem:[#allocation5 + $0x18] sm:$0xff]
    %v112 = vld [vmem:[#allocation5 + $0x20] sm:$0xff]
    %v113 = vld [vmem:[#allocation5 + $0x28] sm:$0xff]
    %v114 = vld [vmem:[#allocation5 + $0x30] sm:$0xff]
    %v115 = vld [vmem:[#allocation5 + $0x38] sm:$0xff]
    %v116 = vld [vmem:[#allocation5 + $0x40] sm:$0xff]
    %v117 = vld [vmem:[#allocation5 + $0x48] sm:$0xff]
    %v118 = vld [vmem:[#allocation5 + $0x50] sm:$0xff]
    %v119 = vld [vmem:[#allocation5 + $0x58] sm:$0xff]
    %v120 = vld [vmem:[#allocation5 + $0x60] sm:$0xff]
    %v121 = vld [vmem:[#allocation5 + $0x68] sm:$0xff]
    %v122 = vld [vmem:[#allocation5 + $0x70] sm:$0xff]
    %v123 = vld [vmem:[#allocation5 + $0x78] sm:$0xff]
    %v124 = vld [vmem:[#allocation5 + $0x80] sm:$0xff]
    %v125 = vld [vmem:[#allocation5 + $0x88] sm:$0xff]
    %v126 = vld [vmem:[#allocation5 + $0x90] sm:$0xff]
    %v127 = vld [vmem:[#allocation5 + $0x98] sm:$0xff]
    %v128 = vld [vmem:[#allocation5 + $0xa0] sm:$0xff]
    %v129 = vld [vmem:[#allocation5 + $0xa8] sm:$0xff]
    %v130 = vld [vmem:[#allocation5 + $0xb0] sm:$0xff]
    %v131 = vld [vmem:[#allocation5 + $0xb8] sm:$0xff]
    %v132 = vld [vmem:[#allocation5 + $0xc0] sm:$0xff]
    %v133 = vld [vmem:[#allocation5 + $0xc8] sm:$0xff]
    %v134 = vld [vmem:[#allocation5 + $0xd0] sm:$0xff]
    %v135 = vld [vmem:[#allocation5 + $0xd8] sm:$0xff]
    %v136 = vld [vmem:[#allocation5 + $0xe0] sm:$0xff]
    %v137 = vld [vmem:[#allocation5 + $0xe8] sm:$0xff]
    %v138 = vld [vmem:[#allocation5 + $0xf0] sm:$0xff]
    %v139 = vld [vmem:[#allocation5 + $0xf8] sm:$0xff]
    %v140 = vld [vmem:[#allocation5 + $0x100] sm:$0xff]
    %v141 = vld [vmem:[#allocation5 + $0x108] sm:$0xff]
    %v142 = vld [vmem:[#allocation5 + $0x110] sm:$0xff]
    %v143 = vld [vmem:[#allocation5 + $0x118] sm:$0xff]
    %v144 = vld [vmem:[#allocation5 + $0x120] sm:$0xff]
    %v145 = vld [vmem:[#allocation5 + $0x128] sm:$0xff]
    %v146 = vld [vmem:[#allocation5 + $0x130] sm:$0xff]
    %v147 = vld [vmem:[#allocation5 + $0x138] sm:$0xff]
    %v148 = vld [vmem:[#allocation5 + $0x140] sm:$0xff]
    %v149 = vld [vmem:[#allocation5 + $0x148] sm:$0xff]
    %v150 = vld [vmem:[#allocation5 + $0x150] sm:$0xff]
    %v151 = vld [vmem:[#allocation5 + $0x158] sm:$0xff]
    %v152 = vld [vmem:[#allocation5 + $0x160] sm:$0xff]
    %v153 = vld [vmem:[#allocation5 + $0x168] sm:$0xff]
    %v154 = vld [vmem:[#allocation5 + $0x170] sm:$0xff]
    %v155 = vld [vmem:[#allocation5 + $0x178] sm:$0xff]
    %v156 = vld [vmem:[#allocation5 + $0x180] sm:$0xff]
    %v157 = vld [vmem:[#allocation5 + $0x188] sm:$0xff]
    %v158 = vld [vmem:[#allocation5 + $0x190] sm:$0xff]
    %v159 = vld [vmem:[#allocation5 + $0x198] sm:$0xff]
    %v160 = vld [vmem:[#allocation5 + $0x1a0] sm:$0xff]
    %v161 = vld [vmem:[#allocation5 + $0x1a8] sm:$0xff]
    %v162 = vld [vmem:[#allocation5 + $0x1b0] sm:$0xff]
    %v163 = vld [vmem:[#allocation5 + $0x1b8] sm:$0xff]
    %v164 = vld [vmem:[#allocation5 + $0x1c0] sm:$0xff]
    %v165 = vld [vmem:[#allocation5 + $0x1c8] sm:$0xff]
    %v166 = vld [vmem:[#allocation5 + $0x1d0] sm:$0xff]
    %v167 = vld [vmem:[#allocation5 + $0x1d8] sm:$0xff]
    %v168 = vld [vmem:[#allocation5 + $0x1e0] sm:$0xff]
    %v169 = vld [vmem:[#allocation5 + $0x1e8] sm:$0xff]
    %v170 = vld [vmem:[#allocation5 + $0x1f0] sm:$0xff]
    %v171 = vld [vmem:[#allocation5 + $0x1f8] sm:$0xff]
    %v172 = vld [vmem:[#allocation5 + $0x200] sm:$0xff]
    %v173 = vld [vmem:[#allocation5 + $0x208] sm:$0xff]
    %v174 = vld [vmem:[#allocation5 + $0x210] sm:$0xff]
    %v175 = vld [vmem:[#allocation5 + $0x218] sm:$0xff]
    %v176 = vld [vmem:[#allocation5 + $0x220] sm:$0xff]
    %v177 = vld [vmem:[#allocation5 + $0x228] sm:$0xff]
    %v178 = vld [vmem:[#allocation5 + $0x230] sm:$0xff]
    %v179 = vld [vmem:[#allocation5 + $0x238] sm:$0xff]
    %v180 = vld [vmem:[#allocation5 + $0x240] sm:$0xff]
    %v181 = vld [vmem:[#allocation5 + $0x248] sm:$0xff]
    %v182 = vld [vmem:[#allocation5 + $0x250] sm:$0xff]
    %v183 = vld [vmem:[#allocation5 + $0x258] sm:$0xff]
    %v184 = vld [vmem:[#allocation5 + $0x260] sm:$0xff]
    %v185 = vld [vmem:[#allocation5 + $0x268] sm:$0xff]
    %v186 = vld [vmem:[#allocation5 + $0x270] sm:$0xff]
    %v187 = vld [vmem:[#allocation5 + $0x278] sm:$0xff]
    %v188 = vld [vmem:[#allocation5 + $0x280] sm:$0xff]
    %v189 = vld [vmem:[#allocation5 + $0x288] sm:$0xff]
    %v190 = vld [vmem:[#allocation5 + $0x290] sm:$0xff]
    %v191 = vld [vmem:[#allocation5 + $0x298] sm:$0xff]
    %v192 = vld [vmem:[#allocation5 + $0x2a0] sm:$0xff]
    %v193 = vld [vmem:[#allocation5 + $0x2a8] sm:$0xff]
    %v194 = vld [vmem:[#allocation5 + $0x2b0] sm:$0xff]
    %v195 = vld [vmem:[#allocation5 + $0x2b8] sm:$0xff]
    %v196 = vld [vmem:[#allocation5 + $0x2c0] sm:$0xff]
    %v197 = vld [vmem:[#allocation5 + $0x2c8] sm:$0xff]
    %v198 = vld [vmem:[#allocation5 + $0x2d0] sm:$0xff]
    %v199 = vld [vmem:[#allocation5 + $0x2d8] sm:$0xff]
    %v200 = vld [vmem:[#allocation5 + $0x2e0] sm:$0xff]
    %v201 = vld [vmem:[#allocation5 + $0x2e8] sm:$0xff]
    %v202 = vld [vmem:[#allocation5 + $0x2f0] sm:$0xff]
    %v203 = vld [vmem:[#allocation5 + $0x2f8] sm:$0xff]
    %v204 = vld [vmem:[#allocation5 + $0x300] sm:$0xff]
    %v205 = vld [vmem:[#allocation5 + $0x308] sm:$0xff]
    %v206 = vld [vmem:[#allocation5 + $0x310] sm:$0xff]
    %v207 = vld [vmem:[#allocation5 + $0x318] sm:$0xff]
    %v208 = vld [vmem:[#allocation5 + $0x320] sm:$0xff]
    %v209 = vld [vmem:[#allocation5 + $0x328] sm:$0xff]
    %v210 = vld [vmem:[#allocation5 + $0x330] sm:$0xff]
    %v211 = vld [vmem:[#allocation5 + $0x338] sm:$0xff]
    %v212 = vld [vmem:[#allocation5 + $0x340] sm:$0xff]
    %v213 = vld [vmem:[#allocation5 + $0x348] sm:$0xff]
    %v214 = vld [vmem:[#allocation5 + $0x350] sm:$0xff]
    %v215 = vld [vmem:[#allocation5 + $0x358] sm:$0xff]
    %v216 = vld [vmem:[#allocation5 + $0x360] sm:$0xff]
    %v217 = vld [vmem:[#allocation5 + $0x368] sm:$0xff]
    %v218 = vld [vmem:[#allocation5 + $0x370] sm:$0xff]
    %v219 = vld [vmem:[#allocation5 + $0x378] sm:$0xff]
    %v220 = vld [vmem:[#allocation5 + $0x380] sm:$0xff]
    %v221 = vld [vmem:[#allocation5 + $0x388] sm:$0xff]
    %v222 = vld [vmem:[#allocation5 + $0x390] sm:$0xff]
    %v223 = vld [vmem:[#allocation5 + $0x398] sm:$0xff]
    %v224 = vld [vmem:[#allocation5 + $0x3a0] sm:$0xff]
    %v225 = vld [vmem:[#allocation5 + $0x3a8] sm:$0xff]
    %v226 = vld [vmem:[#allocation5 + $0x3b0] sm:$0xff]
    %v227 = vld [vmem:[#allocation5 + $0x3b8] sm:$0xff]
    %v228 = vld [vmem:[#allocation5 + $0x3c0] sm:$0xff]
    %v229 = vld [vmem:[#allocation5 + $0x3c8] sm:$0xff]
    %v230 = vld [vmem:[#allocation5 + $0x3d0] sm:$0xff]
    %v231 = vld [vmem:[#allocation5 + $0x3d8] sm:$0xff]
    %v232 = vld [vmem:[#allocation5 + $0x3e0] sm:$0xff]
    %v233 = vld [vmem:[#allocation5 + $0x3e8] sm:$0xff]
    %v234 = vld [vmem:[#allocation5 + $0x3f0] sm:$0xff]
    %v235 = vld [vmem:[#allocation5 + $0x3f8] sm:$0xff]
    %v236 = vld [vmem:[#allocation5 + $0x400] sm:$0xff]
    %v237 = vld [vmem:[#allocation5 + $0x408] sm:$0xff]
    %v238 = vld [vmem:[#allocation5 + $0x410] sm:$0xff]
    %v239 = vld [vmem:[#allocation5 + $0x418] sm:$0xff]
    %v240 = vld [vmem:[#allocation5 + $0x420] sm:$0xff]
    %v241 = vld [vmem:[#allocation5 + $0x428] sm:$0xff]
    %v242 = vld [vmem:[#allocation5 + $0x430] sm:$0xff]
    %v243 = vld [vmem:[#allocation5 + $0x438] sm:$0xff]
    %v244 = vld [vmem:[#allocation5 + $0x440] sm:$0xff]
    %v245 = vld [vmem:[#allocation5 + $0x448] sm:$0xff]
    %v246 = vld [vmem:[#allocation5 + $0x450] sm:$0xff]
    %v247 = vld [vmem:[#allocation5 + $0x458] sm:$0xff]
    %v248 = vld [vmem:[#allocation5 + $0x460] sm:$0xff]
    %v249 = vld [vmem:[#allocation5 + $0x468] sm:$0xff]
    %v250 = vld [vmem:[#allocation5 + $0x470] sm:$0xff]
    %v251 = vld [vmem:[#allocation5 + $0x478] sm:$0xff]
    %v252 = vld [vmem:[#allocation5 + $0x480] sm:$0xff]
    %v253 = vld [vmem:[#allocation5 + $0x488] sm:$0xff]
    %v254 = vld [vmem:[#allocation5 + $0x490] sm:$0xff]
    %v255 = vld [vmem:[#allocation5 + $0x498] sm:$0xff]
    %v256 = vld [vmem:[#allocation5 + $0x4a0] sm:$0xff]
    %v257 = vld [vmem:[#allocation5 + $0x4a8] sm:$0xff]
    %v258 = vld [vmem:[#allocation5 + $0x4b0] sm:$0xff]
    %v259 = vld [vmem:[#allocation5 + $0x4b8] sm:$0xff]
    %v260 = vld [vmem:[#allocation5 + $0x4c0] sm:$0xff]
    %v261 = vld [vmem:[#allocation5 + $0x4c8] sm:$0xff]
    %v262 = vld [vmem:[#allocation5 + $0x4d0] sm:$0xff]
    %v263 = vld [vmem:[#allocation5 + $0x4d8] sm:$0xff]
    %v264 = vld [vmem:[#allocation5 + $0x4e0] sm:$0xff]
    %v265 = vld [vmem:[#allocation5 + $0x4e8] sm:$0xff]
    %v266 = vld [vmem:[#allocation5 + $0x4f0] sm:$0xff]
    %v267 = vld [vmem:[#allocation5 + $0x4f8] sm:$0xff]
    %v268 = vld [vmem:[#allocation5 + $0x500] sm:$0xff]
    %v269 = vld [vmem:[#allocation5 + $0x508] sm:$0xff]
    %v270 = vld [vmem:[#allocation5 + $0x510] sm:$0xff]
    %v271 = vld [vmem:[#allocation5 + $0x518] sm:$0xff]
    %v272 = vld [vmem:[#allocation5 + $0x520] sm:$0xff]
    %v273 = vld [vmem:[#allocation5 + $0x528] sm:$0xff]
    %v274 = vld [vmem:[#allocation5 + $0x530] sm:$0xff]
    %v275 = vld [vmem:[#allocation5 + $0x538] sm:$0xff]
    %v276 = vld [vmem:[#allocation5 + $0x540] sm:$0xff]
    %v277 = vld [vmem:[#allocation5 + $0x548] sm:$0xff]
    %v278 = vld [vmem:[#allocation5 + $0x550] sm:$0xff]
    %v279 = vld [vmem:[#allocation5 + $0x558] sm:$0xff]
    %v280 = vld [vmem:[#allocation5 + $0x560] sm:$0xff]
    %v281 = vld [vmem:[#allocation5 + $0x568] sm:$0xff]
    %v282 = vld [vmem:[#allocation5 + $0x570] sm:$0xff]
    %v283 = vld [vmem:[#allocation5 + $0x578] sm:$0xff]
    %v284 = vld [vmem:[#allocation5 + $0x580] sm:$0xff]
    %v285 = vld [vmem:[#allocation5 + $0x588] sm:$0xff]
    %v286 = vld [vmem:[#allocation5 + $0x590] sm:$0xff]
    %v287 = vld [vmem:[#allocation5 + $0x598] sm:$0xff]
    %v288 = vld [vmem:[#allocation5 + $0x5a0] sm:$0xff]
    %v289 = vld [vmem:[#allocation5 + $0x5a8] sm:$0xff]
    %v290 = vld [vmem:[#allocation5 + $0x5b0] sm:$0xff]
    %v291 = vld [vmem:[#allocation5 + $0x5b8] sm:$0xff]
    %v292 = vld [vmem:[#allocation5 + $0x5c0] sm:$0xff]
    %v293 = vld [vmem:[#allocation5 + $0x5c8] sm:$0xff]
    %v294 = vld [vmem:[#allocation5 + $0x5d0] sm:$0xff]
    %v295 = vld [vmem:[#allocation5 + $0x5d8] sm:$0xff]
    %v296 = vld [vmem:[#allocation5 + $0x5e0] sm:$0xff]
    %v297 = vld [vmem:[#allocation5 + $0x5e8] sm:$0xff]
    %v298 = vld [vmem:[#allocation5 + $0x5f0] sm:$0xff]
    %v299 = vld [vmem:[#allocation5 + $0x5f8] sm:$0xff]
    %v300 = vld [vmem:[#allocation5 + $0x600] sm:$0xff]
    %v301 = vld [vmem:[#allocation5 + $0x608] sm:$0xff]
    %v302 = vld [vmem:[#allocation5 + $0x610] sm:$0xff]
    %v303 = vld [vmem:[#allocation5 + $0x618] sm:$0xff]
    %v304 = vld [vmem:[#allocation5 + $0x620] sm:$0xff]
    %v305 = vld [vmem:[#allocation5 + $0x628] sm:$0xff]
    %v306 = vld [vmem:[#allocation5 + $0x630] sm:$0xff]
    %v307 = vld [vmem:[#allocation5 + $0x638] sm:$0xff]
    %v308 = vld [vmem:[#allocation5 + $0x640] sm:$0xff]
    %v309 = vld [vmem:[#allocation5 + $0x648] sm:$0xff]
    %v310 = vld [vmem:[#allocation5 + $0x650] sm:$0xff]
    %v311 = vld [vmem:[#allocation5 + $0x658] sm:$0xff]
    %v312 = vld [vmem:[#allocation5 + $0x660] sm:$0xff]
    %v313 = vld [vmem:[#allocation5 + $0x668] sm:$0xff]
    %v314 = vld [vmem:[#allocation5 + $0x670] sm:$0xff]
    %v315 = vld [vmem:[#allocation5 + $0x678] sm:$0xff]
    %v316 = vld [vmem:[#allocation5 + $0x680] sm:$0xff]
    %v317 = vld [vmem:[#allocation5 + $0x688] sm:$0xff]
    %v318 = vld [vmem:[#allocation5 + $0x690] sm:$0xff]
    %v319 = vld [vmem:[#allocation5 + $0x698] sm:$0xff]
    %v320 = vld [vmem:[#allocation5 + $0x6a0] sm:$0xff]
    %v321 = vld [vmem:[#allocation5 + $0x6a8] sm:$0xff]
    %v322 = vld [vmem:[#allocation5 + $0x6b0] sm:$0xff]
    %v323 = vld [vmem:[#allocation5 + $0x6b8] sm:$0xff]
    %v324 = vld [vmem:[#allocation5 + $0x6c0] sm:$0xff]
    %v325 = vld [vmem:[#allocation5 + $0x6c8] sm:$0xff]
    %v326 = vld [vmem:[#allocation5 + $0x6d0] sm:$0xff]
    %v327 = vld [vmem:[#allocation5 + $0x6d8] sm:$0xff]
    %v328 = vld [vmem:[#allocation5 + $0x6e0] sm:$0xff]
    %v329 = vld [vmem:[#allocation5 + $0x6e8] sm:$0xff]
    %v330 = vld [vmem:[#allocation5 + $0x6f0] sm:$0xff]
    %v331 = vld [vmem:[#allocation5 + $0x6f8] sm:$0xff]
    %v332 = vld [vmem:[#allocation5 + $0x700] sm:$0xff]
    %v333 = vld [vmem:[#allocation5 + $0x708] sm:$0xff]
    %v334 = vld [vmem:[#allocation5 + $0x710] sm:$0xff]
    %v335 = vld [vmem:[#allocation5 + $0x718] sm:$0xff]
    %v336 = vld [vmem:[#allocation5 + $0x720] sm:$0xff]
    %v337 = vld [vmem:[#allocation5 + $0x728] sm:$0xff]
    %v338 = vld [vmem:[#allocation5 + $0x730] sm:$0xff]
    %v339 = vld [vmem:[#allocation5 + $0x738] sm:$0xff]
    %v340 = vld [vmem:[#allocation5 + $0x740] sm:$0xff]
    %v341 = vld [vmem:[#allocation5 + $0x748] sm:$0xff]
    %v342 = vld [vmem:[#allocation5 + $0x750] sm:$0xff]
    %v343 = vld [vmem:[#allocation5 + $0x758] sm:$0xff]
    %v344 = vld [vmem:[#allocation5 + $0x760] sm:$0xff]
    %v345 = vld [vmem:[#allocation5 + $0x768] sm:$0xff]
    %v346 = vld [vmem:[#allocation5 + $0x770] sm:$0xff]
    %v347 = vld [vmem:[#allocation5 + $0x778] sm:$0xff]
    %v348 = vld [vmem:[#allocation5 + $0x780] sm:$0xff]
    %v349 = vld [vmem:[#allocation5 + $0x788] sm:$0xff]
    %v350 = vld [vmem:[#allocation5 + $0x790] sm:$0xff]
    %v351 = vld [vmem:[#allocation5 + $0x798] sm:$0xff]
    %v352 = vld [vmem:[#allocation5 + $0x7a0] sm:$0xff]
    %v353 = vld [vmem:[#allocation5 + $0x7a8] sm:$0xff]
    %v354 = vld [vmem:[#allocation5 + $0x7b0] sm:$0xff]
    %v355 = vld [vmem:[#allocation5 + $0x7b8] sm:$0xff]
    %v356 = vld [vmem:[#allocation5 + $0x7c0] sm:$0xff]
    %v357 = vld [vmem:[#allocation5 + $0x7c8] sm:$0xff]
    %v358 = vld [vmem:[#allocation5 + $0x7d0] sm:$0xff]
    %v359 = vld [vmem:[#allocation5 + $0x7d8] sm:$0xff]
    %v360 = vld [vmem:[#allocation5 + $0x7e0] sm:$0xff]
    %v361 = vld [vmem:[#allocation5 + $0x7e8] sm:$0xff]
    %v362 = vld [vmem:[#allocation5 + $0x7f0] sm:$0xff]
    %v363 = vld [vmem:[#allocation5 + $0x7f8] sm:$0xff]
    %v364 = vld [vmem:[#allocation5 + $0x800] sm:$0xff]
    %v365 = vld [vmem:[#allocation5 + $0x808] sm:$0xff]
    %v366 = vld [vmem:[#allocation5 + $0x810] sm:$0xff]
    %v367 = vld [vmem:[#allocation5 + $0x818] sm:$0xff]
    %v368 = vld [vmem:[#allocation5 + $0x820] sm:$0xff]
    %v369 = vld [vmem:[#allocation5 + $0x828] sm:$0xff]
    %v370 = vld [vmem:[#allocation5 + $0x830] sm:$0xff]
    %v371 = vld [vmem:[#allocation5 + $0x838] sm:$0xff]
    %v372 = vld [vmem:[#allocation5 + $0x840] sm:$0xff]
    %v373 = vld [vmem:[#allocation5 + $0x848] sm:$0xff]
    %v374 = vld [vmem:[#allocation5 + $0x850] sm:$0xff]
    %v375 = vld [vmem:[#allocation5 + $0x858] sm:$0xff]
    %v376 = vld [vmem:[#allocation5 + $0x860] sm:$0xff]
    %v377 = vld [vmem:[#allocation5 + $0x868] sm:$0xff]
    %v378 = vld [vmem:[#allocation5 + $0x870] sm:$0xff]
    %v379 = vld [vmem:[#allocation5 + $0x878] sm:$0xff]
    %v380 = vld [vmem:[#allocation5 + $0x880] sm:$0xff]
    %v381 = vld [vmem:[#allocation5 + $0x888] sm:$0xff]
    %v382 = vld [vmem:[#allocation5 + $0x890] sm:$0xff]
    %v383 = vld [vmem:[#allocation5 + $0x898] sm:$0xff]
    %v384 = vld [vmem:[#allocation5 + $0x8a0] sm:$0xff]
    %v385 = vld [vmem:[#allocation5 + $0x8a8] sm:$0xff]
    %v386 = vld [vmem:[#allocation5 + $0x8b0] sm:$0xff]
    %v387 = vld [vmem:[#allocation5 + $0x8b8] sm:$0xff]
    %v388 = vld [vmem:[#allocation5 + $0x8c0] sm:$0xff]
    %v389 = vld [vmem:[#allocation5 + $0x8c8] sm:$0xff]
    %v390 = vld [vmem:[#allocation5 + $0x8d0] sm:$0xff]
    %v391 = vld [vmem:[#allocation5 + $0x8d8] sm:$0xff]
    %v392 = vld [vmem:[#allocation5 + $0x8e0] sm:$0xff]
    %v393 = vld [vmem:[#allocation5 + $0x8e8] sm:$0xff]
    %v394 = vld [vmem:[#allocation5 + $0x8f0] sm:$0xff]
    %v395 = vld [vmem:[#allocation5 + $0x8f8] sm:$0xff]
    %v396 = vld [vmem:[#allocation5 + $0x900] sm:$0xff]
    %v397 = vld [vmem:[#allocation5 + $0x908] sm:$0xff]
    %v398 = vld [vmem:[#allocation5 + $0x910] sm:$0xff]
    %v399 = vld [vmem:[#allocation5 + $0x918] sm:$0xff]
    %v400 = vld [vmem:[#allocation5 + $0x920] sm:$0xff]
    %v401 = vld [vmem:[#allocation5 + $0x928] sm:$0xff]
    %v402 = vld [vmem:[#allocation5 + $0x930] sm:$0xff]
    %v403 = vld [vmem:[#allocation5 + $0x938] sm:$0xff]
    %v404 = vld [vmem:[#allocation5 + $0x940] sm:$0xff]
    %v405 = vld [vmem:[#allocation5 + $0x948] sm:$0xff]
    %v406 = vld [vmem:[#allocation5 + $0x950] sm:$0xff]
    %v407 = vld [vmem:[#allocation5 + $0x958] sm:$0xff]
    %v408 = vld [vmem:[#allocation5 + $0x960] sm:$0xff]
    %v409 = vld [vmem:[#allocation5 + $0x968] sm:$0xff]
    %v410 = vld [vmem:[#allocation5 + $0x970] sm:$0xff]
    %v411 = vld [vmem:[#allocation5 + $0x978] sm:$0xff]
    %v412 = vld [vmem:[#allocation5 + $0x980] sm:$0xff]
    %v413 = vld [vmem:[#allocation5 + $0x988] sm:$0xff]
    %v414 = vld [vmem:[#allocation5 + $0x990] sm:$0xff]
    %v415 = vld [vmem:[#allocation5 + $0x998] sm:$0xff]
    %v416 = vld [vmem:[#allocation5 + $0x9a0] sm:$0xff]
    %v417 = vld [vmem:[#allocation5 + $0x9a8] sm:$0xff]
    %v418 = vld [vmem:[#allocation5 + $0x9b0] sm:$0xff]
    %v419 = vld [vmem:[#allocation5 + $0x9b8] sm:$0xff]
    %v420 = vld [vmem:[#allocation5 + $0x9c0] sm:$0xff]
    %v421 = vld [vmem:[#allocation5 + $0x9c8] sm:$0xff]
    %v422 = vld [vmem:[#allocation5 + $0x9d0] sm:$0xff]
    %v423 = vld [vmem:[#allocation5 + $0x9d8] sm:$0xff]
    %v424 = vld [vmem:[#allocation5 + $0x9e0] sm:$0xff]
    %v425 = vld [vmem:[#allocation5 + $0x9e8] sm:$0xff]
    %v426 = vld [vmem:[#allocation5 + $0x9f0] sm:$0xff]
    %v427 = vld [vmem:[#allocation5 + $0x9f8] sm:$0xff]
    %v428 = vld [vmem:[#allocation5 + $0xa00] sm:$0xff]
    %v429 = vld [vmem:[#allocation5 + $0xa08] sm:$0xff]
    %v430 = vld [vmem:[#allocation5 + $0xa10] sm:$0xff]
    %v431 = vld [vmem:[#allocation5 + $0xa18] sm:$0xff]
    %v432 = vld [vmem:[#allocation5 + $0xa20] sm:$0xff]
    %v433 = vld [vmem:[#allocation5 + $0xa28] sm:$0xff]
    %v434 = vld [vmem:[#allocation5 + $0xa30] sm:$0xff]
    %v435 = vld [vmem:[#allocation5 + $0xa38] sm:$0xff]
    %v436 = vld [vmem:[#allocation5 + $0xa40] sm:$0xff]
    %v437 = vld [vmem:[#allocation5 + $0xa48] sm:$0xff]
    %v438 = vld [vmem:[#allocation5 + $0xa50] sm:$0xff]
    %v439 = vld [vmem:[#allocation5 + $0xa58] sm:$0xff]
    %v440 = vld [vmem:[#allocation5 + $0xa60] sm:$0xff]
    %v441 = vld [vmem:[#allocation5 + $0xa68] sm:$0xff]
    %v442 = vld [vmem:[#allocation5 + $0xa70] sm:$0xff]
    %v443 = vld [vmem:[#allocation5 + $0xa78] sm:$0xff]
    %v444 = vld [vmem:[#allocation5 + $0xa80] sm:$0xff]
    %v445 = vld [vmem:[#allocation5 + $0xa88] sm:$0xff]
    %v446 = vld [vmem:[#allocation5 + $0xa90] sm:$0xff]
    %v447 = vld [vmem:[#allocation5 + $0xa98] sm:$0xff]
    %v448 = vld [vmem:[#allocation5 + $0xaa0] sm:$0xff]
    %v449 = vld [vmem:[#allocation5 + $0xaa8] sm:$0xff]
    %v450 = vld [vmem:[#allocation5 + $0xab0] sm:$0xff]
    %v451 = vld [vmem:[#allocation5 + $0xab8] sm:$0xff]
    %v452 = vld [vmem:[#allocation5 + $0xac0] sm:$0xff]
    %v453 = vld [vmem:[#allocation5 + $0xac8] sm:$0xff]
    %v454 = vld [vmem:[#allocation5 + $0xad0] sm:$0xff]
    %v455 = vld [vmem:[#allocation5 + $0xad8] sm:$0xff]
    %v456 = vld [vmem:[#allocation5 + $0xae0] sm:$0xff]
    %v457 = vld [vmem:[#allocation5 + $0xae8] sm:$0xff]
    %v458 = vld [vmem:[#allocation5 + $0xaf0] sm:$0xff]
    %v459 = vld [vmem:[#allocation5 + $0xaf8] sm:$0xff]
    %v460 = vld [vmem:[#allocation5 + $0xb00] sm:$0xff]
    %v461 = vld [vmem:[#allocation5 + $0xb08] sm:$0xff]
    %v462 = vld [vmem:[#allocation5 + $0xb10] sm:$0xff]
    %v463 = vld [vmem:[#allocation5 + $0xb18] sm:$0xff]
    %v464 = vld [vmem:[#allocation5 + $0xb20] sm:$0xff]
    %v465 = vld [vmem:[#allocation5 + $0xb28] sm:$0xff]
    %v466 = vld [vmem:[#allocation5 + $0xb30] sm:$0xff]
    %v467 = vld [vmem:[#allocation5 + $0xb38] sm:$0xff]
    %v468 = vld [vmem:[#allocation5 + $0xb40] sm:$0xff]
    %v469 = vld [vmem:[#allocation5 + $0xb48] sm:$0xff]
    %v470 = vld [vmem:[#allocation5 + $0xb50] sm:$0xff]
    %v471 = vld [vmem:[#allocation5 + $0xb58] sm:$0xff]
    %v472 = vld [vmem:[#allocation5 + $0xb60] sm:$0xff]
    %v473 = vld [vmem:[#allocation5 + $0xb68] sm:$0xff]
    %v474 = vld [vmem:[#allocation5 + $0xb70] sm:$0xff]
    %v475 = vld [vmem:[#allocation5 + $0xb78] sm:$0xff]
    %v476 = vld [vmem:[#allocation5 + $0xb80] sm:$0xff]
    %v477 = vld [vmem:[#allocation5 + $0xb88] sm:$0xff]
    %v478 = vld [vmem:[#allocation5 + $0xb90] sm:$0xff]
    %v479 = vld [vmem:[#allocation5 + $0xb98] sm:$0xff]
    %v480 = vld [vmem:[#allocation5 + $0xba0] sm:$0xff]
    %v481 = vld [vmem:[#allocation5 + $0xba8] sm:$0xff]
    %v482 = vld [vmem:[#allocation5 + $0xbb0] sm:$0xff]
    %v483 = vld [vmem:[#allocation5 + $0xbb8] sm:$0xff]
    %v484 = vld [vmem:[#allocation5 + $0xbc0] sm:$0xff]
    %v485 = vld [vmem:[#allocation5 + $0xbc8] sm:$0xff]
    %v486 = vld [vmem:[#allocation5 + $0xbd0] sm:$0xff]
    %v487 = vld [vmem:[#allocation5 + $0xbd8] sm:$0xff]
    %v488 = vld [vmem:[#allocation5 + $0xbe0] sm:$0xff]
    %v489 = vld [vmem:[#allocation5 + $0xbe8] sm:$0xff]
    %v490 = vld [vmem:[#allocation5 + $0xbf0] sm:$0xff]
    %v491 = vld [vmem:[#allocation5 + $0xbf8] sm:$0xff]
    %v492 = vld [vmem:[#allocation5 + $0xc00] sm:$0xff]
    %v493 = vld [vmem:[#allocation5 + $0xc08] sm:$0xff]
    %v494 = vld [vmem:[#allocation5 + $0xc10] sm:$0xff]
    %v495 = vld [vmem:[#allocation5 + $0xc18] sm:$0xff]
    %v496 = vld [vmem:[#allocation5 + $0xc20] sm:$0xff]
    %v497 = vld [vmem:[#allocation5 + $0xc28] sm:$0xff]
    %v498 = vld [vmem:[#allocation5 + $0xc30] sm:$0xff]
    %v499 = vld [vmem:[#allocation5 + $0xc38] sm:$0xff]
    %v500 = vld [vmem:[#allocation7] sm:$0xff]
    %v502 = vperm.slane %v500, 0
    %v503 = vperm.slane %v500, 1
    %v504 = vperm.slane %v500, 2
    %v505 = vperm.slane %v500, 3
    %v506 = vperm.slane %v500, 4
    %v507 = vperm.slane %v500, 5
    %v508 = vperm.slane %v500, 6
    %v509 = vperm.slane %v500, 7
    %v910 = vunpack.c.l.b16 %v108
    %v911 = vunpack.c.h.b16 %v108
    %v912 = vunpack.c.l.b16 %v109
    %v913 = vunpack.c.h.b16 %v109
    %v914 = vunpack.c.l.b16 %v110
    %v915 = vunpack.c.h.b16 %v110
    %v916 = vunpack.c.l.b16 %v111
    %v917 = vunpack.c.h.b16 %v111
    %v918 = vunpack.c.l.b16 %v112
    %v919 = vunpack.c.h.b16 %v112
    %v920 = vunpack.c.l.b16 %v113
    %v921 = vunpack.c.h.b16 %v113
    %v922 = vunpack.c.l.b16 %v114
    %v923 = vunpack.c.h.b16 %v114
    %v924 = vunpack.c.l.b16 %v115
    %v925 = vunpack.c.h.b16 %v115
    %v926 = vunpack.c.l.b16 %v116
    %v927 = vunpack.c.h.b16 %v116
    %v928 = vunpack.c.l.b16 %v117
    %v929 = vunpack.c.h.b16 %v117
    %v930 = vunpack.c.l.b16 %v118
    %v931 = vunpack.c.h.b16 %v118
    %v932 = vunpack.c.l.b16 %v119
    %v933 = vunpack.c.h.b16 %v119
    %v934 = vunpack.c.l.b16 %v120
    %v935 = vunpack.c.h.b16 %v120
    %v936 = vunpack.c.l.b16 %v121
    %v937 = vunpack.c.h.b16 %v121
    %v938 = vunpack.c.l.b16 %v122
    %v939 = vunpack.c.h.b16 %v122
    %v940 = vunpack.c.l.b16 %v123
    %v941 = vunpack.c.h.b16 %v123
    %v942 = vunpack.c.l.b16 %v124
    %v943 = vunpack.c.h.b16 %v124
    %v944 = vunpack.c.l.b16 %v125
    %v945 = vunpack.c.h.b16 %v125
    %v946 = vunpack.c.l.b16 %v126
    %v947 = vunpack.c.h.b16 %v126
    %v948 = vunpack.c.l.b16 %v127
    %v949 = vunpack.c.h.b16 %v127
    %v950 = vunpack.c.l.b16 %v128
    %v951 = vunpack.c.h.b16 %v128
    %v952 = vunpack.c.l.b16 %v129
    %v953 = vunpack.c.h.b16 %v129
    %v954 = vunpack.c.l.b16 %v130
    %v955 = vunpack.c.h.b16 %v130
    %v956 = vunpack.c.l.b16 %v131
    %v957 = vunpack.c.h.b16 %v131
    %v958 = vunpack.c.l.b16 %v132
    %v959 = vunpack.c.h.b16 %v132
    %v960 = vunpack.c.l.b16 %v133
    %v961 = vunpack.c.h.b16 %v133
    %v962 = vunpack.c.l.b16 %v134
    %v963 = vunpack.c.h.b16 %v134
    %v964 = vunpack.c.l.b16 %v135
    %v965 = vunpack.c.h.b16 %v135
    %v966 = vunpack.c.l.b16 %v136
    %v967 = vunpack.c.h.b16 %v136
    %v968 = vunpack.c.l.b16 %v137
    %v969 = vunpack.c.h.b16 %v137
    %v970 = vunpack.c.l.b16 %v138
    %v971 = vunpack.c.h.b16 %v138
    %v972 = vunpack.c.l.b16 %v139
    %v973 = vunpack.c.h.b16 %v139
    %v974 = vunpack.c.l.b16 %v140
    %v975 = vunpack.c.h.b16 %v140
    %v976 = vunpack.c.l.b16 %v141
    %v977 = vunpack.c.h.b16 %v141
    %v978 = vunpack.c.l.b16 %v142
    %v979 = vunpack.c.h.b16 %v142
    %v980 = vunpack.c.l.b16 %v143
    %v981 = vunpack.c.h.b16 %v143
    %v982 = vunpack.c.l.b16 %v144
    %v983 = vunpack.c.h.b16 %v144
    %v984 = vunpack.c.l.b16 %v145
    %v985 = vunpack.c.h.b16 %v145
    %v986 = vunpack.c.l.b16 %v146
    %v987 = vunpack.c.h.b16 %v146
    %v988 = vunpack.c.l.b16 %v147
    %v989 = vunpack.c.h.b16 %v147
    %v990 = vunpack.c.l.b16 %v148
    %v991 = vunpack.c.h.b16 %v148
    %v992 = vunpack.c.l.b16 %v149
    %v993 = vunpack.c.h.b16 %v149
    %v994 = vunpack.c.l.b16 %v150
    %v995 = vunpack.c.h.b16 %v150
    %v996 = vunpack.c.l.b16 %v151
    %v997 = vunpack.c.h.b16 %v151
    %v998 = vunpack.c.l.b16 %v152
    %v999 = vunpack.c.h.b16 %v152
    %v1000 = vunpack.c.l.b16 %v153
    %v1001 = vunpack.c.h.b16 %v153
    %v1002 = vunpack.c.l.b16 %v154
    %v1003 = vunpack.c.h.b16 %v154
    %v1004 = vunpack.c.l.b16 %v155
    %v1005 = vunpack.c.h.b16 %v155
    %v1006 = vunpack.c.l.b16 %v156
    %v1007 = vunpack.c.h.b16 %v156
    %v1008 = vunpack.c.l.b16 %v157
    %v1009 = vunpack.c.h.b16 %v157
    %v1010 = vunpack.c.l.b16 %v158
    %v1011 = vunpack.c.h.b16 %v158
    %v1012 = vunpack.c.l.b16 %v159
    %v1013 = vunpack.c.h.b16 %v159
    %v1014 = vunpack.c.l.b16 %v160
    %v1015 = vunpack.c.h.b16 %v160
    %v1016 = vunpack.c.l.b16 %v161
    %v1017 = vunpack.c.h.b16 %v161
    %v1018 = vunpack.c.l.b16 %v162
    %v1019 = vunpack.c.h.b16 %v162
    %v1020 = vunpack.c.l.b16 %v163
    %v1021 = vunpack.c.h.b16 %v163
    %v1022 = vunpack.c.l.b16 %v164
    %v1023 = vunpack.c.h.b16 %v164
    %v1024 = vunpack.c.l.b16 %v165
    %v1025 = vunpack.c.h.b16 %v165
    %v1026 = vunpack.c.l.b16 %v166
    %v1027 = vunpack.c.h.b16 %v166
    %v1028 = vunpack.c.l.b16 %v167
    %v1029 = vunpack.c.h.b16 %v167
    %v1030 = vunpack.c.l.b16 %v168
    %v1031 = vunpack.c.h.b16 %v168
    %v1032 = vunpack.c.l.b16 %v169
    %v1033 = vunpack.c.h.b16 %v169
    %v1034 = vunpack.c.l.b16 %v170
    %v1035 = vunpack.c.h.b16 %v170
    %v1036 = vunpack.c.l.b16 %v171
    %v1037 = vunpack.c.h.b16 %v171
    %v1038 = vunpack.c.l.b16 %v172
    %v1039 = vunpack.c.h.b16 %v172
    %v1040 = vunpack.c.l.b16 %v173
    %v1041 = vunpack.c.h.b16 %v173
    %v1042 = vunpack.c.l.b16 %v174
    %v1043 = vunpack.c.h.b16 %v174
    %v1044 = vunpack.c.l.b16 %v175
    %v1045 = vunpack.c.h.b16 %v175
    %v1046 = vunpack.c.l.b16 %v176
    %v1047 = vunpack.c.h.b16 %v176
    %v1048 = vunpack.c.l.b16 %v177
    %v1049 = vunpack.c.h.b16 %v177
    %v1050 = vunpack.c.l.b16 %v178
    %v1051 = vunpack.c.h.b16 %v178
    %v1052 = vunpack.c.l.b16 %v179
    %v1053 = vunpack.c.h.b16 %v179
    %v1054 = vunpack.c.l.b16 %v180
    %v1055 = vunpack.c.h.b16 %v180
    %v1056 = vunpack.c.l.b16 %v181
    %v1057 = vunpack.c.h.b16 %v181
    %v1058 = vunpack.c.l.b16 %v182
    %v1059 = vunpack.c.h.b16 %v182
    %v1060 = vunpack.c.l.b16 %v183
    %v1061 = vunpack.c.h.b16 %v183
    %v1062 = vunpack.c.l.b16 %v184
    %v1063 = vunpack.c.h.b16 %v184
    %v1064 = vunpack.c.l.b16 %v185
    %v1065 = vunpack.c.h.b16 %v185
    %v1066 = vunpack.c.l.b16 %v186
    %v1067 = vunpack.c.h.b16 %v186
    %v1068 = vunpack.c.l.b16 %v187
    %v1069 = vunpack.c.h.b16 %v187
    %v1070 = vunpack.c.l.b16 %v188
    %v1071 = vunpack.c.h.b16 %v188
    %v1072 = vunpack.c.l.b16 %v189
    %v1073 = vunpack.c.h.b16 %v189
    %v1074 = vunpack.c.l.b16 %v190
    %v1075 = vunpack.c.h.b16 %v190
    %v1076 = vunpack.c.l.b16 %v191
    %v1077 = vunpack.c.h.b16 %v191
    %v1078 = vunpack.c.l.b16 %v192
    %v1079 = vunpack.c.h.b16 %v192
    %v1080 = vunpack.c.l.b16 %v193
    %v1081 = vunpack.c.h.b16 %v193
    %v1082 = vunpack.c.l.b16 %v194
    %v1083 = vunpack.c.h.b16 %v194
    %v1084 = vunpack.c.l.b16 %v195
    %v1085 = vunpack.c.h.b16 %v195
    %v1086 = vunpack.c.l.b16 %v196
    %v1087 = vunpack.c.h.b16 %v196
    %v1088 = vunpack.c.l.b16 %v197
    %v1089 = vunpack.c.h.b16 %v197
    %v1090 = vunpack.c.l.b16 %v198
    %v1091 = vunpack.c.h.b16 %v198
    %v1092 = vunpack.c.l.b16 %v199
    %v1093 = vunpack.c.h.b16 %v199
    %v1094 = vunpack.c.l.b16 %v200
    %v1095 = vunpack.c.h.b16 %v200
    %v1096 = vunpack.c.l.b16 %v201
    %v1097 = vunpack.c.h.b16 %v201
    %v1098 = vunpack.c.l.b16 %v202
    %v1099 = vunpack.c.h.b16 %v202
    %v1100 = vunpack.c.l.b16 %v203
    %v1101 = vunpack.c.h.b16 %v203
    %v1102 = vunpack.c.l.b16 %v204
    %v1103 = vunpack.c.h.b16 %v204
    %v1104 = vunpack.c.l.b16 %v205
    %v1105 = vunpack.c.h.b16 %v205
    %v1106 = vunpack.c.l.b16 %v206
    %v1107 = vunpack.c.h.b16 %v206
    %v1108 = vunpack.c.l.b16 %v207
    %v1109 = vunpack.c.h.b16 %v207
    %v1110 = vunpack.c.l.b16 %v208
    %v1111 = vunpack.c.h.b16 %v208
    %v1112 = vunpack.c.l.b16 %v209
    %v1113 = vunpack.c.h.b16 %v209
    %v1114 = vunpack.c.l.b16 %v210
    %v1115 = vunpack.c.h.b16 %v210
    %v1116 = vunpack.c.l.b16 %v211
    %v1117 = vunpack.c.h.b16 %v211
    %v1118 = vunpack.c.l.b16 %v212
    %v1119 = vunpack.c.h.b16 %v212
    %v1120 = vunpack.c.l.b16 %v213
    %v1121 = vunpack.c.h.b16 %v213
    %v1122 = vunpack.c.l.b16 %v214
    %v1123 = vunpack.c.h.b16 %v214
    %v1124 = vunpack.c.l.b16 %v215
    %v1125 = vunpack.c.h.b16 %v215
    %v1126 = vunpack.c.l.b16 %v216
    %v1127 = vunpack.c.h.b16 %v216
    %v1128 = vunpack.c.l.b16 %v217
    %v1129 = vunpack.c.h.b16 %v217
    %v1130 = vunpack.c.l.b16 %v218
    %v1131 = vunpack.c.h.b16 %v218
    %v1132 = vunpack.c.l.b16 %v219
    %v1133 = vunpack.c.h.b16 %v219
    %v1134 = vunpack.c.l.b16 %v220
    %v1135 = vunpack.c.h.b16 %v220
    %v1136 = vunpack.c.l.b16 %v221
    %v1137 = vunpack.c.h.b16 %v221
    %v1138 = vunpack.c.l.b16 %v222
    %v1139 = vunpack.c.h.b16 %v222
    %v1140 = vunpack.c.l.b16 %v223
    %v1141 = vunpack.c.h.b16 %v223
    %v1142 = vunpack.c.l.b16 %v224
    %v1143 = vunpack.c.h.b16 %v224
    %v1144 = vunpack.c.l.b16 %v225
    %v1145 = vunpack.c.h.b16 %v225
    %v1146 = vunpack.c.l.b16 %v226
    %v1147 = vunpack.c.h.b16 %v226
    %v1148 = vunpack.c.l.b16 %v227
    %v1149 = vunpack.c.h.b16 %v227
    %v1150 = vunpack.c.l.b16 %v228
    %v1151 = vunpack.c.h.b16 %v228
    %v1152 = vunpack.c.l.b16 %v229
    %v1153 = vunpack.c.h.b16 %v229
    %v1154 = vunpack.c.l.b16 %v230
    %v1155 = vunpack.c.h.b16 %v230
    %v1156 = vunpack.c.l.b16 %v231
    %v1157 = vunpack.c.h.b16 %v231
    %v1158 = vunpack.c.l.b16 %v232
    %v1159 = vunpack.c.h.b16 %v232
    %v1160 = vunpack.c.l.b16 %v233
    %v1161 = vunpack.c.h.b16 %v233
    %v1162 = vunpack.c.l.b16 %v234
    %v1163 = vunpack.c.h.b16 %v234
    %v1164 = vunpack.c.l.b16 %v235
    %v1165 = vunpack.c.h.b16 %v235
    %v1166 = vunpack.c.l.b16 %v236
    %v1167 = vunpack.c.h.b16 %v236
    %v1168 = vunpack.c.l.b16 %v237
    %v1169 = vunpack.c.h.b16 %v237
    %v1170 = vunpack.c.l.b16 %v238
    %v1171 = vunpack.c.h.b16 %v238
    %v1172 = vunpack.c.l.b16 %v239
    %v1173 = vunpack.c.h.b16 %v239
    %v1174 = vunpack.c.l.b16 %v240
    %v1175 = vunpack.c.h.b16 %v240
    %v1176 = vunpack.c.l.b16 %v241
    %v1177 = vunpack.c.h.b16 %v241
    %v1178 = vunpack.c.l.b16 %v242
    %v1179 = vunpack.c.h.b16 %v242
    %v1180 = vunpack.c.l.b16 %v243
    %v1181 = vunpack.c.h.b16 %v243
    %v1182 = vunpack.c.l.b16 %v244
    %v1183 = vunpack.c.h.b16 %v244
    %v1184 = vunpack.c.l.b16 %v245
    %v1185 = vunpack.c.h.b16 %v245
    %v1186 = vunpack.c.l.b16 %v246
    %v1187 = vunpack.c.h.b16 %v246
    %v1188 = vunpack.c.l.b16 %v247
    %v1189 = vunpack.c.h.b16 %v247
    %v1190 = vunpack.c.l.b16 %v248
    %v1191 = vunpack.c.h.b16 %v248
    %v1192 = vunpack.c.l.b16 %v249
    %v1193 = vunpack.c.h.b16 %v249
    %v1194 = vunpack.c.l.b16 %v250
    %v1195 = vunpack.c.h.b16 %v250
    %v1196 = vunpack.c.l.b16 %v251
    %v1197 = vunpack.c.h.b16 %v251
    %v1198 = vunpack.c.l.b16 %v252
    %v1199 = vunpack.c.h.b16 %v252
    %v1200 = vunpack.c.l.b16 %v253
    %v1201 = vunpack.c.h.b16 %v253
    %v1202 = vunpack.c.l.b16 %v254
    %v1203 = vunpack.c.h.b16 %v254
    %v1204 = vunpack.c.l.b16 %v255
    %v1205 = vunpack.c.h.b16 %v255
    %v1206 = vunpack.c.l.b16 %v256
    %v1207 = vunpack.c.h.b16 %v256
    %v1208 = vunpack.c.l.b16 %v257
    %v1209 = vunpack.c.h.b16 %v257
    %v1210 = vunpack.c.l.b16 %v258
    %v1211 = vunpack.c.h.b16 %v258
    %v1212 = vunpack.c.l.b16 %v259
    %v1213 = vunpack.c.h.b16 %v259
    %v1214 = vunpack.c.l.b16 %v260
    %v1215 = vunpack.c.h.b16 %v260
    %v1216 = vunpack.c.l.b16 %v261
    %v1217 = vunpack.c.h.b16 %v261
    %v1218 = vunpack.c.l.b16 %v262
    %v1219 = vunpack.c.h.b16 %v262
    %v1220 = vunpack.c.l.b16 %v263
    %v1221 = vunpack.c.h.b16 %v263
    %v1222 = vunpack.c.l.b16 %v264
    %v1223 = vunpack.c.h.b16 %v264
    %v1224 = vunpack.c.l.b16 %v265
    %v1225 = vunpack.c.h.b16 %v265
    %v1226 = vunpack.c.l.b16 %v266
    %v1227 = vunpack.c.h.b16 %v266
    %v1228 = vunpack.c.l.b16 %v267
    %v1229 = vunpack.c.h.b16 %v267
    %v1230 = vunpack.c.l.b16 %v268
    %v1231 = vunpack.c.h.b16 %v268
    %v1232 = vunpack.c.l.b16 %v269
    %v1233 = vunpack.c.h.b16 %v269
    %v1234 = vunpack.c.l.b16 %v270
    %v1235 = vunpack.c.h.b16 %v270
    %v1236 = vunpack.c.l.b16 %v271
    %v1237 = vunpack.c.h.b16 %v271
    %v1238 = vunpack.c.l.b16 %v272
    %v1239 = vunpack.c.h.b16 %v272
    %v1240 = vunpack.c.l.b16 %v273
    %v1241 = vunpack.c.h.b16 %v273
    %v1242 = vunpack.c.l.b16 %v274
    %v1243 = vunpack.c.h.b16 %v274
    %v1244 = vunpack.c.l.b16 %v275
    %v1245 = vunpack.c.h.b16 %v275
    %v1246 = vunpack.c.l.b16 %v276
    %v1247 = vunpack.c.h.b16 %v276
    %v1248 = vunpack.c.l.b16 %v277
    %v1249 = vunpack.c.h.b16 %v277
    %v1250 = vunpack.c.l.b16 %v278
    %v1251 = vunpack.c.h.b16 %v278
    %v1252 = vunpack.c.l.b16 %v279
    %v1253 = vunpack.c.h.b16 %v279
    %v1254 = vunpack.c.l.b16 %v280
    %v1255 = vunpack.c.h.b16 %v280
    %v1256 = vunpack.c.l.b16 %v281
    %v1257 = vunpack.c.h.b16 %v281
    %v1258 = vunpack.c.l.b16 %v282
    %v1259 = vunpack.c.h.b16 %v282
    %v1260 = vunpack.c.l.b16 %v283
    %v1261 = vunpack.c.h.b16 %v283
    %v1262 = vunpack.c.l.b16 %v284
    %v1263 = vunpack.c.h.b16 %v284
    %v1264 = vunpack.c.l.b16 %v285
    %v1265 = vunpack.c.h.b16 %v285
    %v1266 = vunpack.c.l.b16 %v286
    %v1267 = vunpack.c.h.b16 %v286
    %v1268 = vunpack.c.l.b16 %v287
    %v1269 = vunpack.c.h.b16 %v287
    %v1270 = vunpack.c.l.b16 %v288
    %v1271 = vunpack.c.h.b16 %v288
    %v1272 = vunpack.c.l.b16 %v289
    %v1273 = vunpack.c.h.b16 %v289
    %v1274 = vunpack.c.l.b16 %v290
    %v1275 = vunpack.c.h.b16 %v290
    %v1276 = vunpack.c.l.b16 %v291
    %v1277 = vunpack.c.h.b16 %v291
    %v1278 = vunpack.c.l.b16 %v292
    %v1279 = vunpack.c.h.b16 %v292
    %v1280 = vunpack.c.l.b16 %v293
    %v1281 = vunpack.c.h.b16 %v293
    %v1282 = vunpack.c.l.b16 %v294
    %v1283 = vunpack.c.h.b16 %v294
    %v1284 = vunpack.c.l.b16 %v295
    %v1285 = vunpack.c.h.b16 %v295
    %v1286 = vunpack.c.l.b16 %v296
    %v1287 = vunpack.c.h.b16 %v296
    %v1288 = vunpack.c.l.b16 %v297
    %v1289 = vunpack.c.h.b16 %v297
    %v1290 = vunpack.c.l.b16 %v298
    %v1291 = vunpack.c.h.b16 %v298
    %v1292 = vunpack.c.l.b16 %v299
    %v1293 = vunpack.c.h.b16 %v299
    %v1294 = vunpack.c.l.b16 %v300
    %v1295 = vunpack.c.h.b16 %v300
    %v1296 = vunpack.c.l.b16 %v301
    %v1297 = vunpack.c.h.b16 %v301
    %v1298 = vunpack.c.l.b16 %v302
    %v1299 = vunpack.c.h.b16 %v302
    %v1300 = vunpack.c.l.b16 %v303
    %v1301 = vunpack.c.h.b16 %v303
    %v1302 = vunpack.c.l.b16 %v304
    %v1303 = vunpack.c.h.b16 %v304
    %v1304 = vunpack.c.l.b16 %v305
    %v1305 = vunpack.c.h.b16 %v305
    %v1306 = vunpack.c.l.b16 %v306
    %v1307 = vunpack.c.h.b16 %v306
    %v1308 = vunpack.c.l.b16 %v307
    %v1309 = vunpack.c.h.b16 %v307
    %v1310 = vunpack.c.l.b16 %v308
    %v1311 = vunpack.c.h.b16 %v308
    %v1312 = vunpack.c.l.b16 %v309
    %v1313 = vunpack.c.h.b16 %v309
    %v1314 = vunpack.c.l.b16 %v310
    %v1315 = vunpack.c.h.b16 %v310
    %v1316 = vunpack.c.l.b16 %v311
    %v1317 = vunpack.c.h.b16 %v311
    %v1318 = vunpack.c.l.b16 %v312
    %v1319 = vunpack.c.h.b16 %v312
    %v1320 = vunpack.c.l.b16 %v313
    %v1321 = vunpack.c.h.b16 %v313
    %v1322 = vunpack.c.l.b16 %v314
    %v1323 = vunpack.c.h.b16 %v314
    %v1324 = vunpack.c.l.b16 %v315
    %v1325 = vunpack.c.h.b16 %v315
    %v1326 = vunpack.c.l.b16 %v316
    %v1327 = vunpack.c.h.b16 %v316
    %v1328 = vunpack.c.l.b16 %v317
    %v1329 = vunpack.c.h.b16 %v317
    %v1330 = vunpack.c.l.b16 %v318
    %v1331 = vunpack.c.h.b16 %v318
    %v1332 = vunpack.c.l.b16 %v319
    %v1333 = vunpack.c.h.b16 %v319
    %v1334 = vunpack.c.l.b16 %v320
    %v1335 = vunpack.c.h.b16 %v320
    %v1336 = vunpack.c.l.b16 %v321
    %v1337 = vunpack.c.h.b16 %v321
    %v1338 = vunpack.c.l.b16 %v322
    %v1339 = vunpack.c.h.b16 %v322
    %v1340 = vunpack.c.l.b16 %v323
    %v1341 = vunpack.c.h.b16 %v323
    %v1342 = vunpack.c.l.b16 %v324
    %v1343 = vunpack.c.h.b16 %v324
    %v1344 = vunpack.c.l.b16 %v325
    %v1345 = vunpack.c.h.b16 %v325
    %v1346 = vunpack.c.l.b16 %v326
    %v1347 = vunpack.c.h.b16 %v326
    %v1348 = vunpack.c.l.b16 %v327
    %v1349 = vunpack.c.h.b16 %v327
    %v1350 = vunpack.c.l.b16 %v328
    %v1351 = vunpack.c.h.b16 %v328
    %v1352 = vunpack.c.l.b16 %v329
    %v1353 = vunpack.c.h.b16 %v329
    %v1354 = vunpack.c.l.b16 %v330
    %v1355 = vunpack.c.h.b16 %v330
    %v1356 = vunpack.c.l.b16 %v331
    %v1357 = vunpack.c.h.b16 %v331
    %v1358 = vunpack.c.l.b16 %v332
    %v1359 = vunpack.c.h.b16 %v332
    %v1360 = vunpack.c.l.b16 %v333
    %v1361 = vunpack.c.h.b16 %v333
    %v1362 = vunpack.c.l.b16 %v334
    %v1363 = vunpack.c.h.b16 %v334
    %v1364 = vunpack.c.l.b16 %v335
    %v1365 = vunpack.c.h.b16 %v335
    %v1366 = vunpack.c.l.b16 %v336
    %v1367 = vunpack.c.h.b16 %v336
    %v1368 = vunpack.c.l.b16 %v337
    %v1369 = vunpack.c.h.b16 %v337
    %v1370 = vunpack.c.l.b16 %v338
    %v1371 = vunpack.c.h.b16 %v338
    %v1372 = vunpack.c.l.b16 %v339
    %v1373 = vunpack.c.h.b16 %v339
    %v1374 = vunpack.c.l.b16 %v340
    %v1375 = vunpack.c.h.b16 %v340
    %v1376 = vunpack.c.l.b16 %v341
    %v1377 = vunpack.c.h.b16 %v341
    %v1378 = vunpack.c.l.b16 %v342
    %v1379 = vunpack.c.h.b16 %v342
    %v1380 = vunpack.c.l.b16 %v343
    %v1381 = vunpack.c.h.b16 %v343
    %v1382 = vunpack.c.l.b16 %v344
    %v1383 = vunpack.c.h.b16 %v344
    %v1384 = vunpack.c.l.b16 %v345
    %v1385 = vunpack.c.h.b16 %v345
    %v1386 = vunpack.c.l.b16 %v346
    %v1387 = vunpack.c.h.b16 %v346
    %v1388 = vunpack.c.l.b16 %v347
    %v1389 = vunpack.c.h.b16 %v347
    %v1390 = vunpack.c.l.b16 %v348
    %v1391 = vunpack.c.h.b16 %v348
    %v1392 = vunpack.c.l.b16 %v349
    %v1393 = vunpack.c.h.b16 %v349
    %v1394 = vunpack.c.l.b16 %v350
    %v1395 = vunpack.c.h.b16 %v350
    %v1396 = vunpack.c.l.b16 %v351
    %v1397 = vunpack.c.h.b16 %v351
    %v1398 = vunpack.c.l.b16 %v352
    %v1399 = vunpack.c.h.b16 %v352
    %v1400 = vunpack.c.l.b16 %v353
    %v1401 = vunpack.c.h.b16 %v353
    %v1402 = vunpack.c.l.b16 %v354
    %v1403 = vunpack.c.h.b16 %v354
    %v1404 = vunpack.c.l.b16 %v355
    %v1405 = vunpack.c.h.b16 %v355
    %v1406 = vunpack.c.l.b16 %v356
    %v1407 = vunpack.c.h.b16 %v356
    %v1408 = vunpack.c.l.b16 %v357
    %v1409 = vunpack.c.h.b16 %v357
    %v1410 = vunpack.c.l.b16 %v358
    %v1411 = vunpack.c.h.b16 %v358
    %v1412 = vunpack.c.l.b16 %v359
    %v1413 = vunpack.c.h.b16 %v359
    %v1414 = vunpack.c.l.b16 %v360
    %v1415 = vunpack.c.h.b16 %v360
    %v1416 = vunpack.c.l.b16 %v361
    %v1417 = vunpack.c.h.b16 %v361
    %v1418 = vunpack.c.l.b16 %v362
    %v1419 = vunpack.c.h.b16 %v362
    %v1420 = vunpack.c.l.b16 %v363
    %v1421 = vunpack.c.h.b16 %v363
    %v1422 = vunpack.c.l.b16 %v364
    %v1423 = vunpack.c.h.b16 %v364
    %v1424 = vunpack.c.l.b16 %v365
    %v1425 = vunpack.c.h.b16 %v365
    %v1426 = vunpack.c.l.b16 %v366
    %v1427 = vunpack.c.h.b16 %v366
    %v1428 = vunpack.c.l.b16 %v367
    %v1429 = vunpack.c.h.b16 %v367
    %v1430 = vunpack.c.l.b16 %v368
    %v1431 = vunpack.c.h.b16 %v368
    %v1432 = vunpack.c.l.b16 %v369
    %v1433 = vunpack.c.h.b16 %v369
    %v1434 = vunpack.c.l.b16 %v370
    %v1435 = vunpack.c.h.b16 %v370
    %v1436 = vunpack.c.l.b16 %v371
    %v1437 = vunpack.c.h.b16 %v371
    %v1438 = vunpack.c.l.b16 %v372
    %v1439 = vunpack.c.h.b16 %v372
    %v1440 = vunpack.c.l.b16 %v373
    %v1441 = vunpack.c.h.b16 %v373
    %v1442 = vunpack.c.l.b16 %v374
    %v1443 = vunpack.c.h.b16 %v374
    %v1444 = vunpack.c.l.b16 %v375
    %v1445 = vunpack.c.h.b16 %v375
    %v1446 = vunpack.c.l.b16 %v376
    %v1447 = vunpack.c.h.b16 %v376
    %v1448 = vunpack.c.l.b16 %v377
    %v1449 = vunpack.c.h.b16 %v377
    %v1450 = vunpack.c.l.b16 %v378
    %v1451 = vunpack.c.h.b16 %v378
    %v1452 = vunpack.c.l.b16 %v379
    %v1453 = vunpack.c.h.b16 %v379
    %v1454 = vunpack.c.l.b16 %v380
    %v1455 = vunpack.c.h.b16 %v380
    %v1456 = vunpack.c.l.b16 %v381
    %v1457 = vunpack.c.h.b16 %v381
    %v1458 = vunpack.c.l.b16 %v382
    %v1459 = vunpack.c.h.b16 %v382
    %v1460 = vunpack.c.l.b16 %v383
    %v1461 = vunpack.c.h.b16 %v383
    %v1462 = vunpack.c.l.b16 %v384
    %v1463 = vunpack.c.h.b16 %v384
    %v1464 = vunpack.c.l.b16 %v385
    %v1465 = vunpack.c.h.b16 %v385
    %v1466 = vunpack.c.l.b16 %v386
    %v1467 = vunpack.c.h.b16 %v386
    %v1468 = vunpack.c.l.b16 %v387
    %v1469 = vunpack.c.h.b16 %v387
    %v1470 = vunpack.c.l.b16 %v388
    %v1471 = vunpack.c.h.b16 %v388
    %v1472 = vunpack.c.l.b16 %v389
    %v1473 = vunpack.c.h.b16 %v389
    %v1474 = vunpack.c.l.b16 %v390
    %v1475 = vunpack.c.h.b16 %v390
    %v1476 = vunpack.c.l.b16 %v391
    %v1477 = vunpack.c.h.b16 %v391
    %v1478 = vunpack.c.l.b16 %v392
    %v1479 = vunpack.c.h.b16 %v392
    %v1480 = vunpack.c.l.b16 %v393
    %v1481 = vunpack.c.h.b16 %v393
    %v1482 = vunpack.c.l.b16 %v394
    %v1483 = vunpack.c.h.b16 %v394
    %v1484 = vunpack.c.l.b16 %v395
    %v1485 = vunpack.c.h.b16 %v395
    %v1486 = vunpack.c.l.b16 %v396
    %v1487 = vunpack.c.h.b16 %v396
    %v1488 = vunpack.c.l.b16 %v397
    %v1489 = vunpack.c.h.b16 %v397
    %v1490 = vunpack.c.l.b16 %v398
    %v1491 = vunpack.c.h.b16 %v398
    %v1492 = vunpack.c.l.b16 %v399
    %v1493 = vunpack.c.h.b16 %v399
    %v1494 = vunpack.c.l.b16 %v400
    %v1495 = vunpack.c.h.b16 %v400
    %v1496 = vunpack.c.l.b16 %v401
    %v1497 = vunpack.c.h.b16 %v401
    %v1498 = vunpack.c.l.b16 %v402
    %v1499 = vunpack.c.h.b16 %v402
    %v1500 = vunpack.c.l.b16 %v403
    %v1501 = vunpack.c.h.b16 %v403
    %v1502 = vunpack.c.l.b16 %v404
    %v1503 = vunpack.c.h.b16 %v404
    %v1504 = vunpack.c.l.b16 %v405
    %v1505 = vunpack.c.h.b16 %v405
    %v1506 = vunpack.c.l.b16 %v406
    %v1507 = vunpack.c.h.b16 %v406
    %v1508 = vunpack.c.l.b16 %v407
    %v1509 = vunpack.c.h.b16 %v407
    %v1510 = vunpack.c.l.b16 %v408
    %v1511 = vunpack.c.h.b16 %v408
    %v1512 = vunpack.c.l.b16 %v409
    %v1513 = vunpack.c.h.b16 %v409
    %v1514 = vunpack.c.l.b16 %v410
    %v1515 = vunpack.c.h.b16 %v410
    %v1516 = vunpack.c.l.b16 %v411
    %v1517 = vunpack.c.h.b16 %v411
    %v1518 = vunpack.c.l.b16 %v412
    %v1519 = vunpack.c.h.b16 %v412
    %v1520 = vunpack.c.l.b16 %v413
    %v1521 = vunpack.c.h.b16 %v413
    %v1522 = vunpack.c.l.b16 %v414
    %v1523 = vunpack.c.h.b16 %v414
    %v1524 = vunpack.c.l.b16 %v415
    %v1525 = vunpack.c.h.b16 %v415
    %v1526 = vunpack.c.l.b16 %v416
    %v1527 = vunpack.c.h.b16 %v416
    %v1528 = vunpack.c.l.b16 %v417
    %v1529 = vunpack.c.h.b16 %v417
    %v1530 = vunpack.c.l.b16 %v418
    %v1531 = vunpack.c.h.b16 %v418
    %v1532 = vunpack.c.l.b16 %v419
    %v1533 = vunpack.c.h.b16 %v419
    %v1534 = vunpack.c.l.b16 %v420
    %v1535 = vunpack.c.h.b16 %v420
    %v1536 = vunpack.c.l.b16 %v421
    %v1537 = vunpack.c.h.b16 %v421
    %v1538 = vunpack.c.l.b16 %v422
    %v1539 = vunpack.c.h.b16 %v422
    %v1540 = vunpack.c.l.b16 %v423
    %v1541 = vunpack.c.h.b16 %v423
    %v1542 = vunpack.c.l.b16 %v424
    %v1543 = vunpack.c.h.b16 %v424
    %v1544 = vunpack.c.l.b16 %v425
    %v1545 = vunpack.c.h.b16 %v425
    %v1546 = vunpack.c.l.b16 %v426
    %v1547 = vunpack.c.h.b16 %v426
    %v1548 = vunpack.c.l.b16 %v427
    %v1549 = vunpack.c.h.b16 %v427
    %v1550 = vunpack.c.l.b16 %v428
    %v1551 = vunpack.c.h.b16 %v428
    %v1552 = vunpack.c.l.b16 %v429
    %v1553 = vunpack.c.h.b16 %v429
    %v1554 = vunpack.c.l.b16 %v430
    %v1555 = vunpack.c.h.b16 %v430
    %v1556 = vunpack.c.l.b16 %v431
    %v1557 = vunpack.c.h.b16 %v431
    %v1558 = vunpack.c.l.b16 %v432
    %v1559 = vunpack.c.h.b16 %v432
    %v1560 = vunpack.c.l.b16 %v433
    %v1561 = vunpack.c.h.b16 %v433
    %v1562 = vunpack.c.l.b16 %v434
    %v1563 = vunpack.c.h.b16 %v434
    %v1564 = vunpack.c.l.b16 %v435
    %v1565 = vunpack.c.h.b16 %v435
    %v1566 = vunpack.c.l.b16 %v436
    %v1567 = vunpack.c.h.b16 %v436
    %v1568 = vunpack.c.l.b16 %v437
    %v1569 = vunpack.c.h.b16 %v437
    %v1570 = vunpack.c.l.b16 %v438
    %v1571 = vunpack.c.h.b16 %v438
    %v1572 = vunpack.c.l.b16 %v439
    %v1573 = vunpack.c.h.b16 %v439
    %v1574 = vunpack.c.l.b16 %v440
    %v1575 = vunpack.c.h.b16 %v440
    %v1576 = vunpack.c.l.b16 %v441
    %v1577 = vunpack.c.h.b16 %v441
    %v1578 = vunpack.c.l.b16 %v442
    %v1579 = vunpack.c.h.b16 %v442
    %v1580 = vunpack.c.l.b16 %v443
    %v1581 = vunpack.c.h.b16 %v443
    %v1582 = vunpack.c.l.b16 %v444
    %v1583 = vunpack.c.h.b16 %v444
    %v1584 = vunpack.c.l.b16 %v445
    %v1585 = vunpack.c.h.b16 %v445
    %v1586 = vunpack.c.l.b16 %v446
    %v1587 = vunpack.c.h.b16 %v446
    %v1588 = vunpack.c.l.b16 %v447
    %v1589 = vunpack.c.h.b16 %v447
    %v1590 = vunpack.c.l.b16 %v448
    %v1591 = vunpack.c.h.b16 %v448
    %v1592 = vunpack.c.l.b16 %v449
    %v1593 = vunpack.c.h.b16 %v449
    %v1594 = vunpack.c.l.b16 %v450
    %v1595 = vunpack.c.h.b16 %v450
    %v1596 = vunpack.c.l.b16 %v451
    %v1597 = vunpack.c.h.b16 %v451
    %v1598 = vunpack.c.l.b16 %v452
    %v1599 = vunpack.c.h.b16 %v452
    %v1600 = vunpack.c.l.b16 %v453
    %v1601 = vunpack.c.h.b16 %v453
    %v1602 = vunpack.c.l.b16 %v454
    %v1603 = vunpack.c.h.b16 %v454
    %v1604 = vunpack.c.l.b16 %v455
    %v1605 = vunpack.c.h.b16 %v455
    %v1606 = vunpack.c.l.b16 %v456
    %v1607 = vunpack.c.h.b16 %v456
    %v1608 = vunpack.c.l.b16 %v457
    %v1609 = vunpack.c.h.b16 %v457
    %v1610 = vunpack.c.l.b16 %v458
    %v1611 = vunpack.c.h.b16 %v458
    %v1612 = vunpack.c.l.b16 %v459
    %v1613 = vunpack.c.h.b16 %v459
    %v1614 = vunpack.c.l.b16 %v460
    %v1615 = vunpack.c.h.b16 %v460
    %v1616 = vunpack.c.l.b16 %v461
    %v1617 = vunpack.c.h.b16 %v461
    %v1618 = vunpack.c.l.b16 %v462
    %v1619 = vunpack.c.h.b16 %v462
    %v1620 = vunpack.c.l.b16 %v463
    %v1621 = vunpack.c.h.b16 %v463
    %v1622 = vunpack.c.l.b16 %v464
    %v1623 = vunpack.c.h.b16 %v464
    %v1624 = vunpack.c.l.b16 %v465
    %v1625 = vunpack.c.h.b16 %v465
    %v1626 = vunpack.c.l.b16 %v466
    %v1627 = vunpack.c.h.b16 %v466
    %v1628 = vunpack.c.l.b16 %v467
    %v1629 = vunpack.c.h.b16 %v467
    %v1630 = vunpack.c.l.b16 %v468
    %v1631 = vunpack.c.h.b16 %v468
    %v1632 = vunpack.c.l.b16 %v469
    %v1633 = vunpack.c.h.b16 %v469
    %v1634 = vunpack.c.l.b16 %v470
    %v1635 = vunpack.c.h.b16 %v470
    %v1636 = vunpack.c.l.b16 %v471
    %v1637 = vunpack.c.h.b16 %v471
    %v1638 = vunpack.c.l.b16 %v472
    %v1639 = vunpack.c.h.b16 %v472
    %v1640 = vunpack.c.l.b16 %v473
    %v1641 = vunpack.c.h.b16 %v473
    %v1642 = vunpack.c.l.b16 %v474
    %v1643 = vunpack.c.h.b16 %v474
    %v1644 = vunpack.c.l.b16 %v475
    %v1645 = vunpack.c.h.b16 %v475
    %v1646 = vunpack.c.l.b16 %v476
    %v1647 = vunpack.c.h.b16 %v476
    %v1648 = vunpack.c.l.b16 %v477
    %v1649 = vunpack.c.h.b16 %v477
    %v1650 = vunpack.c.l.b16 %v478
    %v1651 = vunpack.c.h.b16 %v478
    %v1652 = vunpack.c.l.b16 %v479
    %v1653 = vunpack.c.h.b16 %v479
    %v1654 = vunpack.c.l.b16 %v480
    %v1655 = vunpack.c.h.b16 %v480
    %v1656 = vunpack.c.l.b16 %v481
    %v1657 = vunpack.c.h.b16 %v481
    %v1658 = vunpack.c.l.b16 %v482
    %v1659 = vunpack.c.h.b16 %v482
    %v1660 = vunpack.c.l.b16 %v483
    %v1661 = vunpack.c.h.b16 %v483
    %v1662 = vunpack.c.l.b16 %v484
    %v1663 = vunpack.c.h.b16 %v484
    %v1664 = vunpack.c.l.b16 %v485
    %v1665 = vunpack.c.h.b16 %v485
    %v1666 = vunpack.c.l.b16 %v486
    %v1667 = vunpack.c.h.b16 %v486
    %v1668 = vunpack.c.l.b16 %v487
    %v1669 = vunpack.c.h.b16 %v487
    %v1670 = vunpack.c.l.b16 %v488
    %v1671 = vunpack.c.h.b16 %v488
    %v1672 = vunpack.c.l.b16 %v489
    %v1673 = vunpack.c.h.b16 %v489
    %v1674 = vunpack.c.l.b16 %v490
    %v1675 = vunpack.c.h.b16 %v490
    %v1676 = vunpack.c.l.b16 %v491
    %v1677 = vunpack.c.h.b16 %v491
    %v1678 = vunpack.c.l.b16 %v492
    %v1679 = vunpack.c.h.b16 %v492
    %v1680 = vunpack.c.l.b16 %v493
    %v1681 = vunpack.c.h.b16 %v493
    %v1682 = vunpack.c.l.b16 %v494
    %v1683 = vunpack.c.h.b16 %v494
    %v1684 = vunpack.c.l.b16 %v495
    %v1685 = vunpack.c.h.b16 %v495
    %v1686 = vunpack.c.l.b16 %v496
    %v1687 = vunpack.c.h.b16 %v496
    %v1688 = vunpack.c.l.b16 %v497
    %v1689 = vunpack.c.h.b16 %v497
    %v1690 = vunpack.c.l.b16 %v498
    %v1691 = vunpack.c.h.b16 %v498
    %v1692 = vunpack.c.l.b16 %v499
    %v1693 = vunpack.c.h.b16 %v499
    %v1694 = vpack.c.b16 %v918, %v910
    %v1695 = vpack.c.b16 %v919, %v911
    %v1696 = vpack.c.b16 %v920, %v912
    %v1697 = vpack.c.b16 %v921, %v913
    %v1698 = vpack.c.b16 %v922, %v914
    %v1699 = vpack.c.b16 %v923, %v915
    %v1700 = vpack.c.b16 %v924, %v916
    %v1701 = vpack.c.b16 %v925, %v917
    %v1702 = vpack.c.b16 %v934, %v926
    %v1703 = vpack.c.b16 %v935, %v927
    %v1704 = vpack.c.b16 %v936, %v928
    %v1705 = vpack.c.b16 %v937, %v929
    %v1706 = vpack.c.b16 %v938, %v930
    %v1707 = vpack.c.b16 %v939, %v931
    %v1708 = vpack.c.b16 %v940, %v932
    %v1709 = vpack.c.b16 %v941, %v933
    %v1710 = vpack.c.b16 %v950, %v942
    %v1711 = vpack.c.b16 %v951, %v943
    %v1712 = vpack.c.b16 %v952, %v944
    %v1713 = vpack.c.b16 %v953, %v945
    %v1714 = vpack.c.b16 %v954, %v946
    %v1715 = vpack.c.b16 %v955, %v947
    %v1716 = vpack.c.b16 %v956, %v948
    %v1717 = vpack.c.b16 %v957, %v949
    %v1718 = vpack.c.b16 %v966, %v958
    %v1719 = vpack.c.b16 %v967, %v959
    %v1720 = vpack.c.b16 %v968, %v960
    %v1721 = vpack.c.b16 %v969, %v961
    %v1722 = vpack.c.b16 %v970, %v962
    %v1723 = vpack.c.b16 %v971, %v963
    %v1724 = vpack.c.b16 %v972, %v964
    %v1725 = vpack.c.b16 %v973, %v965
    %v1726 = vpack.c.b16 %v982, %v974
    %v1727 = vpack.c.b16 %v983, %v975
    %v1728 = vpack.c.b16 %v984, %v976
    %v1729 = vpack.c.b16 %v985, %v977
    %v1730 = vpack.c.b16 %v986, %v978
    %v1731 = vpack.c.b16 %v987, %v979
    %v1732 = vpack.c.b16 %v988, %v980
    %v1733 = vpack.c.b16 %v989, %v981
    %v1734 = vpack.c.b16 %v998, %v990
    %v1735 = vpack.c.b16 %v999, %v991
    %v1736 = vpack.c.b16 %v1000, %v992
    %v1737 = vpack.c.b16 %v1001, %v993
    %v1738 = vpack.c.b16 %v1002, %v994
    %v1739 = vpack.c.b16 %v1003, %v995
    %v1740 = vpack.c.b16 %v1004, %v996
    %v1741 = vpack.c.b16 %v1005, %v997
    %v1742 = vpack.c.b16 %v1014, %v1006
    %v1743 = vpack.c.b16 %v1015, %v1007
    %v1744 = vpack.c.b16 %v1016, %v1008
    %v1745 = vpack.c.b16 %v1017, %v1009
    %v1746 = vpack.c.b16 %v1018, %v1010
    %v1747 = vpack.c.b16 %v1019, %v1011
    %v1748 = vpack.c.b16 %v1020, %v1012
    %v1749 = vpack.c.b16 %v1021, %v1013
    %v1750 = vpack.c.b16 %v1030, %v1022
    %v1751 = vpack.c.b16 %v1031, %v1023
    %v1752 = vpack.c.b16 %v1032, %v1024
    %v1753 = vpack.c.b16 %v1033, %v1025
    %v1754 = vpack.c.b16 %v1034, %v1026
    %v1755 = vpack.c.b16 %v1035, %v1027
    %v1756 = vpack.c.b16 %v1036, %v1028
    %v1757 = vpack.c.b16 %v1037, %v1029
    %v1758 = vpack.c.b16 %v1046, %v1038
    %v1759 = vpack.c.b16 %v1047, %v1039
    %v1760 = vpack.c.b16 %v1048, %v1040
    %v1761 = vpack.c.b16 %v1049, %v1041
    %v1762 = vpack.c.b16 %v1050, %v1042
    %v1763 = vpack.c.b16 %v1051, %v1043
    %v1764 = vpack.c.b16 %v1052, %v1044
    %v1765 = vpack.c.b16 %v1053, %v1045
    %v1766 = vpack.c.b16 %v1062, %v1054
    %v1767 = vpack.c.b16 %v1063, %v1055
    %v1768 = vpack.c.b16 %v1064, %v1056
    %v1769 = vpack.c.b16 %v1065, %v1057
    %v1770 = vpack.c.b16 %v1066, %v1058
    %v1771 = vpack.c.b16 %v1067, %v1059
    %v1772 = vpack.c.b16 %v1068, %v1060
    %v1773 = vpack.c.b16 %v1069, %v1061
    %v1774 = vpack.c.b16 %v1078, %v1070
    %v1775 = vpack.c.b16 %v1079, %v1071
    %v1776 = vpack.c.b16 %v1080, %v1072
    %v1777 = vpack.c.b16 %v1081, %v1073
    %v1778 = vpack.c.b16 %v1082, %v1074
    %v1779 = vpack.c.b16 %v1083, %v1075
    %v1780 = vpack.c.b16 %v1084, %v1076
    %v1781 = vpack.c.b16 %v1085, %v1077
    %v1782 = vpack.c.b16 %v1094, %v1086
    %v1783 = vpack.c.b16 %v1095, %v1087
    %v1784 = vpack.c.b16 %v1096, %v1088
    %v1785 = vpack.c.b16 %v1097, %v1089
    %v1786 = vpack.c.b16 %v1098, %v1090
    %v1787 = vpack.c.b16 %v1099, %v1091
    %v1788 = vpack.c.b16 %v1100, %v1092
    %v1789 = vpack.c.b16 %v1101, %v1093
    %v1790 = vpack.c.b16 %v1110, %v1102
    %v1791 = vpack.c.b16 %v1111, %v1103
    %v1792 = vpack.c.b16 %v1112, %v1104
    %v1793 = vpack.c.b16 %v1113, %v1105
    %v1794 = vpack.c.b16 %v1114, %v1106
    %v1795 = vpack.c.b16 %v1115, %v1107
    %v1796 = vpack.c.b16 %v1116, %v1108
    %v1797 = vpack.c.b16 %v1117, %v1109
    %v1798 = vpack.c.b16 %v1126, %v1118
    %v1799 = vpack.c.b16 %v1127, %v1119
    %v1800 = vpack.c.b16 %v1128, %v1120
    %v1801 = vpack.c.b16 %v1129, %v1121
    %v1802 = vpack.c.b16 %v1130, %v1122
    %v1803 = vpack.c.b16 %v1131, %v1123
    %v1804 = vpack.c.b16 %v1132, %v1124
    %v1805 = vpack.c.b16 %v1133, %v1125
    %v1806 = vpack.c.b16 %v1142, %v1134
    %v1807 = vpack.c.b16 %v1143, %v1135
    %v1808 = vpack.c.b16 %v1144, %v1136
    %v1809 = vpack.c.b16 %v1145, %v1137
    %v1810 = vpack.c.b16 %v1146, %v1138
    %v1811 = vpack.c.b16 %v1147, %v1139
    %v1812 = vpack.c.b16 %v1148, %v1140
    %v1813 = vpack.c.b16 %v1149, %v1141
    %v1814 = vpack.c.b16 %v1158, %v1150
    %v1815 = vpack.c.b16 %v1159, %v1151
    %v1816 = vpack.c.b16 %v1160, %v1152
    %v1817 = vpack.c.b16 %v1161, %v1153
    %v1818 = vpack.c.b16 %v1162, %v1154
    %v1819 = vpack.c.b16 %v1163, %v1155
    %v1820 = vpack.c.b16 %v1164, %v1156
    %v1821 = vpack.c.b16 %v1165, %v1157
    %v1822 = vpack.c.b16 %v1174, %v1166
    %v1823 = vpack.c.b16 %v1175, %v1167
    %v1824 = vpack.c.b16 %v1176, %v1168
    %v1825 = vpack.c.b16 %v1177, %v1169
    %v1826 = vpack.c.b16 %v1178, %v1170
    %v1827 = vpack.c.b16 %v1179, %v1171
    %v1828 = vpack.c.b16 %v1180, %v1172
    %v1829 = vpack.c.b16 %v1181, %v1173
    %v1830 = vpack.c.b16 %v1190, %v1182
    %v1831 = vpack.c.b16 %v1191, %v1183
    %v1832 = vpack.c.b16 %v1192, %v1184
    %v1833 = vpack.c.b16 %v1193, %v1185
    %v1834 = vpack.c.b16 %v1194, %v1186
    %v1835 = vpack.c.b16 %v1195, %v1187
    %v1836 = vpack.c.b16 %v1196, %v1188
    %v1837 = vpack.c.b16 %v1197, %v1189
    %v1838 = vpack.c.b16 %v1206, %v1198
    %v1839 = vpack.c.b16 %v1207, %v1199
    %v1840 = vpack.c.b16 %v1208, %v1200
    %v1841 = vpack.c.b16 %v1209, %v1201
    %v1842 = vpack.c.b16 %v1210, %v1202
    %v1843 = vpack.c.b16 %v1211, %v1203
    %v1844 = vpack.c.b16 %v1212, %v1204
    %v1845 = vpack.c.b16 %v1213, %v1205
    %v1846 = vpack.c.b16 %v1222, %v1214
    %v1847 = vpack.c.b16 %v1223, %v1215
    %v1848 = vpack.c.b16 %v1224, %v1216
    %v1849 = vpack.c.b16 %v1225, %v1217
    %v1850 = vpack.c.b16 %v1226, %v1218
    %v1851 = vpack.c.b16 %v1227, %v1219
    %v1852 = vpack.c.b16 %v1228, %v1220
    %v1853 = vpack.c.b16 %v1229, %v1221
    %v1854 = vpack.c.b16 %v1238, %v1230
    %v1855 = vpack.c.b16 %v1239, %v1231
    %v1856 = vpack.c.b16 %v1240, %v1232
    %v1857 = vpack.c.b16 %v1241, %v1233
    %v1858 = vpack.c.b16 %v1242, %v1234
    %v1859 = vpack.c.b16 %v1243, %v1235
    %v1860 = vpack.c.b16 %v1244, %v1236
    %v1861 = vpack.c.b16 %v1245, %v1237
    %v1862 = vpack.c.b16 %v1254, %v1246
    %v1863 = vpack.c.b16 %v1255, %v1247
    %v1864 = vpack.c.b16 %v1256, %v1248
    %v1865 = vpack.c.b16 %v1257, %v1249
    %v1866 = vpack.c.b16 %v1258, %v1250
    %v1867 = vpack.c.b16 %v1259, %v1251
    %v1868 = vpack.c.b16 %v1260, %v1252
    %v1869 = vpack.c.b16 %v1261, %v1253
    %v1870 = vpack.c.b16 %v1270, %v1262
    %v1871 = vpack.c.b16 %v1271, %v1263
    %v1872 = vpack.c.b16 %v1272, %v1264
    %v1873 = vpack.c.b16 %v1273, %v1265
    %v1874 = vpack.c.b16 %v1274, %v1266
    %v1875 = vpack.c.b16 %v1275, %v1267
    %v1876 = vpack.c.b16 %v1276, %v1268
    %v1877 = vpack.c.b16 %v1277, %v1269
    %v1878 = vpack.c.b16 %v1286, %v1278
    %v1879 = vpack.c.b16 %v1287, %v1279
    %v1880 = vpack.c.b16 %v1288, %v1280
    %v1881 = vpack.c.b16 %v1289, %v1281
    %v1882 = vpack.c.b16 %v1290, %v1282
    %v1883 = vpack.c.b16 %v1291, %v1283
    %v1884 = vpack.c.b16 %v1292, %v1284
    %v1885 = vpack.c.b16 %v1293, %v1285
    %v1886 = vpack.c.b16 %v1302, %v1294
    %v1887 = vpack.c.b16 %v1303, %v1295
    %v1888 = vpack.c.b16 %v1304, %v1296
    %v1889 = vpack.c.b16 %v1305, %v1297
    %v1890 = vpack.c.b16 %v1306, %v1298
    %v1891 = vpack.c.b16 %v1307, %v1299
    %v1892 = vpack.c.b16 %v1308, %v1300
    %v1893 = vpack.c.b16 %v1309, %v1301
    %v1894 = vpack.c.b16 %v1318, %v1310
    %v1895 = vpack.c.b16 %v1319, %v1311
    %v1896 = vpack.c.b16 %v1320, %v1312
    %v1897 = vpack.c.b16 %v1321, %v1313
    %v1898 = vpack.c.b16 %v1322, %v1314
    %v1899 = vpack.c.b16 %v1323, %v1315
    %v1900 = vpack.c.b16 %v1324, %v1316
    %v1901 = vpack.c.b16 %v1325, %v1317
    %v1902 = vpack.c.b16 %v1334, %v1326
    %v1903 = vpack.c.b16 %v1335, %v1327
    %v1904 = vpack.c.b16 %v1336, %v1328
    %v1905 = vpack.c.b16 %v1337, %v1329
    %v1906 = vpack.c.b16 %v1338, %v1330
    %v1907 = vpack.c.b16 %v1339, %v1331
    %v1908 = vpack.c.b16 %v1340, %v1332
    %v1909 = vpack.c.b16 %v1341, %v1333
    %v1910 = vpack.c.b16 %v1350, %v1342
    %v1911 = vpack.c.b16 %v1351, %v1343
    %v1912 = vpack.c.b16 %v1352, %v1344
    %v1913 = vpack.c.b16 %v1353, %v1345
    %v1914 = vpack.c.b16 %v1354, %v1346
    %v1915 = vpack.c.b16 %v1355, %v1347
    %v1916 = vpack.c.b16 %v1356, %v1348
    %v1917 = vpack.c.b16 %v1357, %v1349
    %v1918 = vpack.c.b16 %v1366, %v1358
    %v1919 = vpack.c.b16 %v1367, %v1359
    %v1920 = vpack.c.b16 %v1368, %v1360
    %v1921 = vpack.c.b16 %v1369, %v1361
    %v1922 = vpack.c.b16 %v1370, %v1362
    %v1923 = vpack.c.b16 %v1371, %v1363
    %v1924 = vpack.c.b16 %v1372, %v1364
    %v1925 = vpack.c.b16 %v1373, %v1365
    %v1926 = vpack.c.b16 %v1382, %v1374
    %v1927 = vpack.c.b16 %v1383, %v1375
    %v1928 = vpack.c.b16 %v1384, %v1376
    %v1929 = vpack.c.b16 %v1385, %v1377
    %v1930 = vpack.c.b16 %v1386, %v1378
    %v1931 = vpack.c.b16 %v1387, %v1379
    %v1932 = vpack.c.b16 %v1388, %v1380
    %v1933 = vpack.c.b16 %v1389, %v1381
    %v1934 = vpack.c.b16 %v1398, %v1390
    %v1935 = vpack.c.b16 %v1399, %v1391
    %v1936 = vpack.c.b16 %v1400, %v1392
    %v1937 = vpack.c.b16 %v1401, %v1393
    %v1938 = vpack.c.b16 %v1402, %v1394
    %v1939 = vpack.c.b16 %v1403, %v1395
    %v1940 = vpack.c.b16 %v1404, %v1396
    %v1941 = vpack.c.b16 %v1405, %v1397
    %v1942 = vpack.c.b16 %v1414, %v1406
    %v1943 = vpack.c.b16 %v1415, %v1407
    %v1944 = vpack.c.b16 %v1416, %v1408
    %v1945 = vpack.c.b16 %v1417, %v1409
    %v1946 = vpack.c.b16 %v1418, %v1410
    %v1947 = vpack.c.b16 %v1419, %v1411
    %v1948 = vpack.c.b16 %v1420, %v1412
    %v1949 = vpack.c.b16 %v1421, %v1413
    %v1950 = vpack.c.b16 %v1430, %v1422
    %v1951 = vpack.c.b16 %v1431, %v1423
    %v1952 = vpack.c.b16 %v1432, %v1424
    %v1953 = vpack.c.b16 %v1433, %v1425
    %v1954 = vpack.c.b16 %v1434, %v1426
    %v1955 = vpack.c.b16 %v1435, %v1427
    %v1956 = vpack.c.b16 %v1436, %v1428
    %v1957 = vpack.c.b16 %v1437, %v1429
    %v1958 = vpack.c.b16 %v1446, %v1438
    %v1959 = vpack.c.b16 %v1447, %v1439
    %v1960 = vpack.c.b16 %v1448, %v1440
    %v1961 = vpack.c.b16 %v1449, %v1441
    %v1962 = vpack.c.b16 %v1450, %v1442
    %v1963 = vpack.c.b16 %v1451, %v1443
    %v1964 = vpack.c.b16 %v1452, %v1444
    %v1965 = vpack.c.b16 %v1453, %v1445
    %v1966 = vpack.c.b16 %v1462, %v1454
    %v1967 = vpack.c.b16 %v1463, %v1455
    %v1968 = vpack.c.b16 %v1464, %v1456
    %v1969 = vpack.c.b16 %v1465, %v1457
    %v1970 = vpack.c.b16 %v1466, %v1458
    %v1971 = vpack.c.b16 %v1467, %v1459
    %v1972 = vpack.c.b16 %v1468, %v1460
    %v1973 = vpack.c.b16 %v1469, %v1461
    %v1974 = vpack.c.b16 %v1478, %v1470
    %v1975 = vpack.c.b16 %v1479, %v1471
    %v1976 = vpack.c.b16 %v1480, %v1472
    %v1977 = vpack.c.b16 %v1481, %v1473
    %v1978 = vpack.c.b16 %v1482, %v1474
    %v1979 = vpack.c.b16 %v1483, %v1475
    %v1980 = vpack.c.b16 %v1484, %v1476
    %v1981 = vpack.c.b16 %v1485, %v1477
    %v1982 = vpack.c.b16 %v1494, %v1486
    %v1983 = vpack.c.b16 %v1495, %v1487
    %v1984 = vpack.c.b16 %v1496, %v1488
    %v1985 = vpack.c.b16 %v1497, %v1489
    %v1986 = vpack.c.b16 %v1498, %v1490
    %v1987 = vpack.c.b16 %v1499, %v1491
    %v1988 = vpack.c.b16 %v1500, %v1492
    %v1989 = vpack.c.b16 %v1501, %v1493
    %v1990 = vpack.c.b16 %v1510, %v1502
    %v1991 = vpack.c.b16 %v1511, %v1503
    %v1992 = vpack.c.b16 %v1512, %v1504
    %v1993 = vpack.c.b16 %v1513, %v1505
    %v1994 = vpack.c.b16 %v1514, %v1506
    %v1995 = vpack.c.b16 %v1515, %v1507
    %v1996 = vpack.c.b16 %v1516, %v1508
    %v1997 = vpack.c.b16 %v1517, %v1509
    %v1998 = vpack.c.b16 %v1526, %v1518
    %v1999 = vpack.c.b16 %v1527, %v1519
    %v2000 = vpack.c.b16 %v1528, %v1520
    %v2001 = vpack.c.b16 %v1529, %v1521
    %v2002 = vpack.c.b16 %v1530, %v1522
    %v2003 = vpack.c.b16 %v1531, %v1523
    %v2004 = vpack.c.b16 %v1532, %v1524
    %v2005 = vpack.c.b16 %v1533, %v1525
    %v2006 = vpack.c.b16 %v1542, %v1534
    %v2007 = vpack.c.b16 %v1543, %v1535
    %v2008 = vpack.c.b16 %v1544, %v1536
    %v2009 = vpack.c.b16 %v1545, %v1537
    %v2010 = vpack.c.b16 %v1546, %v1538
    %v2011 = vpack.c.b16 %v1547, %v1539
    %v2012 = vpack.c.b16 %v1548, %v1540
    %v2013 = vpack.c.b16 %v1549, %v1541
    %v2014 = vpack.c.b16 %v1558, %v1550
    %v2015 = vpack.c.b16 %v1559, %v1551
    %v2016 = vpack.c.b16 %v1560, %v1552
    %v2017 = vpack.c.b16 %v1561, %v1553
    %v2018 = vpack.c.b16 %v1562, %v1554
    %v2019 = vpack.c.b16 %v1563, %v1555
    %v2020 = vpack.c.b16 %v1564, %v1556
    %v2021 = vpack.c.b16 %v1565, %v1557
    %v2022 = vpack.c.b16 %v1574, %v1566
    %v2023 = vpack.c.b16 %v1575, %v1567
    %v2024 = vpack.c.b16 %v1576, %v1568
    %v2025 = vpack.c.b16 %v1577, %v1569
    %v2026 = vpack.c.b16 %v1578, %v1570
    %v2027 = vpack.c.b16 %v1579, %v1571
    %v2028 = vpack.c.b16 %v1580, %v1572
    %v2029 = vpack.c.b16 %v1581, %v1573
    %v2030 = vpack.c.b16 %v1590, %v1582
    %v2031 = vpack.c.b16 %v1591, %v1583
    %v2032 = vpack.c.b16 %v1592, %v1584
    %v2033 = vpack.c.b16 %v1593, %v1585
    %v2034 = vpack.c.b16 %v1594, %v1586
    %v2035 = vpack.c.b16 %v1595, %v1587
    %v2036 = vpack.c.b16 %v1596, %v1588
    %v2037 = vpack.c.b16 %v1597, %v1589
    %v2038 = vpack.c.b16 %v1606, %v1598
    %v2039 = vpack.c.b16 %v1607, %v1599
    %v2040 = vpack.c.b16 %v1608, %v1600
    %v2041 = vpack.c.b16 %v1609, %v1601
    %v2042 = vpack.c.b16 %v1610, %v1602
    %v2043 = vpack.c.b16 %v1611, %v1603
    %v2044 = vpack.c.b16 %v1612, %v1604
    %v2045 = vpack.c.b16 %v1613, %v1605
    %v2046 = vpack.c.b16 %v1622, %v1614
    %v2047 = vpack.c.b16 %v1623, %v1615
    %v2048 = vpack.c.b16 %v1624, %v1616
    %v2049 = vpack.c.b16 %v1625, %v1617
    %v2050 = vpack.c.b16 %v1626, %v1618
    %v2051 = vpack.c.b16 %v1627, %v1619
    %v2052 = vpack.c.b16 %v1628, %v1620
    %v2053 = vpack.c.b16 %v1629, %v1621
    %v2054 = vpack.c.b16 %v1638, %v1630
    %v2055 = vpack.c.b16 %v1639, %v1631
    %v2056 = vpack.c.b16 %v1640, %v1632
    %v2057 = vpack.c.b16 %v1641, %v1633
    %v2058 = vpack.c.b16 %v1642, %v1634
    %v2059 = vpack.c.b16 %v1643, %v1635
    %v2060 = vpack.c.b16 %v1644, %v1636
    %v2061 = vpack.c.b16 %v1645, %v1637
    %v2062 = vpack.c.b16 %v1654, %v1646
    %v2063 = vpack.c.b16 %v1655, %v1647
    %v2064 = vpack.c.b16 %v1656, %v1648
    %v2065 = vpack.c.b16 %v1657, %v1649
    %v2066 = vpack.c.b16 %v1658, %v1650
    %v2067 = vpack.c.b16 %v1659, %v1651
    %v2068 = vpack.c.b16 %v1660, %v1652
    %v2069 = vpack.c.b16 %v1661, %v1653
    %v2070 = vpack.c.b16 %v1670, %v1662
    %v2071 = vpack.c.b16 %v1671, %v1663
    %v2072 = vpack.c.b16 %v1672, %v1664
    %v2073 = vpack.c.b16 %v1673, %v1665
    %v2074 = vpack.c.b16 %v1674, %v1666
    %v2075 = vpack.c.b16 %v1675, %v1667
    %v2076 = vpack.c.b16 %v1676, %v1668
    %v2077 = vpack.c.b16 %v1677, %v1669
    %v2078 = vpack.c.b16 %v1686, %v1678
    %v2079 = vpack.c.b16 %v1687, %v1679
    %v2080 = vpack.c.b16 %v1688, %v1680
    %v2081 = vpack.c.b16 %v1689, %v1681
    %v2082 = vpack.c.b16 %v1690, %v1682
    %v2083 = vpack.c.b16 %v1691, %v1683
    %v2084 = vpack.c.b16 %v1692, %v1684
    %v2085 = vpack.c.b16 %v1693, %v1685
    %vm2478 = vcmask 130048
    %v2480 = vsel %vm2478, %v107, 0
    %2482 = vmatpush.bf16.msra.mxu0 %v1750
    %2483 = vmatpush.bf16.msra.mxu0 %v1742
    %2484 = vmatpush.bf16.msra.mxu0 %v1734
    %2485 = vmatpush.bf16.msra.mxu0 %v1726
    %2486 = vmatpush.bf16.msra.mxu0 %v1718
    %2487 = vmatpush.bf16.msra.mxu0 %v1710
    %2488 = vmatpush.bf16.msra.mxu0 %v1702
    %2489 = vmatpush.bf16.msra.mxu0 %v1694
    %2490 = vmatmul.bf16.gmra.mxu0 %v101
    %v2491 = vpop.f32.mrf.mxu0
    %v2492 = vadd.f32 %v502, %v2491
    %v2493 = vpop.f32.mrf.mxu0
    %2494 = vdwg.mxu0
    %2495 = vmatpush.bf16.msra.mxu0 %v1814
    %2496 = vmatpush.bf16.msra.mxu0 %v1806
    %2497 = vmatpush.bf16.msra.mxu0 %v1798
    %2498 = vmatpush.bf16.msra.mxu0 %v1790
    %2499 = vmatpush.bf16.msra.mxu0 %v1782
    %2500 = vmatpush.bf16.msra.mxu0 %v1774
    %2501 = vmatpush.bf16.msra.mxu0 %v1766
    %2502 = vmatpush.bf16.msra.mxu0 %v1758
    %2503 = vmatmul.bf16.gmra.mxu0 %v102
    %v2504 = vpop.f32.mrf.mxu0
    %v2505 = vadd.f32 %v2492, %v2504
    %v2506 = vpop.f32.mrf.mxu0
    %2507 = vdwg.mxu0
    %2508 = vmatpush.bf16.msra.mxu0 %v1878
    %2509 = vmatpush.bf16.msra.mxu0 %v1870
    %2510 = vmatpush.bf16.msra.mxu0 %v1862
    %2511 = vmatpush.bf16.msra.mxu0 %v1854
    %2512 = vmatpush.bf16.msra.mxu0 %v1846
    %2513 = vmatpush.bf16.msra.mxu0 %v1838
    %2514 = vmatpush.bf16.msra.mxu0 %v1830
    %2515 = vmatpush.bf16.msra.mxu0 %v1822
    %2516 = vmatmul.bf16.gmra.mxu0 %v103
    %v2517 = vpop.f32.mrf.mxu0
    %v2518 = vadd.f32 %v2505, %v2517
    %v2519 = vpop.f32.mrf.mxu0
    %2520 = vdwg.mxu0
    %2521 = vmatpush.bf16.msra.mxu0 %v1942
    %2522 = vmatpush.bf16.msra.mxu0 %v1934
    %2523 = vmatpush.bf16.msra.mxu0 %v1926
    %2524 = vmatpush.bf16.msra.mxu0 %v1918
    %2525 = vmatpush.bf16.msra.mxu0 %v1910
    %2526 = vmatpush.bf16.msra.mxu0 %v1902
    %2527 = vmatpush.bf16.msra.mxu0 %v1894
    %2528 = vmatpush.bf16.msra.mxu0 %v1886
    %2529 = vmatmul.bf16.gmra.mxu0 %v104
    %v2530 = vpop.f32.mrf.mxu0
    %v2531 = vadd.f32 %v2518, %v2530
    %v2532 = vpop.f32.mrf.mxu0
    %2533 = vdwg.mxu0
    %2534 = vmatpush.bf16.msra.mxu0 %v2006
    %2535 = vmatpush.bf16.msra.mxu0 %v1998
    %2536 = vmatpush.bf16.msra.mxu0 %v1990
    %2537 = vmatpush.bf16.msra.mxu0 %v1982
    %2538 = vmatpush.bf16.msra.mxu0 %v1974
    %2539 = vmatpush.bf16.msra.mxu0 %v1966
    %2540 = vmatpush.bf16.msra.mxu0 %v1958
    %2541 = vmatpush.bf16.msra.mxu0 %v1950
    %2542 = vmatmul.bf16.gmra.mxu0 %v105
    %v2543 = vpop.f32.mrf.mxu0
    %v2544 = vadd.f32 %v2531, %v2543
    %v2545 = vpop.f32.mrf.mxu0
    %2546 = vdwg.mxu0
    %2547 = vmatpush.bf16.msra.mxu0 %v2070
    %2548 = vmatpush.bf16.msra.mxu0 %v2062
    %2549 = vmatpush.bf16.msra.mxu0 %v2054
    %2550 = vmatpush.bf16.msra.mxu0 %v2046
    %2551 = vmatpush.bf16.msra.mxu0 %v2038
    %2552 = vmatpush.bf16.msra.mxu0 %v2030
    %2553 = vmatpush.bf16.msra.mxu0 %v2022
    %2554 = vmatpush.bf16.msra.mxu0 %v2014
    %2555 = vmatmul.bf16.gmra.mxu0 %v106
    %v2556 = vpop.f32.mrf.mxu0
    %v2557 = vadd.f32 %v2544, %v2556
    %v2558 = vpop.f32.mrf.mxu0
    %2559 = vdwg.mxu0
    %2560 = vmatpush.bf16.msra.mxu0 0
    %2561 = vmatpush.bf16.msra.mxu0 0
    %2562 = vmatpush.bf16.msra.mxu0 0
    %2563 = vmatpush.bf16.msra.mxu0 0
    %2564 = vmatpush.bf16.msra.mxu0 0
    %2565 = vmatpush.bf16.msra.mxu0 0
    %2566 = vmatpush.bf16.msra.mxu0 0
    %2567 = vmatpush.bf16.msra.mxu0 %v2078
    %2568 = vmatmul.bf16.gmra.mxu0 %v2480
    %v2569 = vpop.f32.mrf.mxu0
    %v2570 = vadd.f32 %v2557, %v2569
    %v2571 = vpop.f32.mrf.mxu0
    %2572 = vdwg.mxu0
    %2573 = vmatpush.bf16.msra.mxu0 %v1751
    %2574 = vmatpush.bf16.msra.mxu0 %v1743
    %2575 = vmatpush.bf16.msra.mxu0 %v1735
    %2576 = vmatpush.bf16.msra.mxu0 %v1727
    %2577 = vmatpush.bf16.msra.mxu0 %v1719
    %2578 = vmatpush.bf16.msra.mxu0 %v1711
    %2579 = vmatpush.bf16.msra.mxu0 %v1703
    %2580 = vmatpush.bf16.msra.mxu0 %v1695
    %2581 = vmatmul.bf16.gmra.mxu0 %v101
    %v2582 = vpop.f32.mrf.mxu0
    %v2583 = vadd.f32 %v503, %v2582
    %v2584 = vpop.f32.mrf.mxu0
    %2585 = vdwg.mxu0
    %2586 = vmatpush.bf16.msra.mxu0 %v1815
    %2587 = vmatpush.bf16.msra.mxu0 %v1807
    %2588 = vmatpush.bf16.msra.mxu0 %v1799
    %2589 = vmatpush.bf16.msra.mxu0 %v1791
    %2590 = vmatpush.bf16.msra.mxu0 %v1783
    %2591 = vmatpush.bf16.msra.mxu0 %v1775
    %2592 = vmatpush.bf16.msra.mxu0 %v1767
    %2593 = vmatpush.bf16.msra.mxu0 %v1759
    %2594 = vmatmul.bf16.gmra.mxu0 %v102
    %v2595 = vpop.f32.mrf.mxu0
    %v2596 = vadd.f32 %v2583, %v2595
    %v2597 = vpop.f32.mrf.mxu0
    %2598 = vdwg.mxu0
    %2599 = vmatpush.bf16.msra.mxu0 %v1879
    %2600 = vmatpush.bf16.msra.mxu0 %v1871
    %2601 = vmatpush.bf16.msra.mxu0 %v1863
    %2602 = vmatpush.bf16.msra.mxu0 %v1855
    %2603 = vmatpush.bf16.msra.mxu0 %v1847
    %2604 = vmatpush.bf16.msra.mxu0 %v1839
    %2605 = vmatpush.bf16.msra.mxu0 %v1831
    %2606 = vmatpush.bf16.msra.mxu0 %v1823
    %2607 = vmatmul.bf16.gmra.mxu0 %v103
    %v2608 = vpop.f32.mrf.mxu0
    %v2609 = vadd.f32 %v2596, %v2608
    %v2610 = vpop.f32.mrf.mxu0
    %2611 = vdwg.mxu0
    %2612 = vmatpush.bf16.msra.mxu0 %v1943
    %2613 = vmatpush.bf16.msra.mxu0 %v1935
    %2614 = vmatpush.bf16.msra.mxu0 %v1927
    %2615 = vmatpush.bf16.msra.mxu0 %v1919
    %2616 = vmatpush.bf16.msra.mxu0 %v1911
    %2617 = vmatpush.bf16.msra.mxu0 %v1903
    %2618 = vmatpush.bf16.msra.mxu0 %v1895
    %2619 = vmatpush.bf16.msra.mxu0 %v1887
    %2620 = vmatmul.bf16.gmra.mxu0 %v104
    %v2621 = vpop.f32.mrf.mxu0
    %v2622 = vadd.f32 %v2609, %v2621
    %v2623 = vpop.f32.mrf.mxu0
    %2624 = vdwg.mxu0
    %2625 = vmatpush.bf16.msra.mxu0 %v2007
    %2626 = vmatpush.bf16.msra.mxu0 %v1999
    %2627 = vmatpush.bf16.msra.mxu0 %v1991
    %2628 = vmatpush.bf16.msra.mxu0 %v1983
    %2629 = vmatpush.bf16.msra.mxu0 %v1975
    %2630 = vmatpush.bf16.msra.mxu0 %v1967
    %2631 = vmatpush.bf16.msra.mxu0 %v1959
    %2632 = vmatpush.bf16.msra.mxu0 %v1951
    %2633 = vmatmul.bf16.gmra.mxu0 %v105
    %v2634 = vpop.f32.mrf.mxu0
    %v2635 = vadd.f32 %v2622, %v2634
    %v2636 = vpop.f32.mrf.mxu0
    %2637 = vdwg.mxu0
    %2638 = vmatpush.bf16.msra.mxu0 %v2071
    %2639 = vmatpush.bf16.msra.mxu0 %v2063
    %2640 = vmatpush.bf16.msra.mxu0 %v2055
    %2641 = vmatpush.bf16.msra.mxu0 %v2047
    %2642 = vmatpush.bf16.msra.mxu0 %v2039
    %2643 = vmatpush.bf16.msra.mxu0 %v2031
    %2644 = vmatpush.bf16.msra.mxu0 %v2023
    %2645 = vmatpush.bf16.msra.mxu0 %v2015
    %2646 = vmatmul.bf16.gmra.mxu0 %v106
    %v2647 = vpop.f32.mrf.mxu0
    %v2648 = vadd.f32 %v2635, %v2647
    %v2649 = vpop.f32.mrf.mxu0
    %2650 = vdwg.mxu0
    %2651 = vmatpush.bf16.msra.mxu0 0
    %2652 = vmatpush.bf16.msra.mxu0 0
    %2653 = vmatpush.bf16.msra.mxu0 0
    %2654 = vmatpush.bf16.msra.mxu0 0
    %2655 = vmatpush.bf16.msra.mxu0 0
    %2656 = vmatpush.bf16.msra.mxu0 0
    %2657 = vmatpush.bf16.msra.mxu0 0
    %2658 = vmatpush.bf16.msra.mxu0 %v2079
    %2659 = vmatmul.bf16.gmra.mxu0 %v2480
    %v2660 = vpop.f32.mrf.mxu0
    %v2661 = vadd.f32 %v2648, %v2660
    %v2662 = vpop.f32.mrf.mxu0
    %2663 = vdwg.mxu0
    %2664 = vmatpush.bf16.msra.mxu0 %v1752
    %2665 = vmatpush.bf16.msra.mxu0 %v1744
    %2666 = vmatpush.bf16.msra.mxu0 %v1736
    %2667 = vmatpush.bf16.msra.mxu0 %v1728
    %2668 = vmatpush.bf16.msra.mxu0 %v1720
    %2669 = vmatpush.bf16.msra.mxu0 %v1712
    %2670 = vmatpush.bf16.msra.mxu0 %v1704
    %2671 = vmatpush.bf16.msra.mxu0 %v1696
    %2672 = vmatmul.bf16.gmra.mxu0 %v101
    %v2673 = vpop.f32.mrf.mxu0
    %v2674 = vadd.f32 %v504, %v2673
    %v2675 = vpop.f32.mrf.mxu0
    %2676 = vdwg.mxu0
    %2677 = vmatpush.bf16.msra.mxu0 %v1816
    %2678 = vmatpush.bf16.msra.mxu0 %v1808
    %2679 = vmatpush.bf16.msra.mxu0 %v1800
    %2680 = vmatpush.bf16.msra.mxu0 %v1792
    %2681 = vmatpush.bf16.msra.mxu0 %v1784
    %2682 = vmatpush.bf16.msra.mxu0 %v1776
    %2683 = vmatpush.bf16.msra.mxu0 %v1768
    %2684 = vmatpush.bf16.msra.mxu0 %v1760
    %2685 = vmatmul.bf16.gmra.mxu0 %v102
    %v2686 = vpop.f32.mrf.mxu0
    %v2687 = vadd.f32 %v2674, %v2686
    %v2688 = vpop.f32.mrf.mxu0
    %2689 = vdwg.mxu0
    %2690 = vmatpush.bf16.msra.mxu0 %v1880
    %2691 = vmatpush.bf16.msra.mxu0 %v1872
    %2692 = vmatpush.bf16.msra.mxu0 %v1864
    %2693 = vmatpush.bf16.msra.mxu0 %v1856
    %2694 = vmatpush.bf16.msra.mxu0 %v1848
    %2695 = vmatpush.bf16.msra.mxu0 %v1840
    %2696 = vmatpush.bf16.msra.mxu0 %v1832
    %2697 = vmatpush.bf16.msra.mxu0 %v1824
    %2698 = vmatmul.bf16.gmra.mxu0 %v103
    %v2699 = vpop.f32.mrf.mxu0
    %v2700 = vadd.f32 %v2687, %v2699
    %v2701 = vpop.f32.mrf.mxu0
    %2702 = vdwg.mxu0
    %2703 = vmatpush.bf16.msra.mxu0 %v1944
    %2704 = vmatpush.bf16.msra.mxu0 %v1936
    %2705 = vmatpush.bf16.msra.mxu0 %v1928
    %2706 = vmatpush.bf16.msra.mxu0 %v1920
    %2707 = vmatpush.bf16.msra.mxu0 %v1912
    %2708 = vmatpush.bf16.msra.mxu0 %v1904
    %2709 = vmatpush.bf16.msra.mxu0 %v1896
    %2710 = vmatpush.bf16.msra.mxu0 %v1888
    %2711 = vmatmul.bf16.gmra.mxu0 %v104
    %v2712 = vpop.f32.mrf.mxu0
    %v2713 = vadd.f32 %v2700, %v2712
    %v2714 = vpop.f32.mrf.mxu0
    %2715 = vdwg.mxu0
    %2716 = vmatpush.bf16.msra.mxu0 %v2008
    %2717 = vmatpush.bf16.msra.mxu0 %v2000
    %2718 = vmatpush.bf16.msra.mxu0 %v1992
    %2719 = vmatpush.bf16.msra.mxu0 %v1984
    %2720 = vmatpush.bf16.msra.mxu0 %v1976
    %2721 = vmatpush.bf16.msra.mxu0 %v1968
    %2722 = vmatpush.bf16.msra.mxu0 %v1960
    %2723 = vmatpush.bf16.msra.mxu0 %v1952
    %2724 = vmatmul.bf16.gmra.mxu0 %v105
    %v2725 = vpop.f32.mrf.mxu0
    %v2726 = vadd.f32 %v2713, %v2725
    %v2727 = vpop.f32.mrf.mxu0
    %2728 = vdwg.mxu0
    %2729 = vmatpush.bf16.msra.mxu0 %v2072
    %2730 = vmatpush.bf16.msra.mxu0 %v2064
    %2731 = vmatpush.bf16.msra.mxu0 %v2056
    %2732 = vmatpush.bf16.msra.mxu0 %v2048
    %2733 = vmatpush.bf16.msra.mxu0 %v2040
    %2734 = vmatpush.bf16.msra.mxu0 %v2032
    %2735 = vmatpush.bf16.msra.mxu0 %v2024
    %2736 = vmatpush.bf16.msra.mxu0 %v2016
    %2737 = vmatmul.bf16.gmra.mxu0 %v106
    %v2738 = vpop.f32.mrf.mxu0
    %v2739 = vadd.f32 %v2726, %v2738
    %v2740 = vpop.f32.mrf.mxu0
    %2741 = vdwg.mxu0
    %2742 = vmatpush.bf16.msra.mxu0 0
    %2743 = vmatpush.bf16.msra.mxu0 0
    %2744 = vmatpush.bf16.msra.mxu0 0
    %2745 = vmatpush.bf16.msra.mxu0 0
    %2746 = vmatpush.bf16.msra.mxu0 0
    %2747 = vmatpush.bf16.msra.mxu0 0
    %2748 = vmatpush.bf16.msra.mxu0 0
    %2749 = vmatpush.bf16.msra.mxu0 %v2080
    %2750 = vmatmul.bf16.gmra.mxu0 %v2480
    %v2751 = vpop.f32.mrf.mxu0
    %v2752 = vadd.f32 %v2739, %v2751
    %v2753 = vpop.f32.mrf.mxu0
    %2754 = vdwg.mxu0
    %2755 = vmatpush.bf16.msra.mxu0 %v1753
    %2756 = vmatpush.bf16.msra.mxu0 %v1745
    %2757 = vmatpush.bf16.msra.mxu0 %v1737
    %2758 = vmatpush.bf16.msra.mxu0 %v1729
    %2759 = vmatpush.bf16.msra.mxu0 %v1721
    %2760 = vmatpush.bf16.msra.mxu0 %v1713
    %2761 = vmatpush.bf16.msra.mxu0 %v1705
    %2762 = vmatpush.bf16.msra.mxu0 %v1697
    %2763 = vmatmul.bf16.gmra.mxu0 %v101
    %v2764 = vpop.f32.mrf.mxu0
    %v2765 = vadd.f32 %v505, %v2764
    %v2766 = vpop.f32.mrf.mxu0
    %2767 = vdwg.mxu0
    %2768 = vmatpush.bf16.msra.mxu0 %v1817
    %2769 = vmatpush.bf16.msra.mxu0 %v1809
    %2770 = vmatpush.bf16.msra.mxu0 %v1801
    %2771 = vmatpush.bf16.msra.mxu0 %v1793
    %2772 = vmatpush.bf16.msra.mxu0 %v1785
    %2773 = vmatpush.bf16.msra.mxu0 %v1777
    %2774 = vmatpush.bf16.msra.mxu0 %v1769
    %2775 = vmatpush.bf16.msra.mxu0 %v1761
    %2776 = vmatmul.bf16.gmra.mxu0 %v102
    %v2777 = vpop.f32.mrf.mxu0
    %v2778 = vadd.f32 %v2765, %v2777
    %v2779 = vpop.f32.mrf.mxu0
    %2780 = vdwg.mxu0
    %2781 = vmatpush.bf16.msra.mxu0 %v1881
    %2782 = vmatpush.bf16.msra.mxu0 %v1873
    %2783 = vmatpush.bf16.msra.mxu0 %v1865
    %2784 = vmatpush.bf16.msra.mxu0 %v1857
    %2785 = vmatpush.bf16.msra.mxu0 %v1849
    %2786 = vmatpush.bf16.msra.mxu0 %v1841
    %2787 = vmatpush.bf16.msra.mxu0 %v1833
    %2788 = vmatpush.bf16.msra.mxu0 %v1825
    %2789 = vmatmul.bf16.gmra.mxu0 %v103
    %v2790 = vpop.f32.mrf.mxu0
    %v2791 = vadd.f32 %v2778, %v2790
    %v2792 = vpop.f32.mrf.mxu0
    %2793 = vdwg.mxu0
    %2794 = vmatpush.bf16.msra.mxu0 %v1945
    %2795 = vmatpush.bf16.msra.mxu0 %v1937
    %2796 = vmatpush.bf16.msra.mxu0 %v1929
    %2797 = vmatpush.bf16.msra.mxu0 %v1921
    %2798 = vmatpush.bf16.msra.mxu0 %v1913
    %2799 = vmatpush.bf16.msra.mxu0 %v1905
    %2800 = vmatpush.bf16.msra.mxu0 %v1897
    %2801 = vmatpush.bf16.msra.mxu0 %v1889
    %2802 = vmatmul.bf16.gmra.mxu0 %v104
    %v2803 = vpop.f32.mrf.mxu0
    %v2804 = vadd.f32 %v2791, %v2803
    %v2805 = vpop.f32.mrf.mxu0
    %2806 = vdwg.mxu0
    %2807 = vmatpush.bf16.msra.mxu0 %v2009
    %2808 = vmatpush.bf16.msra.mxu0 %v2001
    %2809 = vmatpush.bf16.msra.mxu0 %v1993
    %2810 = vmatpush.bf16.msra.mxu0 %v1985
    %2811 = vmatpush.bf16.msra.mxu0 %v1977
    %2812 = vmatpush.bf16.msra.mxu0 %v1969
    %2813 = vmatpush.bf16.msra.mxu0 %v1961
    %2814 = vmatpush.bf16.msra.mxu0 %v1953
    %2815 = vmatmul.bf16.gmra.mxu0 %v105
    %v2816 = vpop.f32.mrf.mxu0
    %v2817 = vadd.f32 %v2804, %v2816
    %v2818 = vpop.f32.mrf.mxu0
    %2819 = vdwg.mxu0
    %2820 = vmatpush.bf16.msra.mxu0 %v2073
    %2821 = vmatpush.bf16.msra.mxu0 %v2065
    %2822 = vmatpush.bf16.msra.mxu0 %v2057
    %2823 = vmatpush.bf16.msra.mxu0 %v2049
    %2824 = vmatpush.bf16.msra.mxu0 %v2041
    %2825 = vmatpush.bf16.msra.mxu0 %v2033
    %2826 = vmatpush.bf16.msra.mxu0 %v2025
    %2827 = vmatpush.bf16.msra.mxu0 %v2017
    %2828 = vmatmul.bf16.gmra.mxu0 %v106
    %v2829 = vpop.f32.mrf.mxu0
    %v2830 = vadd.f32 %v2817, %v2829
    %v2831 = vpop.f32.mrf.mxu0
    %2832 = vdwg.mxu0
    %2833 = vmatpush.bf16.msra.mxu0 0
    %2834 = vmatpush.bf16.msra.mxu0 0
    %2835 = vmatpush.bf16.msra.mxu0 0
    %2836 = vmatpush.bf16.msra.mxu0 0
    %2837 = vmatpush.bf16.msra.mxu0 0
    %2838 = vmatpush.bf16.msra.mxu0 0
    %2839 = vmatpush.bf16.msra.mxu0 0
    %2840 = vmatpush.bf16.msra.mxu0 %v2081
    %2841 = vmatmul.bf16.gmra.mxu0 %v2480
    %v2842 = vpop.f32.mrf.mxu0
    %v2843 = vadd.f32 %v2830, %v2842
    %v2844 = vpop.f32.mrf.mxu0
    %2845 = vdwg.mxu0
    %2846 = vmatpush.bf16.msra.mxu0 %v1754
    %2847 = vmatpush.bf16.msra.mxu0 %v1746
    %2848 = vmatpush.bf16.msra.mxu0 %v1738
    %2849 = vmatpush.bf16.msra.mxu0 %v1730
    %2850 = vmatpush.bf16.msra.mxu0 %v1722
    %2851 = vmatpush.bf16.msra.mxu0 %v1714
    %2852 = vmatpush.bf16.msra.mxu0 %v1706
    %2853 = vmatpush.bf16.msra.mxu0 %v1698
    %2854 = vmatmul.bf16.gmra.mxu0 %v101
    %v2855 = vpop.f32.mrf.mxu0
    %v2856 = vadd.f32 %v506, %v2855
    %v2857 = vpop.f32.mrf.mxu0
    %2858 = vdwg.mxu0
    %2859 = vmatpush.bf16.msra.mxu0 %v1818
    %2860 = vmatpush.bf16.msra.mxu0 %v1810
    %2861 = vmatpush.bf16.msra.mxu0 %v1802
    %2862 = vmatpush.bf16.msra.mxu0 %v1794
    %2863 = vmatpush.bf16.msra.mxu0 %v1786
    %2864 = vmatpush.bf16.msra.mxu0 %v1778
    %2865 = vmatpush.bf16.msra.mxu0 %v1770
    %2866 = vmatpush.bf16.msra.mxu0 %v1762
    %2867 = vmatmul.bf16.gmra.mxu0 %v102
    %v2868 = vpop.f32.mrf.mxu0
    %v2869 = vadd.f32 %v2856, %v2868
    %v2870 = vpop.f32.mrf.mxu0
    %2871 = vdwg.mxu0
    %2872 = vmatpush.bf16.msra.mxu0 %v1882
    %2873 = vmatpush.bf16.msra.mxu0 %v1874
    %2874 = vmatpush.bf16.msra.mxu0 %v1866
    %2875 = vmatpush.bf16.msra.mxu0 %v1858
    %2876 = vmatpush.bf16.msra.mxu0 %v1850
    %2877 = vmatpush.bf16.msra.mxu0 %v1842
    %2878 = vmatpush.bf16.msra.mxu0 %v1834
    %2879 = vmatpush.bf16.msra.mxu0 %v1826
    %2880 = vmatmul.bf16.gmra.mxu0 %v103
    %v2881 = vpop.f32.mrf.mxu0
    %v2882 = vadd.f32 %v2869, %v2881
    %v2883 = vpop.f32.mrf.mxu0
    %2884 = vdwg.mxu0
    %2885 = vmatpush.bf16.msra.mxu0 %v1946
    %2886 = vmatpush.bf16.msra.mxu0 %v1938
    %2887 = vmatpush.bf16.msra.mxu0 %v1930
    %2888 = vmatpush.bf16.msra.mxu0 %v1922
    %2889 = vmatpush.bf16.msra.mxu0 %v1914
    %2890 = vmatpush.bf16.msra.mxu0 %v1906
    %2891 = vmatpush.bf16.msra.mxu0 %v1898
    %2892 = vmatpush.bf16.msra.mxu0 %v1890
    %2893 = vmatmul.bf16.gmra.mxu0 %v104
    %v2894 = vpop.f32.mrf.mxu0
    %v2895 = vadd.f32 %v2882, %v2894
    %v2896 = vpop.f32.mrf.mxu0
    %2897 = vdwg.mxu0
    %2898 = vmatpush.bf16.msra.mxu0 %v2010
    %2899 = vmatpush.bf16.msra.mxu0 %v2002
    %2900 = vmatpush.bf16.msra.mxu0 %v1994
    %2901 = vmatpush.bf16.msra.mxu0 %v1986
    %2902 = vmatpush.bf16.msra.mxu0 %v1978
    %2903 = vmatpush.bf16.msra.mxu0 %v1970
    %2904 = vmatpush.bf16.msra.mxu0 %v1962
    %2905 = vmatpush.bf16.msra.mxu0 %v1954
    %2906 = vmatmul.bf16.gmra.mxu0 %v105
    %v2907 = vpop.f32.mrf.mxu0
    %v2908 = vadd.f32 %v2895, %v2907
    %v2909 = vpop.f32.mrf.mxu0
    %2910 = vdwg.mxu0
    %2911 = vmatpush.bf16.msra.mxu0 %v2074
    %2912 = vmatpush.bf16.msra.mxu0 %v2066
    %2913 = vmatpush.bf16.msra.mxu0 %v2058
    %2914 = vmatpush.bf16.msra.mxu0 %v2050
    %2915 = vmatpush.bf16.msra.mxu0 %v2042
    %2916 = vmatpush.bf16.msra.mxu0 %v2034
    %2917 = vmatpush.bf16.msra.mxu0 %v2026
    %2918 = vmatpush.bf16.msra.mxu0 %v2018
    %2919 = vmatmul.bf16.gmra.mxu0 %v106
    %v2920 = vpop.f32.mrf.mxu0
    %v2921 = vadd.f32 %v2908, %v2920
    %v2922 = vpop.f32.mrf.mxu0
    %2923 = vdwg.mxu0
    %2924 = vmatpush.bf16.msra.mxu0 0
    %2925 = vmatpush.bf16.msra.mxu0 0
    %2926 = vmatpush.bf16.msra.mxu0 0
    %2927 = vmatpush.bf16.msra.mxu0 0
    %2928 = vmatpush.bf16.msra.mxu0 0
    %2929 = vmatpush.bf16.msra.mxu0 0
    %2930 = vmatpush.bf16.msra.mxu0 0
    %2931 = vmatpush.bf16.msra.mxu0 %v2082
    %2932 = vmatmul.bf16.gmra.mxu0 %v2480
    %v2933 = vpop.f32.mrf.mxu0
    %v2934 = vadd.f32 %v2921, %v2933
    %v2935 = vpop.f32.mrf.mxu0
    %2936 = vdwg.mxu0
    %2937 = vmatpush.bf16.msra.mxu0 %v1755
    %2938 = vmatpush.bf16.msra.mxu0 %v1747
    %2939 = vmatpush.bf16.msra.mxu0 %v1739
    %2940 = vmatpush.bf16.msra.mxu0 %v1731
    %2941 = vmatpush.bf16.msra.mxu0 %v1723
    %2942 = vmatpush.bf16.msra.mxu0 %v1715
    %2943 = vmatpush.bf16.msra.mxu0 %v1707
    %2944 = vmatpush.bf16.msra.mxu0 %v1699
    %2945 = vmatmul.bf16.gmra.mxu0 %v101
    %v2946 = vpop.f32.mrf.mxu0
    %v2947 = vadd.f32 %v507, %v2946
    %v2948 = vpop.f32.mrf.mxu0
    %2949 = vdwg.mxu0
    %2950 = vmatpush.bf16.msra.mxu0 %v1819
    %2951 = vmatpush.bf16.msra.mxu0 %v1811
    %2952 = vmatpush.bf16.msra.mxu0 %v1803
    %2953 = vmatpush.bf16.msra.mxu0 %v1795
    %2954 = vmatpush.bf16.msra.mxu0 %v1787
    %2955 = vmatpush.bf16.msra.mxu0 %v1779
    %2956 = vmatpush.bf16.msra.mxu0 %v1771
    %2957 = vmatpush.bf16.msra.mxu0 %v1763
    %2958 = vmatmul.bf16.gmra.mxu0 %v102
    %v2959 = vpop.f32.mrf.mxu0
    %v2960 = vadd.f32 %v2947, %v2959
    %v2961 = vpop.f32.mrf.mxu0
    %2962 = vdwg.mxu0
    %2963 = vmatpush.bf16.msra.mxu0 %v1883
    %2964 = vmatpush.bf16.msra.mxu0 %v1875
    %2965 = vmatpush.bf16.msra.mxu0 %v1867
    %2966 = vmatpush.bf16.msra.mxu0 %v1859
    %2967 = vmatpush.bf16.msra.mxu0 %v1851
    %2968 = vmatpush.bf16.msra.mxu0 %v1843
    %2969 = vmatpush.bf16.msra.mxu0 %v1835
    %2970 = vmatpush.bf16.msra.mxu0 %v1827
    %2971 = vmatmul.bf16.gmra.mxu0 %v103
    %v2972 = vpop.f32.mrf.mxu0
    %v2973 = vadd.f32 %v2960, %v2972
    %v2974 = vpop.f32.mrf.mxu0
    %2975 = vdwg.mxu0
    %2976 = vmatpush.bf16.msra.mxu0 %v1947
    %2977 = vmatpush.bf16.msra.mxu0 %v1939
    %2978 = vmatpush.bf16.msra.mxu0 %v1931
    %2979 = vmatpush.bf16.msra.mxu0 %v1923
    %2980 = vmatpush.bf16.msra.mxu0 %v1915
    %2981 = vmatpush.bf16.msra.mxu0 %v1907
    %2982 = vmatpush.bf16.msra.mxu0 %v1899
    %2983 = vmatpush.bf16.msra.mxu0 %v1891
    %2984 = vmatmul.bf16.gmra.mxu0 %v104
    %v2985 = vpop.f32.mrf.mxu0
    %v2986 = vadd.f32 %v2973, %v2985
    %v2987 = vpop.f32.mrf.mxu0
    %2988 = vdwg.mxu0
    %2989 = vmatpush.bf16.msra.mxu0 %v2011
    %2990 = vmatpush.bf16.msra.mxu0 %v2003
    %2991 = vmatpush.bf16.msra.mxu0 %v1995
    %2992 = vmatpush.bf16.msra.mxu0 %v1987
    %2993 = vmatpush.bf16.msra.mxu0 %v1979
    %2994 = vmatpush.bf16.msra.mxu0 %v1971
    %2995 = vmatpush.bf16.msra.mxu0 %v1963
    %2996 = vmatpush.bf16.msra.mxu0 %v1955
    %2997 = vmatmul.bf16.gmra.mxu0 %v105
    %v2998 = vpop.f32.mrf.mxu0
    %v2999 = vadd.f32 %v2986, %v2998
    %v3000 = vpop.f32.mrf.mxu0
    %3001 = vdwg.mxu0
    %3002 = vmatpush.bf16.msra.mxu0 %v2075
    %3003 = vmatpush.bf16.msra.mxu0 %v2067
    %3004 = vmatpush.bf16.msra.mxu0 %v2059
    %3005 = vmatpush.bf16.msra.mxu0 %v2051
    %3006 = vmatpush.bf16.msra.mxu0 %v2043
    %3007 = vmatpush.bf16.msra.mxu0 %v2035
    %3008 = vmatpush.bf16.msra.mxu0 %v2027
    %3009 = vmatpush.bf16.msra.mxu0 %v2019
    %3010 = vmatmul.bf16.gmra.mxu0 %v106
    %v3011 = vpop.f32.mrf.mxu0
    %v3012 = vadd.f32 %v2999, %v3011
    %v3013 = vpop.f32.mrf.mxu0
    %3014 = vdwg.mxu0
    %3015 = vmatpush.bf16.msra.mxu0 0
    %3016 = vmatpush.bf16.msra.mxu0 0
    %3017 = vmatpush.bf16.msra.mxu0 0
    %3018 = vmatpush.bf16.msra.mxu0 0
    %3019 = vmatpush.bf16.msra.mxu0 0
    %3020 = vmatpush.bf16.msra.mxu0 0
    %3021 = vmatpush.bf16.msra.mxu0 0
    %3022 = vmatpush.bf16.msra.mxu0 %v2083
    %3023 = vmatmul.bf16.gmra.mxu0 %v2480
    %v3024 = vpop.f32.mrf.mxu0
    %v3025 = vadd.f32 %v3012, %v3024
    %v3026 = vpop.f32.mrf.mxu0
    %3027 = vdwg.mxu0
    %3028 = vmatpush.bf16.msra.mxu0 %v1756
    %3029 = vmatpush.bf16.msra.mxu0 %v1748
    %3030 = vmatpush.bf16.msra.mxu0 %v1740
    %3031 = vmatpush.bf16.msra.mxu0 %v1732
    %3032 = vmatpush.bf16.msra.mxu0 %v1724
    %3033 = vmatpush.bf16.msra.mxu0 %v1716
    %3034 = vmatpush.bf16.msra.mxu0 %v1708
    %3035 = vmatpush.bf16.msra.mxu0 %v1700
    %3036 = vmatmul.bf16.gmra.mxu0 %v101
    %v3037 = vpop.f32.mrf.mxu0
    %v3038 = vadd.f32 %v508, %v3037
    %v3039 = vpop.f32.mrf.mxu0
    %3040 = vdwg.mxu0
    %3041 = vmatpush.bf16.msra.mxu0 %v1820
    %3042 = vmatpush.bf16.msra.mxu0 %v1812
    %3043 = vmatpush.bf16.msra.mxu0 %v1804
    %3044 = vmatpush.bf16.msra.mxu0 %v1796
    %3045 = vmatpush.bf16.msra.mxu0 %v1788
    %3046 = vmatpush.bf16.msra.mxu0 %v1780
    %3047 = vmatpush.bf16.msra.mxu0 %v1772
    %3048 = vmatpush.bf16.msra.mxu0 %v1764
    %3049 = vmatmul.bf16.gmra.mxu0 %v102
    %v3050 = vpop.f32.mrf.mxu0
    %v3051 = vadd.f32 %v3038, %v3050
    %v3052 = vpop.f32.mrf.mxu0
    %3053 = vdwg.mxu0
    %3054 = vmatpush.bf16.msra.mxu0 %v1884
    %3055 = vmatpush.bf16.msra.mxu0 %v1876
    %3056 = vmatpush.bf16.msra.mxu0 %v1868
    %3057 = vmatpush.bf16.msra.mxu0 %v1860
    %3058 = vmatpush.bf16.msra.mxu0 %v1852
    %3059 = vmatpush.bf16.msra.mxu0 %v1844
    %3060 = vmatpush.bf16.msra.mxu0 %v1836
    %3061 = vmatpush.bf16.msra.mxu0 %v1828
    %3062 = vmatmul.bf16.gmra.mxu0 %v103
    %v3063 = vpop.f32.mrf.mxu0
    %v3064 = vadd.f32 %v3051, %v3063
    %v3065 = vpop.f32.mrf.mxu0
    %3066 = vdwg.mxu0
    %3067 = vmatpush.bf16.msra.mxu0 %v1948
    %3068 = vmatpush.bf16.msra.mxu0 %v1940
    %3069 = vmatpush.bf16.msra.mxu0 %v1932
    %3070 = vmatpush.bf16.msra.mxu0 %v1924
    %3071 = vmatpush.bf16.msra.mxu0 %v1916
    %3072 = vmatpush.bf16.msra.mxu0 %v1908
    %3073 = vmatpush.bf16.msra.mxu0 %v1900
    %3074 = vmatpush.bf16.msra.mxu0 %v1892
    %3075 = vmatmul.bf16.gmra.mxu0 %v104
    %v3076 = vpop.f32.mrf.mxu0
    %v3077 = vadd.f32 %v3064, %v3076
    %v3078 = vpop.f32.mrf.mxu0
    %3079 = vdwg.mxu0
    %3080 = vmatpush.bf16.msra.mxu0 %v2012
    %3081 = vmatpush.bf16.msra.mxu0 %v2004
    %3082 = vmatpush.bf16.msra.mxu0 %v1996
    %3083 = vmatpush.bf16.msra.mxu0 %v1988
    %3084 = vmatpush.bf16.msra.mxu0 %v1980
    %3085 = vmatpush.bf16.msra.mxu0 %v1972
    %3086 = vmatpush.bf16.msra.mxu0 %v1964
    %3087 = vmatpush.bf16.msra.mxu0 %v1956
    %3088 = vmatmul.bf16.gmra.mxu0 %v105
    %v3089 = vpop.f32.mrf.mxu0
    %v3090 = vadd.f32 %v3077, %v3089
    %v3091 = vpop.f32.mrf.mxu0
    %3092 = vdwg.mxu0
    %3093 = vmatpush.bf16.msra.mxu0 %v2076
    %3094 = vmatpush.bf16.msra.mxu0 %v2068
    %3095 = vmatpush.bf16.msra.mxu0 %v2060
    %3096 = vmatpush.bf16.msra.mxu0 %v2052
    %3097 = vmatpush.bf16.msra.mxu0 %v2044
    %3098 = vmatpush.bf16.msra.mxu0 %v2036
    %3099 = vmatpush.bf16.msra.mxu0 %v2028
    %3100 = vmatpush.bf16.msra.mxu0 %v2020
    %3101 = vmatmul.bf16.gmra.mxu0 %v106
    %v3102 = vpop.f32.mrf.mxu0
    %v3103 = vadd.f32 %v3090, %v3102
    %v3104 = vpop.f32.mrf.mxu0
    %3105 = vdwg.mxu0
    %3106 = vmatpush.bf16.msra.mxu0 0
    %3107 = vmatpush.bf16.msra.mxu0 0
    %3108 = vmatpush.bf16.msra.mxu0 0
    %3109 = vmatpush.bf16.msra.mxu0 0
    %3110 = vmatpush.bf16.msra.mxu0 0
    %3111 = vmatpush.bf16.msra.mxu0 0
    %3112 = vmatpush.bf16.msra.mxu0 0
    %3113 = vmatpush.bf16.msra.mxu0 %v2084
    %3114 = vmatmul.bf16.gmra.mxu0 %v2480
    %v3115 = vpop.f32.mrf.mxu0
    %v3116 = vadd.f32 %v3103, %v3115
    %v3117 = vpop.f32.mrf.mxu0
    %3118 = vdwg.mxu0
    %3119 = vmatpush.bf16.msra.mxu0 %v1757
    %3120 = vmatpush.bf16.msra.mxu0 %v1749
    %3121 = vmatpush.bf16.msra.mxu0 %v1741
    %3122 = vmatpush.bf16.msra.mxu0 %v1733
    %3123 = vmatpush.bf16.msra.mxu0 %v1725
    %3124 = vmatpush.bf16.msra.mxu0 %v1717
    %3125 = vmatpush.bf16.msra.mxu0 %v1709
    %3126 = vmatpush.bf16.msra.mxu0 %v1701
    %3127 = vmatmul.bf16.gmra.mxu0 %v101
    %v3128 = vpop.f32.mrf.mxu0
    %v3129 = vadd.f32 %v509, %v3128
    %v3130 = vpop.f32.mrf.mxu0
    %3131 = vdwg.mxu0
    %3132 = vmatpush.bf16.msra.mxu0 %v1821
    %3133 = vmatpush.bf16.msra.mxu0 %v1813
    %3134 = vmatpush.bf16.msra.mxu0 %v1805
    %3135 = vmatpush.bf16.msra.mxu0 %v1797
    %3136 = vmatpush.bf16.msra.mxu0 %v1789
    %3137 = vmatpush.bf16.msra.mxu0 %v1781
    %3138 = vmatpush.bf16.msra.mxu0 %v1773
    %3139 = vmatpush.bf16.msra.mxu0 %v1765
    %3140 = vmatmul.bf16.gmra.mxu0 %v102
    %v3141 = vpop.f32.mrf.mxu0
    %v3142 = vadd.f32 %v3129, %v3141
    %v3143 = vpop.f32.mrf.mxu0
    %3144 = vdwg.mxu0
    %3145 = vmatpush.bf16.msra.mxu0 %v1885
    %3146 = vmatpush.bf16.msra.mxu0 %v1877
    %3147 = vmatpush.bf16.msra.mxu0 %v1869
    %3148 = vmatpush.bf16.msra.mxu0 %v1861
    %3149 = vmatpush.bf16.msra.mxu0 %v1853
    %3150 = vmatpush.bf16.msra.mxu0 %v1845
    %3151 = vmatpush.bf16.msra.mxu0 %v1837
    %3152 = vmatpush.bf16.msra.mxu0 %v1829
    %3153 = vmatmul.bf16.gmra.mxu0 %v103
    %v3154 = vpop.f32.mrf.mxu0
    %v3155 = vadd.f32 %v3142, %v3154
    %v3156 = vpop.f32.mrf.mxu0
    %3157 = vdwg.mxu0
    %3158 = vmatpush.bf16.msra.mxu0 %v1949
    %3159 = vmatpush.bf16.msra.mxu0 %v1941
    %3160 = vmatpush.bf16.msra.mxu0 %v1933
    %3161 = vmatpush.bf16.msra.mxu0 %v1925
    %3162 = vmatpush.bf16.msra.mxu0 %v1917
    %3163 = vmatpush.bf16.msra.mxu0 %v1909
    %3164 = vmatpush.bf16.msra.mxu0 %v1901
    %3165 = vmatpush.bf16.msra.mxu0 %v1893
    %3166 = vmatmul.bf16.gmra.mxu0 %v104
    %v3167 = vpop.f32.mrf.mxu0
    %v3168 = vadd.f32 %v3155, %v3167
    %v3169 = vpop.f32.mrf.mxu0
    %3170 = vdwg.mxu0
    %3171 = vmatpush.bf16.msra.mxu0 %v2013
    %3172 = vmatpush.bf16.msra.mxu0 %v2005
    %3173 = vmatpush.bf16.msra.mxu0 %v1997
    %3174 = vmatpush.bf16.msra.mxu0 %v1989
    %3175 = vmatpush.bf16.msra.mxu0 %v1981
    %3176 = vmatpush.bf16.msra.mxu0 %v1973
    %3177 = vmatpush.bf16.msra.mxu0 %v1965
    %3178 = vmatpush.bf16.msra.mxu0 %v1957
    %3179 = vmatmul.bf16.gmra.mxu0 %v105
    %v3180 = vpop.f32.mrf.mxu0
    %v3181 = vadd.f32 %v3168, %v3180
    %v3182 = vpop.f32.mrf.mxu0
    %3183 = vdwg.mxu0
    %3184 = vmatpush.bf16.msra.mxu0 %v2077
    %3185 = vmatpush.bf16.msra.mxu0 %v2069
    %3186 = vmatpush.bf16.msra.mxu0 %v2061
    %3187 = vmatpush.bf16.msra.mxu0 %v2053
    %3188 = vmatpush.bf16.msra.mxu0 %v2045
    %3189 = vmatpush.bf16.msra.mxu0 %v2037
    %3190 = vmatpush.bf16.msra.mxu0 %v2029
    %3191 = vmatpush.bf16.msra.mxu0 %v2021
    %3192 = vmatmul.bf16.gmra.mxu0 %v106
    %v3193 = vpop.f32.mrf.mxu0
    %v3194 = vadd.f32 %v3181, %v3193
    %v3195 = vpop.f32.mrf.mxu0
    %3196 = vdwg.mxu0
    %3197 = vmatpush.bf16.msra.mxu0 0
    %3198 = vmatpush.bf16.msra.mxu0 0
    %3199 = vmatpush.bf16.msra.mxu0 0
    %3200 = vmatpush.bf16.msra.mxu0 0
    %3201 = vmatpush.bf16.msra.mxu0 0
    %3202 = vmatpush.bf16.msra.mxu0 0
    %3203 = vmatpush.bf16.msra.mxu0 0
    %3204 = vmatpush.bf16.msra.mxu0 %v2085
    %3205 = vmatmul.bf16.gmra.mxu0 %v2480
    %v3206 = vpop.f32.mrf.mxu0
    %v3207 = vadd.f32 %v3194, %v3206
    %v3208 = vpop.f32.mrf.mxu0
    %3209 = vdwg.mxu0
    %v3210 = vmax.f32 %v2570, 0.0
    %v3211 = vmax.f32 %v2661, 0.0
    %v3212 = vmax.f32 %v2752, 0.0
    %v3213 = vmax.f32 %v2843, 0.0
    %v3214 = vmax.f32 %v2934, 0.0
    %v3215 = vmax.f32 %v3025, 0.0
    %v3216 = vmax.f32 %v3116, 0.0
    %v3217 = vmax.f32 %v3207, 0.0
    %v3218 = vpack.c.bf16 %v3210, %v3210
    %v3219 = vpack.c.bf16 %v3211, %v3211
    %v3220 = vpack.c.bf16 %v3212, %v3212
    %v3221 = vpack.c.bf16 %v3213, %v3213
    %v3222 = vpack.c.bf16 %v3214, %v3214
    %v3223 = vpack.c.bf16 %v3215, %v3215
    %v3224 = vpack.c.bf16 %v3216, %v3216
    %v3225 = vpack.c.bf16 %v3217, %v3217
    %v3226 = vld [vmem:[#allocation8] sm:$0xf]
    %v3227 = vld [vmem:[#allocation8 + $0x4] sm:$0xf]
    %v3228 = vld [vmem:[#allocation8 + $0x8] sm:$0xf]
    %v3229 = vld [vmem:[#allocation8 + $0xc] sm:$0xf]
    %v3230 = vld [vmem:[#allocation8 + $0x10] sm:$0xf]
    %v3231 = vld [vmem:[#allocation8 + $0x14] sm:$0xf]
    %v3232 = vld [vmem:[#allocation8 + $0x18] sm:$0xf]
    %v3233 = vld [vmem:[#allocation8 + $0x1c] sm:$0xf]
    %v3234 = vld [vmem:[#allocation8 + $0x20] sm:$0xf]
    %v3235 = vld [vmem:[#allocation8 + $0x24] sm:$0xf]
    %v3236 = vld [vmem:[#allocation8 + $0x28] sm:$0xf]
    %v3237 = vld [vmem:[#allocation8 + $0x2c] sm:$0xf]
    %v3238 = vld [vmem:[#allocation8 + $0x30] sm:$0xf]
    %v3239 = vld [vmem:[#allocation8 + $0x34] sm:$0xf]
    %v3240 = vld [vmem:[#allocation8 + $0x38] sm:$0xf]
    %v3241 = vld [vmem:[#allocation8 + $0x3c] sm:$0xf]
    %v3242 = vld [vmem:[#allocation8 + $0x40] sm:$0xf]
    %v3243 = vld [vmem:[#allocation8 + $0x44] sm:$0xf]
    %v3244 = vld [vmem:[#allocation8 + $0x48] sm:$0xf]
    %v3245 = vld [vmem:[#allocation8 + $0x4c] sm:$0xf]
    %v3246 = vld [vmem:[#allocation8 + $0x50] sm:$0xf]
    %v3247 = vld [vmem:[#allocation8 + $0x54] sm:$0xf]
    %v3248 = vld [vmem:[#allocation8 + $0x58] sm:$0xf]
    %v3249 = vld [vmem:[#allocation8 + $0x5c] sm:$0xf]
    %v3250 = vld [vmem:[#allocation8 + $0x60] sm:$0xf]
    %v3251 = vld [vmem:[#allocation8 + $0x64] sm:$0xf]
    %v3252 = vld [vmem:[#allocation8 + $0x68] sm:$0xf]
    %v3253 = vld [vmem:[#allocation8 + $0x6c] sm:$0xf]
    %v3254 = vld [vmem:[#allocation8 + $0x70] sm:$0xf]
    %v3255 = vld [vmem:[#allocation8 + $0x74] sm:$0xf]
    %v3256 = vld [vmem:[#allocation8 + $0x78] sm:$0xf]
    %v3257 = vld [vmem:[#allocation8 + $0x7c] sm:$0xf]
    %v3258 = vld [vmem:[#allocation8 + $0x80] sm:$0xf]
    %v3259 = vld [vmem:[#allocation8 + $0x84] sm:$0xf]
    %v3260 = vld [vmem:[#allocation8 + $0x88] sm:$0xf]
    %v3261 = vld [vmem:[#allocation8 + $0x8c] sm:$0xf]
    %v3262 = vld [vmem:[#allocation8 + $0x90] sm:$0xf]
    %v3263 = vld [vmem:[#allocation8 + $0x94] sm:$0xf]
    %v3264 = vld [vmem:[#allocation8 + $0x98] sm:$0xf]
    %v3265 = vld [vmem:[#allocation8 + $0x9c] sm:$0xf]
    %v3266 = vld [vmem:[#allocation8 + $0xa0] sm:$0xf]
    %v3267 = vld [vmem:[#allocation8 + $0xa4] sm:$0xf]
    %v3268 = vld [vmem:[#allocation8 + $0xa8] sm:$0xf]
    %v3269 = vld [vmem:[#allocation8 + $0xac] sm:$0xf]
    %v3270 = vld [vmem:[#allocation8 + $0xb0] sm:$0xf]
    %v3271 = vld [vmem:[#allocation8 + $0xb4] sm:$0xf]
    %v3272 = vld [vmem:[#allocation8 + $0xb8] sm:$0xf]
    %v3273 = vld [vmem:[#allocation8 + $0xbc] sm:$0xf]
    %v3274 = vld [vmem:[#allocation8 + $0xc0] sm:$0xf]
    %v3275 = vld [vmem:[#allocation8 + $0xc4] sm:$0xf]
    %v3276 = vld [vmem:[#allocation8 + $0xc8] sm:$0xf]
    %v3277 = vld [vmem:[#allocation8 + $0xcc] sm:$0xf]
    %v3278 = vld [vmem:[#allocation8 + $0xd0] sm:$0xf]
    %v3279 = vld [vmem:[#allocation8 + $0xd4] sm:$0xf]
    %v3280 = vld [vmem:[#allocation8 + $0xd8] sm:$0xf]
    %v3281 = vld [vmem:[#allocation8 + $0xdc] sm:$0xf]
    %v3282 = vld [vmem:[#allocation8 + $0xe0] sm:$0xf]
    %v3283 = vld [vmem:[#allocation8 + $0xe4] sm:$0xf]
    %v3284 = vld [vmem:[#allocation8 + $0xe8] sm:$0xf]
    %v3285 = vld [vmem:[#allocation8 + $0xec] sm:$0xf]
    %v3286 = vld [vmem:[#allocation8 + $0xf0] sm:$0xf]
    %v3287 = vld [vmem:[#allocation8 + $0xf4] sm:$0xf]
    %v3288 = vld [vmem:[#allocation8 + $0xf8] sm:$0xf]
    %v3289 = vld [vmem:[#allocation8 + $0xfc] sm:$0xf]
    %v3290 = vld [vmem:[#allocation8 + $0x100] sm:$0xf]
    %v3291 = vld [vmem:[#allocation8 + $0x104] sm:$0xf]
    %v3292 = vld [vmem:[#allocation8 + $0x108] sm:$0xf]
    %v3293 = vld [vmem:[#allocation8 + $0x10c] sm:$0xf]
    %v3294 = vld [vmem:[#allocation8 + $0x110] sm:$0xf]
    %v3295 = vld [vmem:[#allocation8 + $0x114] sm:$0xf]
    %v3296 = vld [vmem:[#allocation8 + $0x118] sm:$0xf]
    %v3297 = vld [vmem:[#allocation8 + $0x11c] sm:$0xf]
    %v3298 = vld [vmem:[#allocation8 + $0x120] sm:$0xf]
    %v3299 = vld [vmem:[#allocation8 + $0x124] sm:$0xf]
    %v3300 = vld [vmem:[#allocation8 + $0x128] sm:$0xf]
    %v3301 = vld [vmem:[#allocation8 + $0x12c] sm:$0xf]
    %v3302 = vld [vmem:[#allocation8 + $0x130] sm:$0xf]
    %v3303 = vld [vmem:[#allocation8 + $0x134] sm:$0xf]
    %v3304 = vld [vmem:[#allocation8 + $0x138] sm:$0xf]
    %v3305 = vld [vmem:[#allocation8 + $0x13c] sm:$0xf]
    %v3306 = vld [vmem:[#allocation8 + $0x140] sm:$0xf]
    %v3307 = vld [vmem:[#allocation8 + $0x144] sm:$0xf]
    %v3308 = vld [vmem:[#allocation8 + $0x148] sm:$0xf]
    %v3309 = vld [vmem:[#allocation8 + $0x14c] sm:$0xf]
    %v3310 = vld [vmem:[#allocation8 + $0x150] sm:$0xf]
    %v3311 = vld [vmem:[#allocation8 + $0x154] sm:$0xf]
    %v3312 = vld [vmem:[#allocation8 + $0x158] sm:$0xf]
    %v3313 = vld [vmem:[#allocation8 + $0x15c] sm:$0xf]
    %v3314 = vld [vmem:[#allocation8 + $0x160] sm:$0xf]
    %v3315 = vld [vmem:[#allocation8 + $0x164] sm:$0xf]
    %v3316 = vld [vmem:[#allocation8 + $0x168] sm:$0xf]
    %v3317 = vld [vmem:[#allocation8 + $0x16c] sm:$0xf]
    %v3318 = vld [vmem:[#allocation8 + $0x170] sm:$0xf]
    %v3319 = vld [vmem:[#allocation8 + $0x174] sm:$0xf]
    %v3320 = vld [vmem:[#allocation8 + $0x178] sm:$0xf]
    %v3321 = vld [vmem:[#allocation8 + $0x17c] sm:$0xf]
    %v3322 = vld [vmem:[#allocation8 + $0x180] sm:$0xf]
    %v3323 = vld [vmem:[#allocation8 + $0x184] sm:$0xf]
    %v3324 = vld [vmem:[#allocation8 + $0x188] sm:$0xf]
    %v3325 = vld [vmem:[#allocation8 + $0x18c] sm:$0xf]
    %v3326 = vld [vmem:[#allocation8 + $0x190] sm:$0xf]
    %v3327 = vld [vmem:[#allocation8 + $0x194] sm:$0xf]
    %v3328 = vld [vmem:[#allocation8 + $0x198] sm:$0xf]
    %v3329 = vld [vmem:[#allocation8 + $0x19c] sm:$0xf]
    %v3330 = vld [vmem:[#allocation8 + $0x1a0] sm:$0xf]
    %v3331 = vld [vmem:[#allocation8 + $0x1a4] sm:$0xf]
    %v3332 = vld [vmem:[#allocation8 + $0x1a8] sm:$0xf]
    %v3333 = vld [vmem:[#allocation8 + $0x1ac] sm:$0xf]
    %v3334 = vld [vmem:[#allocation8 + $0x1b0] sm:$0xf]
    %v3335 = vld [vmem:[#allocation8 + $0x1b4] sm:$0xf]
    %v3336 = vld [vmem:[#allocation8 + $0x1b8] sm:$0xf]
    %v3337 = vld [vmem:[#allocation8 + $0x1bc] sm:$0xf]
    %v3338 = vld [vmem:[#allocation8 + $0x1c0] sm:$0xf]
    %v3339 = vld [vmem:[#allocation8 + $0x1c4] sm:$0xf]
    %v3340 = vld [vmem:[#allocation8 + $0x1c8] sm:$0xf]
    %v3341 = vld [vmem:[#allocation8 + $0x1cc] sm:$0xf]
    %v3342 = vld [vmem:[#allocation8 + $0x1d0] sm:$0xf]
    %v3343 = vld [vmem:[#allocation8 + $0x1d4] sm:$0xf]
    %v3344 = vld [vmem:[#allocation8 + $0x1d8] sm:$0xf]
    %v3345 = vld [vmem:[#allocation8 + $0x1dc] sm:$0xf]
    %v3346 = vld [vmem:[#allocation8 + $0x1e0] sm:$0xf]
    %v3347 = vld [vmem:[#allocation8 + $0x1e4] sm:$0xf]
    %v3348 = vld [vmem:[#allocation8 + $0x1e8] sm:$0xf]
    %v3349 = vld [vmem:[#allocation8 + $0x1ec] sm:$0xf]
    %v3350 = vld [vmem:[#allocation8 + $0x1f0] sm:$0xf]
    %v3351 = vld [vmem:[#allocation8 + $0x1f4] sm:$0xf]
    %v3352 = vld [vmem:[#allocation8 + $0x1f8] sm:$0xf]
    %v3353 = vld [vmem:[#allocation8 + $0x1fc] sm:$0xf]
    %v3354 = vld [vmem:[#allocation10] sm:$0x1]
    %v3356 = vperm.slane %v3354, 0
    %v3486 = vunpack.c.l.b16 %v3226
    %v3487 = vunpack.c.l.b16 %v3227
    %v3488 = vunpack.c.l.b16 %v3228
    %v3489 = vunpack.c.l.b16 %v3229
    %v3490 = vunpack.c.l.b16 %v3230
    %v3491 = vunpack.c.l.b16 %v3231
    %v3492 = vunpack.c.l.b16 %v3232
    %v3493 = vunpack.c.l.b16 %v3233
    %v3494 = vunpack.c.l.b16 %v3234
    %v3495 = vunpack.c.l.b16 %v3235
    %v3496 = vunpack.c.l.b16 %v3236
    %v3497 = vunpack.c.l.b16 %v3237
    %v3498 = vunpack.c.l.b16 %v3238
    %v3499 = vunpack.c.l.b16 %v3239
    %v3500 = vunpack.c.l.b16 %v3240
    %v3501 = vunpack.c.l.b16 %v3241
    %v3502 = vunpack.c.l.b16 %v3242
    %v3503 = vunpack.c.l.b16 %v3243
    %v3504 = vunpack.c.l.b16 %v3244
    %v3505 = vunpack.c.l.b16 %v3245
    %v3506 = vunpack.c.l.b16 %v3246
    %v3507 = vunpack.c.l.b16 %v3247
    %v3508 = vunpack.c.l.b16 %v3248
    %v3509 = vunpack.c.l.b16 %v3249
    %v3510 = vunpack.c.l.b16 %v3250
    %v3511 = vunpack.c.l.b16 %v3251
    %v3512 = vunpack.c.l.b16 %v3252
    %v3513 = vunpack.c.l.b16 %v3253
    %v3514 = vunpack.c.l.b16 %v3254
    %v3515 = vunpack.c.l.b16 %v3255
    %v3516 = vunpack.c.l.b16 %v3256
    %v3517 = vunpack.c.l.b16 %v3257
    %v3518 = vunpack.c.l.b16 %v3258
    %v3519 = vunpack.c.l.b16 %v3259
    %v3520 = vunpack.c.l.b16 %v3260
    %v3521 = vunpack.c.l.b16 %v3261
    %v3522 = vunpack.c.l.b16 %v3262
    %v3523 = vunpack.c.l.b16 %v3263
    %v3524 = vunpack.c.l.b16 %v3264
    %v3525 = vunpack.c.l.b16 %v3265
    %v3526 = vunpack.c.l.b16 %v3266
    %v3527 = vunpack.c.l.b16 %v3267
    %v3528 = vunpack.c.l.b16 %v3268
    %v3529 = vunpack.c.l.b16 %v3269
    %v3530 = vunpack.c.l.b16 %v3270
    %v3531 = vunpack.c.l.b16 %v3271
    %v3532 = vunpack.c.l.b16 %v3272
    %v3533 = vunpack.c.l.b16 %v3273
    %v3534 = vunpack.c.l.b16 %v3274
    %v3535 = vunpack.c.l.b16 %v3275
    %v3536 = vunpack.c.l.b16 %v3276
    %v3537 = vunpack.c.l.b16 %v3277
    %v3538 = vunpack.c.l.b16 %v3278
    %v3539 = vunpack.c.l.b16 %v3279
    %v3540 = vunpack.c.l.b16 %v3280
    %v3541 = vunpack.c.l.b16 %v3281
    %v3542 = vunpack.c.l.b16 %v3282
    %v3543 = vunpack.c.l.b16 %v3283
    %v3544 = vunpack.c.l.b16 %v3284
    %v3545 = vunpack.c.l.b16 %v3285
    %v3546 = vunpack.c.l.b16 %v3286
    %v3547 = vunpack.c.l.b16 %v3287
    %v3548 = vunpack.c.l.b16 %v3288
    %v3549 = vunpack.c.l.b16 %v3289
    %v3550 = vunpack.c.l.b16 %v3290
    %v3551 = vunpack.c.l.b16 %v3291
    %v3552 = vunpack.c.l.b16 %v3292
    %v3553 = vunpack.c.l.b16 %v3293
    %v3554 = vunpack.c.l.b16 %v3294
    %v3555 = vunpack.c.l.b16 %v3295
    %v3556 = vunpack.c.l.b16 %v3296
    %v3557 = vunpack.c.l.b16 %v3297
    %v3558 = vunpack.c.l.b16 %v3298
    %v3559 = vunpack.c.l.b16 %v3299
    %v3560 = vunpack.c.l.b16 %v3300
    %v3561 = vunpack.c.l.b16 %v3301
    %v3562 = vunpack.c.l.b16 %v3302
    %v3563 = vunpack.c.l.b16 %v3303
    %v3564 = vunpack.c.l.b16 %v3304
    %v3565 = vunpack.c.l.b16 %v3305
    %v3566 = vunpack.c.l.b16 %v3306
    %v3567 = vunpack.c.l.b16 %v3307
    %v3568 = vunpack.c.l.b16 %v3308
    %v3569 = vunpack.c.l.b16 %v3309
    %v3570 = vunpack.c.l.b16 %v3310
    %v3571 = vunpack.c.l.b16 %v3311
    %v3572 = vunpack.c.l.b16 %v3312
    %v3573 = vunpack.c.l.b16 %v3313
    %v3574 = vunpack.c.l.b16 %v3314
    %v3575 = vunpack.c.l.b16 %v3315
    %v3576 = vunpack.c.l.b16 %v3316
    %v3577 = vunpack.c.l.b16 %v3317
    %v3578 = vunpack.c.l.b16 %v3318
    %v3579 = vunpack.c.l.b16 %v3319
    %v3580 = vunpack.c.l.b16 %v3320
    %v3581 = vunpack.c.l.b16 %v3321
    %v3582 = vunpack.c.l.b16 %v3322
    %v3583 = vunpack.c.l.b16 %v3323
    %v3584 = vunpack.c.l.b16 %v3324
    %v3585 = vunpack.c.l.b16 %v3325
    %v3586 = vunpack.c.l.b16 %v3326
    %v3587 = vunpack.c.l.b16 %v3327
    %v3588 = vunpack.c.l.b16 %v3328
    %v3589 = vunpack.c.l.b16 %v3329
    %v3590 = vunpack.c.l.b16 %v3330
    %v3591 = vunpack.c.l.b16 %v3331
    %v3592 = vunpack.c.l.b16 %v3332
    %v3593 = vunpack.c.l.b16 %v3333
    %v3594 = vunpack.c.l.b16 %v3334
    %v3595 = vunpack.c.l.b16 %v3335
    %v3596 = vunpack.c.l.b16 %v3336
    %v3597 = vunpack.c.l.b16 %v3337
    %v3598 = vunpack.c.l.b16 %v3338
    %v3599 = vunpack.c.l.b16 %v3339
    %v3600 = vunpack.c.l.b16 %v3340
    %v3601 = vunpack.c.l.b16 %v3341
    %v3602 = vunpack.c.l.b16 %v3342
    %v3603 = vunpack.c.l.b16 %v3343
    %v3604 = vunpack.c.l.b16 %v3344
    %v3605 = vunpack.c.l.b16 %v3345
    %v3606 = vunpack.c.l.b16 %v3346
    %v3607 = vunpack.c.l.b16 %v3347
    %v3608 = vunpack.c.l.b16 %v3348
    %v3609 = vunpack.c.l.b16 %v3349
    %v3610 = vunpack.c.l.b16 %v3350
    %v3611 = vunpack.c.l.b16 %v3351
    %v3612 = vunpack.c.l.b16 %v3352
    %v3613 = vunpack.c.l.b16 %v3353
    %v3614 = vpack.c.b16 %v3487, %v3486
    %v3615 = vpack.c.b16 %v3489, %v3488
    %v3616 = vpack.c.b16 %v3491, %v3490
    %v3617 = vpack.c.b16 %v3493, %v3492
    %v3618 = vpack.c.b16 %v3495, %v3494
    %v3619 = vpack.c.b16 %v3497, %v3496
    %v3620 = vpack.c.b16 %v3499, %v3498
    %v3621 = vpack.c.b16 %v3501, %v3500
    %v3622 = vpack.c.b16 %v3503, %v3502
    %v3623 = vpack.c.b16 %v3505, %v3504
    %v3624 = vpack.c.b16 %v3507, %v3506
    %v3625 = vpack.c.b16 %v3509, %v3508
    %v3626 = vpack.c.b16 %v3511, %v3510
    %v3627 = vpack.c.b16 %v3513, %v3512
    %v3628 = vpack.c.b16 %v3515, %v3514
    %v3629 = vpack.c.b16 %v3517, %v3516
    %v3630 = vpack.c.b16 %v3519, %v3518
    %v3631 = vpack.c.b16 %v3521, %v3520
    %v3632 = vpack.c.b16 %v3523, %v3522
    %v3633 = vpack.c.b16 %v3525, %v3524
    %v3634 = vpack.c.b16 %v3527, %v3526
    %v3635 = vpack.c.b16 %v3529, %v3528
    %v3636 = vpack.c.b16 %v3531, %v3530
    %v3637 = vpack.c.b16 %v3533, %v3532
    %v3638 = vpack.c.b16 %v3535, %v3534
    %v3639 = vpack.c.b16 %v3537, %v3536
    %v3640 = vpack.c.b16 %v3539, %v3538
    %v3641 = vpack.c.b16 %v3541, %v3540
    %v3642 = vpack.c.b16 %v3543, %v3542
    %v3643 = vpack.c.b16 %v3545, %v3544
    %v3644 = vpack.c.b16 %v3547, %v3546
    %v3645 = vpack.c.b16 %v3549, %v3548
    %v3646 = vpack.c.b16 %v3551, %v3550
    %v3647 = vpack.c.b16 %v3553, %v3552
    %v3648 = vpack.c.b16 %v3555, %v3554
    %v3649 = vpack.c.b16 %v3557, %v3556
    %v3650 = vpack.c.b16 %v3559, %v3558
    %v3651 = vpack.c.b16 %v3561, %v3560
    %v3652 = vpack.c.b16 %v3563, %v3562
    %v3653 = vpack.c.b16 %v3565, %v3564
    %v3654 = vpack.c.b16 %v3567, %v3566
    %v3655 = vpack.c.b16 %v3569, %v3568
    %v3656 = vpack.c.b16 %v3571, %v3570
    %v3657 = vpack.c.b16 %v3573, %v3572
    %v3658 = vpack.c.b16 %v3575, %v3574
    %v3659 = vpack.c.b16 %v3577, %v3576
    %v3660 = vpack.c.b16 %v3579, %v3578
    %v3661 = vpack.c.b16 %v3581, %v3580
    %v3662 = vpack.c.b16 %v3583, %v3582
    %v3663 = vpack.c.b16 %v3585, %v3584
    %v3664 = vpack.c.b16 %v3587, %v3586
    %v3665 = vpack.c.b16 %v3589, %v3588
    %v3666 = vpack.c.b16 %v3591, %v3590
    %v3667 = vpack.c.b16 %v3593, %v3592
    %v3668 = vpack.c.b16 %v3595, %v3594
    %v3669 = vpack.c.b16 %v3597, %v3596
    %v3670 = vpack.c.b16 %v3599, %v3598
    %v3671 = vpack.c.b16 %v3601, %v3600
    %v3672 = vpack.c.b16 %v3603, %v3602
    %v3673 = vpack.c.b16 %v3605, %v3604
    %v3674 = vpack.c.b16 %v3607, %v3606
    %v3675 = vpack.c.b16 %v3609, %v3608
    %v3676 = vpack.c.b16 %v3611, %v3610
    %v3677 = vpack.c.b16 %v3613, %v3612
    %3742 = vmatpush.bf16.msra.mxu0 %v3621
    %3743 = vmatpush.bf16.msra.mxu0 %v3620
    %3744 = vmatpush.bf16.msra.mxu0 %v3619
    %3745 = vmatpush.bf16.msra.mxu0 %v3618
    %3746 = vmatpush.bf16.msra.mxu0 %v3617
    %3747 = vmatpush.bf16.msra.mxu0 %v3616
    %3748 = vmatpush.bf16.msra.mxu0 %v3615
    %3749 = vmatpush.bf16.msra.mxu0 %v3614
    %3750 = vmatmul.bf16.gmra.mxu0 %v3218
    %v3751 = vpop.f32.mrf.mxu0
    %v3752 = vadd.f32 %v3356, %v3751
    %v3753 = vpop.f32.mrf.mxu0
    %3754 = vdwg.mxu0
    %3755 = vmatpush.bf16.msra.mxu0 %v3629
    %3756 = vmatpush.bf16.msra.mxu0 %v3628
    %3757 = vmatpush.bf16.msra.mxu0 %v3627
    %3758 = vmatpush.bf16.msra.mxu0 %v3626
    %3759 = vmatpush.bf16.msra.mxu0 %v3625
    %3760 = vmatpush.bf16.msra.mxu0 %v3624
    %3761 = vmatpush.bf16.msra.mxu0 %v3623
    %3762 = vmatpush.bf16.msra.mxu0 %v3622
    %3763 = vmatmul.bf16.gmra.mxu0 %v3219
    %v3764 = vpop.f32.mrf.mxu0
    %v3765 = vadd.f32 %v3752, %v3764
    %v3766 = vpop.f32.mrf.mxu0
    %3767 = vdwg.mxu0
    %3768 = vmatpush.bf16.msra.mxu0 %v3637
    %3769 = vmatpush.bf16.msra.mxu0 %v3636
    %3770 = vmatpush.bf16.msra.mxu0 %v3635
    %3771 = vmatpush.bf16.msra.mxu0 %v3634
    %3772 = vmatpush.bf16.msra.mxu0 %v3633
    %3773 = vmatpush.bf16.msra.mxu0 %v3632
    %3774 = vmatpush.bf16.msra.mxu0 %v3631
    %3775 = vmatpush.bf16.msra.mxu0 %v3630
    %3776 = vmatmul.bf16.gmra.mxu0 %v3220
    %v3777 = vpop.f32.mrf.mxu0
    %v3778 = vadd.f32 %v3765, %v3777
    %v3779 = vpop.f32.mrf.mxu0
    %3780 = vdwg.mxu0
    %3781 = vmatpush.bf16.msra.mxu0 %v3645
    %3782 = vmatpush.bf16.msra.mxu0 %v3644
    %3783 = vmatpush.bf16.msra.mxu0 %v3643
    %3784 = vmatpush.bf16.msra.mxu0 %v3642
    %3785 = vmatpush.bf16.msra.mxu0 %v3641
    %3786 = vmatpush.bf16.msra.mxu0 %v3640
    %3787 = vmatpush.bf16.msra.mxu0 %v3639
    %3788 = vmatpush.bf16.msra.mxu0 %v3638
    %3789 = vmatmul.bf16.gmra.mxu0 %v3221
    %v3790 = vpop.f32.mrf.mxu0
    %v3791 = vadd.f32 %v3778, %v3790
    %v3792 = vpop.f32.mrf.mxu0
    %3793 = vdwg.mxu0
    %3794 = vmatpush.bf16.msra.mxu0 %v3653
    %3795 = vmatpush.bf16.msra.mxu0 %v3652
    %3796 = vmatpush.bf16.msra.mxu0 %v3651
    %3797 = vmatpush.bf16.msra.mxu0 %v3650
    %3798 = vmatpush.bf16.msra.mxu0 %v3649
    %3799 = vmatpush.bf16.msra.mxu0 %v3648
    %3800 = vmatpush.bf16.msra.mxu0 %v3647
    %3801 = vmatpush.bf16.msra.mxu0 %v3646
    %3802 = vmatmul.bf16.gmra.mxu0 %v3222
    %v3803 = vpop.f32.mrf.mxu0
    %v3804 = vadd.f32 %v3791, %v3803
    %v3805 = vpop.f32.mrf.mxu0
    %3806 = vdwg.mxu0
    %3807 = vmatpush.bf16.msra.mxu0 %v3661
    %3808 = vmatpush.bf16.msra.mxu0 %v3660
    %3809 = vmatpush.bf16.msra.mxu0 %v3659
    %3810 = vmatpush.bf16.msra.mxu0 %v3658
    %3811 = vmatpush.bf16.msra.mxu0 %v3657
    %3812 = vmatpush.bf16.msra.mxu0 %v3656
    %3813 = vmatpush.bf16.msra.mxu0 %v3655
    %3814 = vmatpush.bf16.msra.mxu0 %v3654
    %3815 = vmatmul.bf16.gmra.mxu0 %v3223
    %v3816 = vpop.f32.mrf.mxu0
    %v3817 = vadd.f32 %v3804, %v3816
    %v3818 = vpop.f32.mrf.mxu0
    %3819 = vdwg.mxu0
    %3820 = vmatpush.bf16.msra.mxu0 %v3669
    %3821 = vmatpush.bf16.msra.mxu0 %v3668
    %3822 = vmatpush.bf16.msra.mxu0 %v3667
    %3823 = vmatpush.bf16.msra.mxu0 %v3666
    %3824 = vmatpush.bf16.msra.mxu0 %v3665
    %3825 = vmatpush.bf16.msra.mxu0 %v3664
    %3826 = vmatpush.bf16.msra.mxu0 %v3663
    %3827 = vmatpush.bf16.msra.mxu0 %v3662
    %3828 = vmatmul.bf16.gmra.mxu0 %v3224
    %v3829 = vpop.f32.mrf.mxu0
    %v3830 = vadd.f32 %v3817, %v3829
    %v3831 = vpop.f32.mrf.mxu0
    %3832 = vdwg.mxu0
    %3833 = vmatpush.bf16.msra.mxu0 %v3677
    %3834 = vmatpush.bf16.msra.mxu0 %v3676
    %3835 = vmatpush.bf16.msra.mxu0 %v3675
    %3836 = vmatpush.bf16.msra.mxu0 %v3674
    %3837 = vmatpush.bf16.msra.mxu0 %v3673
    %3838 = vmatpush.bf16.msra.mxu0 %v3672
    %3839 = vmatpush.bf16.msra.mxu0 %v3671
    %3840 = vmatpush.bf16.msra.mxu0 %v3670
    %3841 = vmatmul.bf16.gmra.mxu0 %v3225
    %v3842 = vpop.f32.mrf.mxu0
    %v3843 = vadd.f32 %v3830, %v3842
    %v3844 = vpop.f32.mrf.mxu0
    %3845 = vdwg.mxu0
    %v3846 = vlaneseq
    %v3847 = vand.u32 %v3846, 127
    %vm3848 = vcmp.lt.s32.totalorder %v3847, 10
    %v3849 = vsel %vm3848, %v3843, -inf
    %3850 = vmax.xlane.f32.xlu0 %v3849
    %v3851 = vpop.xlane.xlu0 %3850
    %v3852 = vsub.f32 %v3849, %v3851
    %v3853 = vmul.f32 %v3852, 1.442695
    %v3854 = vpow.pop %v3853
    %3855 = vadd.xlane.f32.xlu0 %v3854
    %v3856 = vpop.xlane.xlu0 %3855
    %v3857 = vrcp.pop %v3856
    %v3858 = vmul.f32 %v3854, %v3857
    %3859 = vst [vmem:[#allocation11] sm:$0xff] %v3858
    // Predicated region
    $region42: #{_forward.1} parent=1 // pred_check
      _
    $region43: #{_forward.1} parent=1 // pred_check_branch
      %3861 = sbr.rel (0) target = $region45
    $region44: #{_forward.1} parent=1 // pred_region
      %3863 = vsyncadd [#allocation4], 0
      %s3865 = sshll.u32 [#allocation11], 4
      %s3866 = int_to_ptr.vmem [resolvable:$true] %s3865
      %s3867 = sshll.u32 %s5, 4
      %s3868 = int_to_ptr.hbm [resolvable:$true] %s3867
      %3870 = dma.vmem_to_hbm [thread:$0]  %s3866, 128, %s3868, [#allocation4]
    $region45: #{_forward.1} parent=1 // pred_fallthru
      _
    // Predicated region
    $region46: #{_forward.1} parent=1 // pred_check
      _
    $region47: #{_forward.1} parent=1 // pred_check_branch
      %3872 = sbr.rel (0) target = $region49
    $region48: #{_forward.1} parent=1 // pred_region
      %3874 = dma.done [#allocation4], 128
    $region49: #{_forward.1} parent=1 // pred_fallthru
      _
    %3875 = vsyncpa [#allocation3], 1
    %3876 = vsyncpa [#allocation6], 1
    %3877 = vsyncpa [#allocation9], 1
    %3878 = vsyncpa [#allocation4], 1

</llo_original>
